<compile_context>
chip_gen: v7x
topology: tpu7x:2x2x1
jax: 0.10.0
libtpu: 0.0.40
codegen_flags: <defaults>
</compile_context>

<pallas_src>
import functools
import math

import jax
import jax.numpy as jnp
from jax.experimental import pallas as pl
from jax.experimental.pallas import tpu as pltpu

BN_EPS = 1e-4                       # BatchNorm eps used by the PyTorch module
VMEM_LIMIT = 64 * 1024 * 1024       # raise the scoped-VMEM default (16/32 MiB)


# ----------------------------- small helpers -----------------------------

def _round_up(n, m):
    return (n + m - 1) // m * m


def _pick_tile(n, max_tile=512):
    # Row tile: big (512) for bandwidth, multiple of 16 so bf16 sublane packing
    # is always clean; small inputs get a single full-size tile.
    if n <= max_tile:
        return _round_up(n, 16)
    return max_tile


def _pad_rows(x, n_pad):
    n = x.shape[0]
    if n == n_pad:
        return x
    return jnp.pad(x, ((0, n_pad - n), (0, 0)))


# ----------------------------- Pallas kernels -----------------------------

def _mm_bn_act_kernel(x_ref, w_ref, sh_ref, o_ref, *, act):
    # y = act(x @ w + shift); BN scale is pre-folded into w.
    y = jnp.dot(x_ref[...].astype(jnp.bfloat16), w_ref[...],
                preferred_element_type=jnp.float32)
    y = y + sh_ref[...]
    if act == "relu":
        y = jnp.maximum(y, 0.0)
    elif act == "leaky":
        y = jnp.where(y >= 0.0, y, 0.1 * y)
    o_ref[...] = y.astype(o_ref.dtype)


def matmul_bn_act(x, w, shift, act="none", max_tile=512):
    """x: (N, Cin), w: (Cin, Cout) bf16 (scale folded), shift: (1, Cout)."""
    N, Cin = x.shape
    Cout = w.shape[1]
    tile = _pick_tile(N, max_tile)
    n_pad = _round_up(N, tile)
    xp = _pad_rows(x.astype(jnp.bfloat16), n_pad)
    out = pl.pallas_call(
        functools.partial(_mm_bn_act_kernel, act=act),
        out_shape=jax.ShapeDtypeStruct((n_pad, Cout), jnp.float32),
        grid=(n_pad // tile,),
        in_specs=[
            pl.BlockSpec((tile, Cin), lambda i: (i, 0)),
            pl.BlockSpec((Cin, Cout), lambda i: (0, 0)),
            pl.BlockSpec((1, Cout), lambda i: (0, 0)),
        ],
        out_specs=pl.BlockSpec((tile, Cout), lambda i: (i, 0)),
        compiler_params=pltpu.CompilerParams(
            dimension_semantics=("parallel",), vmem_limit_bytes=VMEM_LIMIT),
    )(xp, w, shift)
    return out[:N] if n_pad != N else out


def _mlp2_kernel(x_ref, w1_ref, s1_ref, w2_ref, s2_ref, o_ref, *, act1, act2):
    # Two chained 1x1 layers, intermediate kept on-chip.
    h = jnp.dot(x_ref[...].astype(jnp.bfloat16), w1_ref[...],
                preferred_element_type=jnp.float32) + s1_ref[...]
    if act1 == "relu":
        h = jnp.maximum(h, 0.0)
    y = jnp.dot(h.astype(jnp.bfloat16), w2_ref[...],
                preferred_element_type=jnp.float32) + s2_ref[...]
    if act2 == "relu":
        y = jnp.maximum(y, 0.0)
    o_ref[...] = y.astype(o_ref.dtype)


def mlp2_bn_act(x, w1, s1, w2, s2, act1="relu", act2="none", max_tile=512):
    N, Cin = x.shape
    Ch = w1.shape[1]
    Cout = w2.shape[1]
    tile = _pick_tile(N, max_tile)
    n_pad = _round_up(N, tile)
    xp = _pad_rows(x.astype(jnp.bfloat16), n_pad)
    out = pl.pallas_call(
        functools.partial(_mlp2_kernel, act1=act1, act2=act2),
        out_shape=jax.ShapeDtypeStruct((n_pad, Cout), jnp.float32),
        grid=(n_pad // tile,),
        in_specs=[
            pl.BlockSpec((tile, Cin), lambda i: (i, 0)),
            pl.BlockSpec((Cin, Ch), lambda i: (0, 0)),
            pl.BlockSpec((1, Ch), lambda i: (0, 0)),
            pl.BlockSpec((Ch, Cout), lambda i: (0, 0)),
            pl.BlockSpec((1, Cout), lambda i: (0, 0)),
        ],
        out_specs=pl.BlockSpec((tile, Cout), lambda i: (i, 0)),
        compiler_params=pltpu.CompilerParams(
            dimension_semantics=("parallel",), vmem_limit_bytes=VMEM_LIMIT),
    )(xp, w1, s1, w2, s2)
    return out[:N] if n_pad != N else out


def _att_fuse_last_kernel(att_ref, pf_ref, b0_ref, b1_ref, b2_ref,
                          wa_ref, sa_ref, wb_ref, sb_ref, wl_ref, sl_ref,
                          o_ref):
    # att_mlp2 (2 layers) -> softmax over 4 channels -> weighted fusion ->
    # last_mlp, all on-chip (logits and fused features never hit HBM).
    g = jnp.dot(att_ref[...].astype(jnp.bfloat16), wa_ref[...],
                preferred_element_type=jnp.float32) + sa_ref[...]
    g = jnp.maximum(g, 0.0)
    lg = jnp.dot(g.astype(jnp.bfloat16), wb_ref[...],
                 preferred_element_type=jnp.float32) + sb_ref[...]   # (tile, 4)
    m = jnp.max(lg, axis=-1, keepdims=True)
    e = jnp.exp(lg - m)
    w = e * pl.reciprocal(jnp.sum(e, axis=-1, keepdims=True), approx=True)
    fused = (w[:, 0:1] * pf_ref[...] + w[:, 1:2] * b0_ref[...]
             + w[:, 2:3] * b1_ref[...] + w[:, 3:4] * b2_ref[...])
    y = jnp.dot(fused.astype(jnp.bfloat16), wl_ref[...],
                preferred_element_type=jnp.float32) + sl_ref[...]
    o_ref[...] = jnp.maximum(y, 0.0).astype(o_ref.dtype)


def att_fuse_last(att_in, pf, b0, b1, b2, wa, sa, wb, sb, wl, sl, max_tile=512):
    N, Ca = att_in.shape
    mid = pf.shape[1]
    Cout = wl.shape[1]
    tile = _pick_tile(N, max_tile)
    n_pad = _round_up(N, tile)
    att_p = _pad_rows(att_in.astype(jnp.bfloat16), n_pad)
    pf_p = _pad_rows(pf, n_pad)
    b0_p = _pad_rows(b0, n_pad)
    b1_p = _pad_rows(b1, n_pad)
    b2_p = _pad_rows(b2, n_pad)
    out = pl.pallas_call(
        _att_fuse_last_kernel,
        out_shape=jax.ShapeDtypeStruct((n_pad, Cout), jnp.float32),
        grid=(n_pad // tile,),
        in_specs=[
            pl.BlockSpec((tile, Ca), lambda i: (i, 0)),
            pl.BlockSpec((tile, mid), lambda i: (i, 0)),
            pl.BlockSpec((tile, mid), lambda i: (i, 0)),
            pl.BlockSpec((tile, mid), lambda i: (i, 0)),
            pl.BlockSpec((tile, mid), lambda i: (i, 0)),
            pl.BlockSpec(wa.shape, lambda i: (0, 0)),
            pl.BlockSpec(sa.shape, lambda i: (0, 0)),
            pl.BlockSpec(wb.shape, lambda i: (0, 0)),
            pl.BlockSpec(sb.shape, lambda i: (0, 0)),
            pl.BlockSpec(wl.shape, lambda i: (0, 0)),
            pl.BlockSpec(sl.shape, lambda i: (0, 0)),
        ],
        out_specs=pl.BlockSpec((tile, Cout), lambda i: (i, 0)),
        compiler_params=pltpu.CompilerParams(
            dimension_semantics=("parallel",), vmem_limit_bytes=VMEM_LIMIT),
    )(att_p, pf_p, b0_p, b1_p, b2_p, wa, sa, wb, sb, wl, sl)
    return out[:N] if n_pad != N else out


def _plane_convs_kernel(x_ref, w0_ref, s0_ref, w1_ref, s1_ref, o_ref, pad_ref,
                        *, k, slope, pada):
    # Fused: conv(kxk)+BN+LeakyReLU -> conv(kxk)+BN+LeakyReLU -> residual add.
    # Zero padding handled in a VMEM scratch (interior stored at a sublane-
    # aligned offset `pada`); per-tap bf16 matmuls accumulate in f32.
    H, W, C = x_ref.shape
    p = k // 2
    x = x_ref[...]
    pad_ref[...] = jnp.zeros_like(pad_ref)

    def conv_layer(inp, w_ref, sh_ref):
        pad_ref[pada:pada + H, pada:pada + W, :] = inp
        acc = jnp.zeros((H * W, C), jnp.float32)
        for dh in range(k):
            for dw in range(k):
                tap = dh * k + dw
                patch = pad_ref[pada + dh - p:pada + dh - p + H,
                                pada + dw - p:pada + dw - p + W, :]
                patch = patch.reshape(H * W, C).astype(jnp.bfloat16)
                acc = acc + jnp.dot(patch, w_ref[tap],
                                    preferred_element_type=jnp.float32)
        y = acc + sh_ref[...]
        y = jnp.where(y >= 0.0, y, slope * y)          # LeakyReLU(0.1)
        return y.reshape(H, W, C)

    h = conv_layer(x, w0_ref, s0_ref)
    h = conv_layer(h, w1_ref, s1_ref)
    o_ref[...] = (x + h).astype(o_ref.dtype)


def plane_double_conv(planes, w0, s0, w1, s1, *, k, slope=0.1):
    """planes: (P, B, R, R, C); w*: (P, k*k, C, C) bf16; s*: (P, 1, C)."""
    P, B, R, _, C = planes.shape
    kk = k * k
    p = k // 2
    pada = 8                                          # sublane-aligned pad offset
    # TODO(synk): for large resolutions on v7x, tile H into row strips with a
    # (k-1)-row halo so the per-plane block stays inside 64 MiB VMEM.
    return pl.pallas_call(
        functools.partial(_plane_convs_kernel, k=k, slope=slope, pada=pada),
        out_shape=jax.ShapeDtypeStruct((P, B, R, R, C), jnp.float32),
        grid=(P, B),
        in_specs=[
            pl.BlockSpec((None, None, R, R, C), lambda a, b: (a, b, 0, 0, 0)),
            pl.BlockSpec((None, kk, C, C), lambda a, b: (a, 0, 0, 0)),
            pl.BlockSpec((None, 1, C), lambda a, b: (a, 0, 0)),
            pl.BlockSpec((None, kk, C, C), lambda a, b: (a, 0, 0, 0)),
            pl.BlockSpec((None, 1, C), lambda a, b: (a, 0, 0)),
        ],
        out_specs=pl.BlockSpec((None, None, R, R, C),
                               lambda a, b: (a, b, 0, 0, 0)),
        scratch_shapes=[pltpu.VMEM((R + pada + p, R + pada + p, C),
                                   jnp.float32)],
        compiler_params=pltpu.CompilerParams(
            dimension_semantics=("parallel", "parallel"),
            vmem_limit_bytes=VMEM_LIMIT),
    )(planes, w0, s0, w1, s1)


# ----------------------------- parameters -----------------------------

def init_params(key, in_channels, out_channels, kernel_size):
    mid = out_channels // 2
    keys = iter(jax.random.split(key, 64))

    def w(shape, s=0.1):
        return s * jax.random.normal(next(keys), shape, jnp.float32)

    def lin(cin, cout):
        return {"w": w((cin, cout)), "b": w((cout,), 0.05)}

    def conv(cin, cout):
        return {"w": w((kernel_size, kernel_size, cin, cout)),
                "b": w((cout,), 0.05)}

    return {
        "proj_mlp": lin(in_channels, mid),                 # Projection point MLP
        "point": lin(in_channels, mid),                    # point_layers
        "att1": [lin(6, mid), lin(mid, mid)],              # att_mlp1 (last_relu=False)
        "att2": [lin(2 * mid, mid), lin(mid, 4)],          # att_mlp2 (last_relu=False)
        "last": lin(mid, out_channels),                    # last_mlp
        "planes": {a: [conv(mid, mid), conv(mid, mid)] for a in (1, 2, 3)},
    }


# Eval-mode BatchNorm with default running stats (mean=0, var=1, gamma=1,
# beta=0): fold the scale into the weights (bf16) so the kernel only adds shift.
_BN_SCALE = 1.0 / math.sqrt(1.0 + BN_EPS)


def _fold_lin(lp):
    return ((lp["w"] * _BN_SCALE).astype(jnp.bfloat16),
            (lp["b"] * _BN_SCALE).reshape(1, -1))


def _fold_conv(cp, k, cin, cout):
    return ((cp["w"] * _BN_SCALE).reshape(k * k, cin, cout).astype(jnp.bfloat16),
            (cp["b"] * _BN_SCALE).reshape(1, cout))


# ----------------------------- forward pass -----------------------------

def conv_pillar_caf_forward(features, coords, params, *, resolution,
                            kernel_size, out_channels, eps=1e-4):
    B, C, Np = features.shape
    R = resolution
    mid = out_channels // 2
    k = kernel_size
    N = B * Np

    # ---- coordinate normalization (mirrors the PyTorch code) ----
    nc = coords - jnp.mean(coords, axis=2, keepdims=True)
    denom = jnp.max(jnp.linalg.norm(nc, axis=1, keepdims=True),
                    axis=2, keepdims=True) * 2.0 + eps
    nc = nc / denom + 0.5
    nc = jnp.clip(nc * (R - 1), 0.0, R - 1 - eps)            # (B, 3, Np)
    nc_pn = jnp.transpose(nc, (0, 2, 1))                     # (B, Np, 3)
    ci = jnp.round(nc_pn).astype(jnp.int32)                  # voxel indices
    pvd = jnp.abs(nc_pn - ci.astype(jnp.float32))            # point-voxel distance

    feats_nc = jnp.transpose(features, (0, 2, 1)).reshape(N, C)

    # ---- fused (Projection point MLP || point_layers): one matmul, 2*mid Cout
    wp, sp = _fold_lin(params["proj_mlp"])
    wq, sq = _fold_lin(params["point"])
    pp = matmul_bn_act(feats_nc,
                       jnp.concatenate([wp, wq], axis=1),
                       jnp.concatenate([sp, sq], axis=1), act="relu")
    proj_pt = pp[:, :mid].reshape(B, Np, mid)
    point_feat = pp[:, mid:]                                  # (N, mid)

    # ---- Projection (scatter) onto the three R x R planes, batched ----
    # TODO(synk): exact Projection/BackProjection weighting not available in the
    # prompt; reconstructed as in-plane bilinear weights (1-du)(1-dv) with
    # weighted-mean scatter and nearest-cell gather.
    plane_axes = {1: (1, 2), 2: (0, 2), 3: (0, 1)}            # kept axes per proj
    idx_l, wgt_l = [], []
    for a in (1, 2, 3):
        ua, va = plane_axes[a]
        idx_l.append(ci[..., ua] * R + ci[..., va])
        wgt_l.append((1.0 - pvd[..., ua]) * (1.0 - pvd[..., va]))
    idx3 = jnp.stack(idx_l)                                   # (3, B, Np)
    wgt3 = jnp.stack(wgt_l)                                   # (3, B, Np)
    pidx = jnp.arange(3)[:, None, None]
    bidx = jnp.arange(B)[None, :, None]
    gsum = jnp.zeros((3, B, R * R, mid), jnp.float32).at[pidx, bidx, idx3].add(
        proj_pt[None] * wgt3[..., None])
    wsum = jnp.zeros((3, B, R * R, 1), jnp.float32).at[pidx, bidx, idx3].add(
        wgt3[..., None])
    planes = (gsum / (wsum + eps)).reshape(3, B, R, R, mid)   # plane-major NHWC

    # ---- fused double conv + BN + LeakyReLU + residual, per plane ----
    w0s, s0s, w1s, s1s = [], [], [], []
    for a in (1, 2, 3):
        cp0, cp1 = params["planes"][a]
        w0, s0 = _fold_conv(cp0, k, mid, mid)
        w1, s1 = _fold_conv(cp1, k, mid, mid)
        w0s.append(w0); s0s.append(s0); w1s.append(w1); s1s.append(s1)
    planes_out = plane_double_conv(planes, jnp.stack(w0s), jnp.stack(s0s),
                                   jnp.stack(w1s), jnp.stack(s1s), k=k)

    # ---- BackProjection gather ----
    bp = planes_out.reshape(3, B, R * R, mid)[pidx, bidx, idx3]  # (3, B, Np, mid)
    b0 = bp[0].reshape(N, mid)
    b1 = bp[1].reshape(N, mid)
    b2 = bp[2].reshape(N, mid)

    # ---- attention branch ----
    fusion_in = jnp.concatenate(
        [jnp.transpose(coords, (0, 2, 1)), nc_pn], axis=-1).reshape(N, 6)
    w1a, s1a = _fold_lin(params["att1"][0])
    w1b, s1b = _fold_lin(params["att1"][1])
    f = mlp2_bn_act(fusion_in, w1a, s1a, w1b, s1b, act1="relu", act2="none")
    fB = f.reshape(B, Np, mid)
    gmax = jnp.max(fB, axis=1, keepdims=True)                 # max over points
    att_in = jnp.concatenate(
        [fB, jnp.broadcast_to(gmax, fB.shape)], axis=-1).reshape(N, 2 * mid)

    # ---- att_mlp2 + softmax + weighted fusion + last_mlp, all in one kernel
    w2a, s2a = _fold_lin(params["att2"][0])
    w2b, s2b = _fold_lin(params["att2"][1])
    wl, sl = _fold_lin(params["last"])
    out = att_fuse_last(att_in, point_feat, b0, b1, b2,
                        w2a, s2a, w2b, s2b, wl, sl)           # (N, out_channels)

    out = jnp.transpose(out.reshape(B, Np, out_channels), (0, 2, 1))
    return out, coords


# ----------------------------- demo -----------------------------

if __name__ == "__main__":
    B, Np = 2, 64
    in_channels, out_channels = 8, 16
    resolution, kernel_size = 8, 3

    key = jax.random.PRNGKey(0)
    kf, kc, kp = jax.random.split(key, 3)
    features = jax.random.normal(kf, (B, in_channels, Np), jnp.float32)
    coords = jax.random.normal(kc, (B, 3, Np), jnp.float32)
    params = init_params(kp, in_channels, out_channels, kernel_size)

    fwd = jax.jit(functools.partial(
        conv_pillar_caf_forward,
        resolution=resolution, kernel_size=kernel_size,
        out_channels=out_channels))

    out_feat, out_coords = fwd(features, coords, params)
    jax.block_until_ready((out_feat, out_coords))

    assert out_feat.shape == (B, out_channels, Np)
    assert out_coords.shape == (B, 3, Np)
    assert bool(jnp.all(jnp.isfinite(out_feat)))
    print("KERNEL_OK")
</pallas_src>

<mosaic_0001>
module attributes {stable_mosaic.version = 11 : i64} {
  func.func private @main(%arg0: i32) attributes {dimension_semantics = [#tpu.dimension_semantics<core_parallel>], iteration_bounds = array<i64: 2>, tpu.core_type = #tpu.core_type<sc_scalar_subcore>, window_params = []} {
    return
  }
}

module attributes {stable_mosaic.version = 11 : i64} {
  func.func private @main(%arg0: i32) attributes {dimension_semantics = [#tpu.dimension_semantics<core_parallel>], iteration_bounds = array<i64: 2>, tpu.core_type = #tpu.core_type<sc_scalar_subcore>, window_params = []} {
    return
  }
}

module attributes {stable_mosaic.version = 11 : i64} {
  func.func @_mm_bn_act_kernel(%arg0: i32, %arg1: memref<128x8xbf16, #tpu.memory_space<vmem>>, %arg2: memref<8x16xbf16, #tpu.memory_space<vmem>>, %arg3: memref<1x16xf32, #tpu.memory_space<vmem>>, %arg4: memref<128x16xf32, #tpu.memory_space<vmem>>) attributes {dimension_semantics = [#tpu.dimension_semantics<parallel>], iteration_bounds = array<i64: 1>, scalar_prefetch = 0 : i64, scratch_operands = 0 : i64, tpu.core_type = #tpu.core_type<tc>, window_params = [{transform_indices = @transform_0, window_bounds = array<i64: 128, 8>}, {pipeline_mode = #tpu.pipeline_mode<synchronous>, transform_indices = @transform_1, window_bounds = array<i64: 8, 16>}, {pipeline_mode = #tpu.pipeline_mode<synchronous>, transform_indices = @transform_2, window_bounds = array<i64: 1, 16>}, {transform_indices = @transform_3, window_bounds = array<i64: 128, 16>}]} {
    %c0 = arith.constant 0 : index
    %c0_0 = arith.constant 0 : index
    %0 = vector.load %arg1[%c0, %c0_0] : memref<128x8xbf16, #tpu.memory_space<vmem>>, vector<128x8xbf16>
    %c0_1 = arith.constant 0 : index
    %c0_2 = arith.constant 0 : index
    %1 = vector.load %arg2[%c0_1, %c0_2] : memref<8x16xbf16, #tpu.memory_space<vmem>>, vector<8x16xbf16>
    %cst = arith.constant dense<0.000000e+00> : vector<128x16xf32>
    %2 = tpu.matmul %0, %1, %cst {dimension_numbers = #tpu.dot_dimension_numbers<[1], [0], [0], [1], [0, 0, 1, 1], [], []>} : vector<128x8xbf16>, vector<8x16xbf16>, vector<128x16xf32> -> vector<128x16xf32>
    %c0_3 = arith.constant 0 : index
    %c0_4 = arith.constant 0 : index
    %3 = vector.load %arg3[%c0_3, %c0_4] : memref<1x16xf32, #tpu.memory_space<vmem>>, vector<1x16xf32>
    %4 = vector.broadcast %3 : vector<1x16xf32> to vector<128x16xf32>
    %5 = arith.addf %2, %4 : vector<128x16xf32>
    %cst_5 = arith.constant 0.000000e+00 : f32
    %6 = vector.broadcast %cst_5 : f32 to vector<128x16xf32>
    %7 = arith.maximumf %5, %6 : vector<128x16xf32>
    %c0_6 = arith.constant 0 : index
    %c0_7 = arith.constant 0 : index
    %8 = vector.load %arg4[%c0_6, %c0_7] : memref<128x16xf32, #tpu.memory_space<vmem>>, vector<128x16xf32>
    tpu.vector_store %arg4[%c0_6, %c0_7], %7 {strides = array<i32>} : memref<128x16xf32, #tpu.memory_space<vmem>>, vector<128x16xf32>,
    return
  }
  func.func @transform_0(%arg0: i32) -> (i32, i32) {
    %c0_i32 = arith.constant 0 : i32
    %c0_i32_0 = arith.constant 0 : i32
    return %arg0, %c0_i32 : i32, i32
  }
  func.func @transform_1(%arg0: i32) -> (i32, i32) {
    %c0_i32 = arith.constant 0 : i32
    %c0_i32_0 = arith.constant 0 : i32
    %c0_i32_1 = arith.constant 0 : i32
    return %c0_i32, %c0_i32_0 : i32, i32
  }
  func.func @transform_2(%arg0: i32) -> (i32, i32) {
    %c0_i32 = arith.constant 0 : i32
    %c0_i32_0 = arith.constant 0 : i32
    %c0_i32_1 = arith.constant 0 : i32
    return %c0_i32, %c0_i32_0 : i32, i32
  }
  func.func @transform_3(%arg0: i32) -> (i32, i32) {
    %c0_i32 = arith.constant 0 : i32
    %c0_i32_0 = arith.constant 0 : i32
    return %arg0, %c0_i32 : i32, i32
  }
}

module attributes {stable_mosaic.version = 11 : i64} {
  func.func @_mlp2_kernel(%arg0: i32, %arg1: memref<128x6xbf16, #tpu.memory_space<vmem>>, %arg2: memref<6x8xbf16, #tpu.memory_space<vmem>>, %arg3: memref<1x8xf32, #tpu.memory_space<vmem>>, %arg4: memref<8x8xbf16, #tpu.memory_space<vmem>>, %arg5: memref<1x8xf32, #tpu.memory_space<vmem>>, %arg6: memref<128x8xf32, #tpu.memory_space<vmem>>) attributes {dimension_semantics = [#tpu.dimension_semantics<parallel>], iteration_bounds = array<i64: 1>, scalar_prefetch = 0 : i64, scratch_operands = 0 : i64, tpu.core_type = #tpu.core_type<tc>, window_params = [{transform_indices = @transform_0, window_bounds = array<i64: 128, 6>}, {pipeline_mode = #tpu.pipeline_mode<synchronous>, transform_indices = @transform_1, window_bounds = array<i64: 6, 8>}, {pipeline_mode = #tpu.pipeline_mode<synchronous>, transform_indices = @transform_2, window_bounds = array<i64: 1, 8>}, {pipeline_mode = #tpu.pipeline_mode<synchronous>, transform_indices = @transform_3, window_bounds = array<i64: 8, 8>}, {pipeline_mode = #tpu.pipeline_mode<synchronous>, transform_indices = @transform_4, window_bounds = array<i64: 1, 8>}, {transform_indices = @transform_5, window_bounds = array<i64: 128, 8>}]} {
    %c0 = arith.constant 0 : index
    %c0_0 = arith.constant 0 : index
    %0 = vector.load %arg1[%c0, %c0_0] : memref<128x6xbf16, #tpu.memory_space<vmem>>, vector<128x6xbf16>
    %c0_1 = arith.constant 0 : index
    %c0_2 = arith.constant 0 : index
    %1 = vector.load %arg2[%c0_1, %c0_2] : memref<6x8xbf16, #tpu.memory_space<vmem>>, vector<6x8xbf16>
    %cst = arith.constant dense<0.000000e+00> : vector<128x8xf32>
    %2 = tpu.matmul %0, %1, %cst {dimension_numbers = #tpu.dot_dimension_numbers<[1], [0], [0], [1], [0, 0, 1, 1], [], []>} : vector<128x6xbf16>, vector<6x8xbf16>, vector<128x8xf32> -> vector<128x8xf32>
    %c0_3 = arith.constant 0 : index
    %c0_4 = arith.constant 0 : index
    %3 = vector.load %arg3[%c0_3, %c0_4] : memref<1x8xf32, #tpu.memory_space<vmem>>, vector<1x8xf32>
    %4 = vector.broadcast %3 : vector<1x8xf32> to vector<128x8xf32>
    %5 = arith.addf %2, %4 : vector<128x8xf32>
    %cst_5 = arith.constant 0.000000e+00 : f32
    %6 = vector.broadcast %cst_5 : f32 to vector<128x8xf32>
    %7 = arith.maximumf %5, %6 : vector<128x8xf32>
    %8 = arith.truncf %7 : vector<128x8xf32> to vector<128x8xbf16>
    %c0_6 = arith.constant 0 : index
    %c0_7 = arith.constant 0 : index
    %9 = vector.load %arg4[%c0_6, %c0_7] : memref<8x8xbf16, #tpu.memory_space<vmem>>, vector<8x8xbf16>
    %cst_8 = arith.constant dense<0.000000e+00> : vector<128x8xf32>
    %10 = tpu.matmul %8, %9, %cst_8 {dimension_numbers = #tpu.dot_dimension_numbers<[1], [0], [0], [1], [0, 0, 1, 1], [], []>} : vector<128x8xbf16>, vector<8x8xbf16>, vector<128x8xf32> -> vector<128x8xf32>
    %c0_9 = arith.constant 0 : index
    %c0_10 = arith.constant 0 : index
    %11 = vector.load %arg5[%c0_9, %c0_10] : memref<1x8xf32, #tpu.memory_space<vmem>>, vector<1x8xf32>
    %12 = vector.broadcast %11 : vector<1x8xf32> to vector<128x8xf32>
    %13 = arith.addf %10, %12 : vector<128x8xf32>
    %c0_11 = arith.constant 0 : index
    %c0_12 = arith.constant 0 : index
    %14 = vector.load %arg6[%c0_11, %c0_12] : memref<128x8xf32, #tpu.memory_space<vmem>>, vector<128x8xf32>
    tpu.vector_store %arg6[%c0_11, %c0_12], %13 {strides = array<i32>} : memref<128x8xf32, #tpu.memory_space<vmem>>, vector<128x8xf32>,
    return
  }
  func.func @transform_0(%arg0: i32) -> (i32, i32) {
    %c0_i32 = arith.constant 0 : i32
    %c0_i32_0 = arith.constant 0 : i32
    return %arg0, %c0_i32 : i32, i32
  }
  func.func @transform_1(%arg0: i32) -> (i32, i32) {
    %c0_i32 = arith.constant 0 : i32
    %c0_i32_0 = arith.constant 0 : i32
    %c0_i32_1 = arith.constant 0 : i32
    return %c0_i32, %c0_i32_0 : i32, i32
  }
  func.func @transform_2(%arg0: i32) -> (i32, i32) {
    %c0_i32 = arith.constant 0 : i32
    %c0_i32_0 = arith.constant 0 : i32
    %c0_i32_1 = arith.constant 0 : i32
    return %c0_i32, %c0_i32_0 : i32, i32
  }
  func.func @transform_3(%arg0: i32) -> (i32, i32) {
    %c0_i32 = arith.constant 0 : i32
    %c0_i32_0 = arith.constant 0 : i32
    %c0_i32_1 = arith.constant 0 : i32
    return %c0_i32, %c0_i32_0 : i32, i32
  }
  func.func @transform_4(%arg0: i32) -> (i32, i32) {
    %c0_i32 = arith.constant 0 : i32
    %c0_i32_0 = arith.constant 0 : i32
    %c0_i32_1 = arith.constant 0 : i32
    return %c0_i32, %c0_i32_0 : i32, i32
  }
  func.func @transform_5(%arg0: i32) -> (i32, i32) {
    %c0_i32 = arith.constant 0 : i32
    %c0_i32_0 = arith.constant 0 : i32
    return %arg0, %c0_i32 : i32, i32
  }
}

module attributes {stable_mosaic.version = 11 : i64} {
  func.func @_plane_convs_kernel(%arg0: i32, %arg1: i32, %arg2: memref<1x1x8x8x8xf32, #tpu.memory_space<vmem>>, %arg3: memref<1x9x8x8xbf16, #tpu.memory_space<vmem>>, %arg4: memref<1x1x8xf32, #tpu.memory_space<vmem>>, %arg5: memref<1x9x8x8xbf16, #tpu.memory_space<vmem>>, %arg6: memref<1x1x8xf32, #tpu.memory_space<vmem>>, %arg7: memref<1x1x8x8x8xf32, #tpu.memory_space<vmem>>, %arg8: memref<17x17x8xf32, #tpu.memory_space<vmem>>) attributes {dimension_semantics = [#tpu.dimension_semantics<parallel>, #tpu.dimension_semantics<parallel>], iteration_bounds = array<i64: 3, 2>, scalar_prefetch = 0 : i64, scratch_operands = 1 : i64, tpu.core_type = #tpu.core_type<tc>, window_params = [{transform_indices = @transform_0, window_bounds = array<i64: 1, 1, 8, 8, 8>}, {transform_indices = @transform_1, window_bounds = array<i64: 1, 9, 8, 8>}, {transform_indices = @transform_2, window_bounds = array<i64: 1, 1, 8>}, {transform_indices = @transform_3, window_bounds = array<i64: 1, 9, 8, 8>}, {transform_indices = @transform_4, window_bounds = array<i64: 1, 1, 8>}, {transform_indices = @transform_5, window_bounds = array<i64: 1, 1, 8, 8, 8>}]} {
    %c0 = arith.constant 0 : index
    %c0_0 = arith.constant 0 : index
    %c0_1 = arith.constant 0 : index
    %c0_2 = arith.constant 0 : index
    %c0_3 = arith.constant 0 : index
    %0 = vector.load %arg2[%c0, %c0_0, %c0_1, %c0_2, %c0_3] : memref<1x1x8x8x8xf32, #tpu.memory_space<vmem>>, vector<1x1x8x8x8xf32>
    %1 = vector.shape_cast %0 : vector<1x1x8x8x8xf32> to vector<8x8x8xf32>
    %cst = arith.constant 0.000000e+00 : f32
    %2 = vector.broadcast %cst : f32 to vector<17x17x8xf32>
    %c0_4 = arith.constant 0 : index
    %c0_5 = arith.constant 0 : index
    %c0_6 = arith.constant 0 : index
    %3 = vector.load %arg8[%c0_4, %c0_5, %c0_6] : memref<17x17x8xf32, #tpu.memory_space<vmem>>, vector<17x17x8xf32>
    tpu.vector_store %arg8[%c0_4, %c0_5, %c0_6], %2 {strides = array<i32>} : memref<17x17x8xf32, #tpu.memory_space<vmem>>, vector<17x17x8xf32>,
    %c8 = arith.constant 8 : index
    %c8_7 = arith.constant 8 : index
    %c0_8 = arith.constant 0 : index
    %4 = vector.load %arg8[%c8, %c8_7, %c0_8] : memref<17x17x8xf32, #tpu.memory_space<vmem>>, vector<8x8x8xf32>
    tpu.vector_store %arg8[%c8, %c8_7, %c0_8], %1 {strides = array<i32>} : memref<17x17x8xf32, #tpu.memory_space<vmem>>, vector<8x8x8xf32>,
    %cst_9 = arith.constant 0.000000e+00 : f32
    %5 = vector.broadcast %cst_9 : f32 to vector<64x8xf32>
    %c7 = arith.constant 7 : index
    %c7_10 = arith.constant 7 : index
    %c0_11 = arith.constant 0 : index
    %6 = vector.load %arg8[%c7, %c7_10, %c0_11] : memref<17x17x8xf32, #tpu.memory_space<vmem>>, vector<8x8x8xf32>
    %7 = vector.shape_cast %6 : vector<8x8x8xf32> to vector<64x8xf32>
    %8 = arith.truncf %7 : vector<64x8xf32> to vector<64x8xbf16>
    %c0_12 = arith.constant 0 : index
    %c0_13 = arith.constant 0 : index
    %c0_14 = arith.constant 0 : index
    %c0_15 = arith.constant 0 : index
    %9 = vector.load %arg3[%c0_12, %c0_13, %c0_14, %c0_15] : memref<1x9x8x8xbf16, #tpu.memory_space<vmem>>, vector<1x1x8x8xbf16>
    %10 = vector.shape_cast %9 : vector<1x1x8x8xbf16> to vector<8x8xbf16>
    %cst_16 = arith.constant dense<0.000000e+00> : vector<64x8xf32>
    %11 = tpu.matmul %8, %10, %cst_16 {dimension_numbers = #tpu.dot_dimension_numbers<[1], [0], [0], [1], [0, 0, 1, 1], [], []>} : vector<64x8xbf16>, vector<8x8xbf16>, vector<64x8xf32> -> vector<64x8xf32>
    %12 = arith.addf %5, %11 : vector<64x8xf32>
    %c7_17 = arith.constant 7 : index
    %c8_18 = arith.constant 8 : index
    %c0_19 = arith.constant 0 : index
    %13 = vector.load %arg8[%c7_17, %c8_18, %c0_19] : memref<17x17x8xf32, #tpu.memory_space<vmem>>, vector<8x8x8xf32>
    %14 = vector.shape_cast %13 : vector<8x8x8xf32> to vector<64x8xf32>
    %15 = arith.truncf %14 : vector<64x8xf32> to vector<64x8xbf16>
    %c0_20 = arith.constant 0 : index
    %c1 = arith.constant 1 : index
    %c0_21 = arith.constant 0 : index
    %c0_22 = arith.constant 0 : index
    %16 = vector.load %arg3[%c0_20, %c1, %c0_21, %c0_22] : memref<1x9x8x8xbf16, #tpu.memory_space<vmem>>, vector<1x1x8x8xbf16>
    %17 = vector.shape_cast %16 : vector<1x1x8x8xbf16> to vector<8x8xbf16>
    %cst_23 = arith.constant dense<0.000000e+00> : vector<64x8xf32>
    %18 = tpu.matmul %15, %17, %cst_23 {dimension_numbers = #tpu.dot_dimension_numbers<[1], [0], [0], [1], [0, 0, 1, 1], [], []>} : vector<64x8xbf16>, vector<8x8xbf16>, vector<64x8xf32> -> vector<64x8xf32>
    %19 = arith.addf %12, %18 : vector<64x8xf32>
    %c7_24 = arith.constant 7 : index
    %c9 = arith.constant 9 : index
    %c0_25 = arith.constant 0 : index
    %20 = vector.load %arg8[%c7_24, %c9, %c0_25] : memref<17x17x8xf32, #tpu.memory_space<vmem>>, vector<8x8x8xf32>
    %21 = vector.shape_cast %20 : vector<8x8x8xf32> to vector<64x8xf32>
    %22 = arith.truncf %21 : vector<64x8xf32> to vector<64x8xbf16>
    %c0_26 = arith.constant 0 : index
    %c2 = arith.constant 2 : index
    %c0_27 = arith.constant 0 : index
    %c0_28 = arith.constant 0 : index
    %23 = vector.load %arg3[%c0_26, %c2, %c0_27, %c0_28] : memref<1x9x8x8xbf16, #tpu.memory_space<vmem>>, vector<1x1x8x8xbf16>
    %24 = vector.shape_cast %23 : vector<1x1x8x8xbf16> to vector<8x8xbf16>
    %cst_29 = arith.constant dense<0.000000e+00> : vector<64x8xf32>
    %25 = tpu.matmul %22, %24, %cst_29 {dimension_numbers = #tpu.dot_dimension_numbers<[1], [0], [0], [1], [0, 0, 1, 1], [], []>} : vector<64x8xbf16>, vector<8x8xbf16>, vector<64x8xf32> -> vector<64x8xf32>
    %26 = arith.addf %19, %25 : vector<64x8xf32>
    %c8_30 = arith.constant 8 : index
    %c7_31 = arith.constant 7 : index
    %c0_32 = arith.constant 0 : index
    %27 = vector.load %arg8[%c8_30, %c7_31, %c0_32] : memref<17x17x8xf32, #tpu.memory_space<vmem>>, vector<8x8x8xf32>
    %28 = vector.shape_cast %27 : vector<8x8x8xf32> to vector<64x8xf32>
    %29 = arith.truncf %28 : vector<64x8xf32> to vector<64x8xbf16>
    %c0_33 = arith.constant 0 : index
    %c3 = arith.constant 3 : index
    %c0_34 = arith.constant 0 : index
    %c0_35 = arith.constant 0 : index
    %30 = vector.load %arg3[%c0_33, %c3, %c0_34, %c0_35] : memref<1x9x8x8xbf16, #tpu.memory_space<vmem>>, vector<1x1x8x8xbf16>
    %31 = vector.shape_cast %30 : vector<1x1x8x8xbf16> to vector<8x8xbf16>
    %cst_36 = arith.constant dense<0.000000e+00> : vector<64x8xf32>
    %32 = tpu.matmul %29, %31, %cst_36 {dimension_numbers = #tpu.dot_dimension_numbers<[1], [0], [0], [1], [0, 0, 1, 1], [], []>} : vector<64x8xbf16>, vector<8x8xbf16>, vector<64x8xf32> -> vector<64x8xf32>
    %33 = arith.addf %26, %32 : vector<64x8xf32>
    %c8_37 = arith.constant 8 : index
    %c8_38 = arith.constant 8 : index
    %c0_39 = arith.constant 0 : index
    %34 = vector.load %arg8[%c8_37, %c8_38, %c0_39] : memref<17x17x8xf32, #tpu.memory_space<vmem>>, vector<8x8x8xf32>
    %35 = vector.shape_cast %34 : vector<8x8x8xf32> to vector<64x8xf32>
    %36 = arith.truncf %35 : vector<64x8xf32> to vector<64x8xbf16>
    %c0_40 = arith.constant 0 : index
    %c4 = arith.constant 4 : index
    %c0_41 = arith.constant 0 : index
    %c0_42 = arith.constant 0 : index
    %37 = vector.load %arg3[%c0_40, %c4, %c0_41, %c0_42] : memref<1x9x8x8xbf16, #tpu.memory_space<vmem>>, vector<1x1x8x8xbf16>
    %38 = vector.shape_cast %37 : vector<1x1x8x8xbf16> to vector<8x8xbf16>
    %cst_43 = arith.constant dense<0.000000e+00> : vector<64x8xf32>
    %39 = tpu.matmul %36, %38, %cst_43 {dimension_numbers = #tpu.dot_dimension_numbers<[1], [0], [0], [1], [0, 0, 1, 1], [], []>} : vector<64x8xbf16>, vector<8x8xbf16>, vector<64x8xf32> -> vector<64x8xf32>
    %40 = arith.addf %33, %39 : vector<64x8xf32>
    %c8_44 = arith.constant 8 : index
    %c9_45 = arith.constant 9 : index
    %c0_46 = arith.constant 0 : index
    %41 = vector.load %arg8[%c8_44, %c9_45, %c0_46] : memref<17x17x8xf32, #tpu.memory_space<vmem>>, vector<8x8x8xf32>
    %42 = vector.shape_cast %41 : vector<8x8x8xf32> to vector<64x8xf32>
    %43 = arith.truncf %42 : vector<64x8xf32> to vector<64x8xbf16>
    %c0_47 = arith.constant 0 : index
    %c5 = arith.constant 5 : index
    %c0_48 = arith.constant 0 : index
    %c0_49 = arith.constant 0 : index
    %44 = vector.load %arg3[%c0_47, %c5, %c0_48, %c0_49] : memref<1x9x8x8xbf16, #tpu.memory_space<vmem>>, vector<1x1x8x8xbf16>
    %45 = vector.shape_cast %44 : vector<1x1x8x8xbf16> to vector<8x8xbf16>
    %cst_50 = arith.constant dense<0.000000e+00> : vector<64x8xf32>
    %46 = tpu.matmul %43, %45, %cst_50 {dimension_numbers = #tpu.dot_dimension_numbers<[1], [0], [0], [1], [0, 0, 1, 1], [], []>} : vector<64x8xbf16>, vector<8x8xbf16>, vector<64x8xf32> -> vector<64x8xf32>
    %47 = arith.addf %40, %46 : vector<64x8xf32>
    %c9_51 = arith.constant 9 : index
    %c7_52 = arith.constant 7 : index
    %c0_53 = arith.constant 0 : index
    %48 = vector.load %arg8[%c9_51, %c7_52, %c0_53] : memref<17x17x8xf32, #tpu.memory_space<vmem>>, vector<8x8x8xf32>
    %49 = vector.shape_cast %48 : vector<8x8x8xf32> to vector<64x8xf32>
    %50 = arith.truncf %49 : vector<64x8xf32> to vector<64x8xbf16>
    %c0_54 = arith.constant 0 : index
    %c6 = arith.constant 6 : index
    %c0_55 = arith.constant 0 : index
    %c0_56 = arith.constant 0 : index
    %51 = vector.load %arg3[%c0_54, %c6, %c0_55, %c0_56] : memref<1x9x8x8xbf16, #tpu.memory_space<vmem>>, vector<1x1x8x8xbf16>
    %52 = vector.shape_cast %51 : vector<1x1x8x8xbf16> to vector<8x8xbf16>
    %cst_57 = arith.constant dense<0.000000e+00> : vector<64x8xf32>
    %53 = tpu.matmul %50, %52, %cst_57 {dimension_numbers = #tpu.dot_dimension_numbers<[1], [0], [0], [1], [0, 0, 1, 1], [], []>} : vector<64x8xbf16>, vector<8x8xbf16>, vector<64x8xf32> -> vector<64x8xf32>
    %54 = arith.addf %47, %53 : vector<64x8xf32>
    %c9_58 = arith.constant 9 : index
    %c8_59 = arith.constant 8 : index
    %c0_60 = arith.constant 0 : index
    %55 = vector.load %arg8[%c9_58, %c8_59, %c0_60] : memref<17x17x8xf32, #tpu.memory_space<vmem>>, vector<8x8x8xf32>
    %56 = vector.shape_cast %55 : vector<8x8x8xf32> to vector<64x8xf32>
    %57 = arith.truncf %56 : vector<64x8xf32> to vector<64x8xbf16>
    %c0_61 = arith.constant 0 : index
    %c7_62 = arith.constant 7 : index
    %c0_63 = arith.constant 0 : index
    %c0_64 = arith.constant 0 : index
    %58 = vector.load %arg3[%c0_61, %c7_62, %c0_63, %c0_64] : memref<1x9x8x8xbf16, #tpu.memory_space<vmem>>, vector<1x1x8x8xbf16>
    %59 = vector.shape_cast %58 : vector<1x1x8x8xbf16> to vector<8x8xbf16>
    %cst_65 = arith.constant dense<0.000000e+00> : vector<64x8xf32>
    %60 = tpu.matmul %57, %59, %cst_65 {dimension_numbers = #tpu.dot_dimension_numbers<[1], [0], [0], [1], [0, 0, 1, 1], [], []>} : vector<64x8xbf16>, vector<8x8xbf16>, vector<64x8xf32> -> vector<64x8xf32>
    %61 = arith.addf %54, %60 : vector<64x8xf32>
    %c9_66 = arith.constant 9 : index
    %c9_67 = arith.constant 9 : index
    %c0_68 = arith.constant 0 : index
    %62 = vector.load %arg8[%c9_66, %c9_67, %c0_68] : memref<17x17x8xf32, #tpu.memory_space<vmem>>, vector<8x8x8xf32>
    %63 = vector.shape_cast %62 : vector<8x8x8xf32> to vector<64x8xf32>
    %64 = arith.truncf %63 : vector<64x8xf32> to vector<64x8xbf16>
    %c0_69 = arith.constant 0 : index
    %c8_70 = arith.constant 8 : index
    %c0_71 = arith.constant 0 : index
    %c0_72 = arith.constant 0 : index
    %65 = vector.load %arg3[%c0_69, %c8_70, %c0_71, %c0_72] : memref<1x9x8x8xbf16, #tpu.memory_space<vmem>>, vector<1x1x8x8xbf16>
    %66 = vector.shape_cast %65 : vector<1x1x8x8xbf16> to vector<8x8xbf16>
    %cst_73 = arith.constant dense<0.000000e+00> : vector<64x8xf32>
    %67 = tpu.matmul %64, %66, %cst_73 {dimension_numbers = #tpu.dot_dimension_numbers<[1], [0], [0], [1], [0, 0, 1, 1], [], []>} : vector<64x8xbf16>, vector<8x8xbf16>, vector<64x8xf32> -> vector<64x8xf32>
    %68 = arith.addf %61, %67 : vector<64x8xf32>
    %c0_74 = arith.constant 0 : index
    %c0_75 = arith.constant 0 : index
    %c0_76 = arith.constant 0 : index
    %69 = vector.load %arg4[%c0_74, %c0_75, %c0_76] : memref<1x1x8xf32, #tpu.memory_space<vmem>>, vector<1x1x8xf32>
    %70 = vector.shape_cast %69 : vector<1x1x8xf32> to vector<1x8xf32>
    %71 = vector.broadcast %70 : vector<1x8xf32> to vector<64x8xf32>
    %72 = arith.addf %68, %71 : vector<64x8xf32>
    %cst_77 = arith.constant 0.000000e+00 : f32
    %73 = vector.broadcast %cst_77 : f32 to vector<64x8xf32>
    %74 = arith.cmpf oge, %72, %73 : vector<64x8xf32>
    %cst_78 = arith.constant 1.000000e-01 : f32
    %75 = vector.broadcast %cst_78 : f32 to vector<64x8xf32>
    %76 = arith.mulf %75, %72 : vector<64x8xf32>
    %77 = arith.select %74, %72, %76 : vector<64x8xi1>, vector<64x8xf32>
    %78 = vector.shape_cast %77 : vector<64x8xf32> to vector<8x8x8xf32>
    %c8_79 = arith.constant 8 : index
    %c8_80 = arith.constant 8 : index
    %c0_81 = arith.constant 0 : index
    %79 = vector.load %arg8[%c8_79, %c8_80, %c0_81] : memref<17x17x8xf32, #tpu.memory_space<vmem>>, vector<8x8x8xf32>
    tpu.vector_store %arg8[%c8_79, %c8_80, %c0_81], %78 {strides = array<i32>} : memref<17x17x8xf32, #tpu.memory_space<vmem>>, vector<8x8x8xf32>,
    %cst_82 = arith.constant 0.000000e+00 : f32
    %80 = vector.broadcast %cst_82 : f32 to vector<64x8xf32>
    %c7_83 = arith.constant 7 : index
    %c7_84 = arith.constant 7 : index
    %c0_85 = arith.constant 0 : index
    %81 = vector.load %arg8[%c7_83, %c7_84, %c0_85] : memref<17x17x8xf32, #tpu.memory_space<vmem>>, vector<8x8x8xf32>
    %82 = vector.shape_cast %81 : vector<8x8x8xf32> to vector<64x8xf32>
    %83 = arith.truncf %82 : vector<64x8xf32> to vector<64x8xbf16>
    %c0_86 = arith.constant 0 : index
    %c0_87 = arith.constant 0 : index
    %c0_88 = arith.constant 0 : index
    %c0_89 = arith.constant 0 : index
    %84 = vector.load %arg5[%c0_86, %c0_87, %c0_88, %c0_89] : memref<1x9x8x8xbf16, #tpu.memory_space<vmem>>, vector<1x1x8x8xbf16>
    %85 = vector.shape_cast %84 : vector<1x1x8x8xbf16> to vector<8x8xbf16>
    %cst_90 = arith.constant dense<0.000000e+00> : vector<64x8xf32>
    %86 = tpu.matmul %83, %85, %cst_90 {dimension_numbers = #tpu.dot_dimension_numbers<[1], [0], [0], [1], [0, 0, 1, 1], [], []>} : vector<64x8xbf16>, vector<8x8xbf16>, vector<64x8xf32> -> vector<64x8xf32>
    %87 = arith.addf %80, %86 : vector<64x8xf32>
    %c7_91 = arith.constant 7 : index
    %c8_92 = arith.constant 8 : index
    %c0_93 = arith.constant 0 : index
    %88 = vector.load %arg8[%c7_91, %c8_92, %c0_93] : memref<17x17x8xf32, #tpu.memory_space<vmem>>, vector<8x8x8xf32>
    %89 = vector.shape_cast %88 : vector<8x8x8xf32> to vector<64x8xf32>
    %90 = arith.truncf %89 : vector<64x8xf32> to vector<64x8xbf16>
    %c0_94 = arith.constant 0 : index
    %c1_95 = arith.constant 1 : index
    %c0_96 = arith.constant 0 : index
    %c0_97 = arith.constant 0 : index
    %91 = vector.load %arg5[%c0_94, %c1_95, %c0_96, %c0_97] : memref<1x9x8x8xbf16, #tpu.memory_space<vmem>>, vector<1x1x8x8xbf16>
    %92 = vector.shape_cast %91 : vector<1x1x8x8xbf16> to vector<8x8xbf16>
    %cst_98 = arith.constant dense<0.000000e+00> : vector<64x8xf32>
    %93 = tpu.matmul %90, %92, %cst_98 {dimension_numbers = #tpu.dot_dimension_numbers<[1], [0], [0], [1], [0, 0, 1, 1], [], []>} : vector<64x8xbf16>, vector<8x8xbf16>, vector<64x8xf32> -> vector<64x8xf32>
    %94 = arith.addf %87, %93 : vector<64x8xf32>
    %c7_99 = arith.constant 7 : index
    %c9_100 = arith.constant 9 : index
    %c0_101 = arith.constant 0 : index
    %95 = vector.load %arg8[%c7_99, %c9_100, %c0_101] : memref<17x17x8xf32, #tpu.memory_space<vmem>>, vector<8x8x8xf32>
    %96 = vector.shape_cast %95 : vector<8x8x8xf32> to vector<64x8xf32>
    %97 = arith.truncf %96 : vector<64x8xf32> to vector<64x8xbf16>
    %c0_102 = arith.constant 0 : index
    %c2_103 = arith.constant 2 : index
    %c0_104 = arith.constant 0 : index
    %c0_105 = arith.constant 0 : index
    %98 = vector.load %arg5[%c0_102, %c2_103, %c0_104, %c0_105] : memref<1x9x8x8xbf16, #tpu.memory_space<vmem>>, vector<1x1x8x8xbf16>
    %99 = vector.shape_cast %98 : vector<1x1x8x8xbf16> to vector<8x8xbf16>
    %cst_106 = arith.constant dense<0.000000e+00> : vector<64x8xf32>
    %100 = tpu.matmul %97, %99, %cst_106 {dimension_numbers = #tpu.dot_dimension_numbers<[1], [0], [0], [1], [0, 0, 1, 1], [], []>} : vector<64x8xbf16>, vector<8x8xbf16>, vector<64x8xf32> -> vector<64x8xf32>
    %101 = arith.addf %94, %100 : vector<64x8xf32>
    %c8_107 = arith.constant 8 : index
    %c7_108 = arith.constant 7 : index
    %c0_109 = arith.constant 0 : index
    %102 = vector.load %arg8[%c8_107, %c7_108, %c0_109] : memref<17x17x8xf32, #tpu.memory_space<vmem>>, vector<8x8x8xf32>
    %103 = vector.shape_cast %102 : vector<8x8x8xf32> to vector<64x8xf32>
    %104 = arith.truncf %103 : vector<64x8xf32> to vector<64x8xbf16>
    %c0_110 = arith.constant 0 : index
    %c3_111 = arith.constant 3 : index
    %c0_112 = arith.constant 0 : index
    %c0_113 = arith.constant 0 : index
    %105 = vector.load %arg5[%c0_110, %c3_111, %c0_112, %c0_113] : memref<1x9x8x8xbf16, #tpu.memory_space<vmem>>, vector<1x1x8x8xbf16>
    %106 = vector.shape_cast %105 : vector<1x1x8x8xbf16> to vector<8x8xbf16>
    %cst_114 = arith.constant dense<0.000000e+00> : vector<64x8xf32>
    %107 = tpu.matmul %104, %106, %cst_114 {dimension_numbers = #tpu.dot_dimension_numbers<[1], [0], [0], [1], [0, 0, 1, 1], [], []>} : vector<64x8xbf16>, vector<8x8xbf16>, vector<64x8xf32> -> vector<64x8xf32>
    %108 = arith.addf %101, %107 : vector<64x8xf32>
    %c8_115 = arith.constant 8 : index
    %c8_116 = arith.constant 8 : index
    %c0_117 = arith.constant 0 : index
    %109 = vector.load %arg8[%c8_115, %c8_116, %c0_117] : memref<17x17x8xf32, #tpu.memory_space<vmem>>, vector<8x8x8xf32>
    %110 = vector.shape_cast %109 : vector<8x8x8xf32> to vector<64x8xf32>
    %111 = arith.truncf %110 : vector<64x8xf32> to vector<64x8xbf16>
    %c0_118 = arith.constant 0 : index
    %c4_119 = arith.constant 4 : index
    %c0_120 = arith.constant 0 : index
    %c0_121 = arith.constant 0 : index
    %112 = vector.load %arg5[%c0_118, %c4_119, %c0_120, %c0_121] : memref<1x9x8x8xbf16, #tpu.memory_space<vmem>>, vector<1x1x8x8xbf16>
    %113 = vector.shape_cast %112 : vector<1x1x8x8xbf16> to vector<8x8xbf16>
    %cst_122 = arith.constant dense<0.000000e+00> : vector<64x8xf32>
    %114 = tpu.matmul %111, %113, %cst_122 {dimension_numbers = #tpu.dot_dimension_numbers<[1], [0], [0], [1], [0, 0, 1, 1], [], []>} : vector<64x8xbf16>, vector<8x8xbf16>, vector<64x8xf32> -> vector<64x8xf32>
    %115 = arith.addf %108, %114 : vector<64x8xf32>
    %c8_123 = arith.constant 8 : index
    %c9_124 = arith.constant 9 : index
    %c0_125 = arith.constant 0 : index
    %116 = vector.load %arg8[%c8_123, %c9_124, %c0_125] : memref<17x17x8xf32, #tpu.memory_space<vmem>>, vector<8x8x8xf32>
    %117 = vector.shape_cast %116 : vector<8x8x8xf32> to vector<64x8xf32>
    %118 = arith.truncf %117 : vector<64x8xf32> to vector<64x8xbf16>
    %c0_126 = arith.constant 0 : index
    %c5_127 = arith.constant 5 : index
    %c0_128 = arith.constant 0 : index
    %c0_129 = arith.constant 0 : index
    %119 = vector.load %arg5[%c0_126, %c5_127, %c0_128, %c0_129] : memref<1x9x8x8xbf16, #tpu.memory_space<vmem>>, vector<1x1x8x8xbf16>
    %120 = vector.shape_cast %119 : vector<1x1x8x8xbf16> to vector<8x8xbf16>
    %cst_130 = arith.constant dense<0.000000e+00> : vector<64x8xf32>
    %121 = tpu.matmul %118, %120, %cst_130 {dimension_numbers = #tpu.dot_dimension_numbers<[1], [0], [0], [1], [0, 0, 1, 1], [], []>} : vector<64x8xbf16>, vector<8x8xbf16>, vector<64x8xf32> -> vector<64x8xf32>
    %122 = arith.addf %115, %121 : vector<64x8xf32>
    %c9_131 = arith.constant 9 : index
    %c7_132 = arith.constant 7 : index
    %c0_133 = arith.constant 0 : index
    %123 = vector.load %arg8[%c9_131, %c7_132, %c0_133] : memref<17x17x8xf32, #tpu.memory_space<vmem>>, vector<8x8x8xf32>
    %124 = vector.shape_cast %123 : vector<8x8x8xf32> to vector<64x8xf32>
    %125 = arith.truncf %124 : vector<64x8xf32> to vector<64x8xbf16>
    %c0_134 = arith.constant 0 : index
    %c6_135 = arith.constant 6 : index
    %c0_136 = arith.constant 0 : index
    %c0_137 = arith.constant 0 : index
    %126 = vector.load %arg5[%c0_134, %c6_135, %c0_136, %c0_137] : memref<1x9x8x8xbf16, #tpu.memory_space<vmem>>, vector<1x1x8x8xbf16>
    %127 = vector.shape_cast %126 : vector<1x1x8x8xbf16> to vector<8x8xbf16>
    %cst_138 = arith.constant dense<0.000000e+00> : vector<64x8xf32>
    %128 = tpu.matmul %125, %127, %cst_138 {dimension_numbers = #tpu.dot_dimension_numbers<[1], [0], [0], [1], [0, 0, 1, 1], [], []>} : vector<64x8xbf16>, vector<8x8xbf16>, vector<64x8xf32> -> vector<64x8xf32>
    %129 = arith.addf %122, %128 : vector<64x8xf32>
    %c9_139 = arith.constant 9 : index
    %c8_140 = arith.constant 8 : index
    %c0_141 = arith.constant 0 : index
    %130 = vector.load %arg8[%c9_139, %c8_140, %c0_141] : memref<17x17x8xf32, #tpu.memory_space<vmem>>, vector<8x8x8xf32>
    %131 = vector.shape_cast %130 : vector<8x8x8xf32> to vector<64x8xf32>
    %132 = arith.truncf %131 : vector<64x8xf32> to vector<64x8xbf16>
    %c0_142 = arith.constant 0 : index
    %c7_143 = arith.constant 7 : index
    %c0_144 = arith.constant 0 : index
    %c0_145 = arith.constant 0 : index
    %133 = vector.load %arg5[%c0_142, %c7_143, %c0_144, %c0_145] : memref<1x9x8x8xbf16, #tpu.memory_space<vmem>>, vector<1x1x8x8xbf16>
    %134 = vector.shape_cast %133 : vector<1x1x8x8xbf16> to vector<8x8xbf16>
    %cst_146 = arith.constant dense<0.000000e+00> : vector<64x8xf32>
    %135 = tpu.matmul %132, %134, %cst_146 {dimension_numbers = #tpu.dot_dimension_numbers<[1], [0], [0], [1], [0, 0, 1, 1], [], []>} : vector<64x8xbf16>, vector<8x8xbf16>, vector<64x8xf32> -> vector<64x8xf32>
    %136 = arith.addf %129, %135 : vector<64x8xf32>
    %c9_147 = arith.constant 9 : index
    %c9_148 = arith.constant 9 : index
    %c0_149 = arith.constant 0 : index
    %137 = vector.load %arg8[%c9_147, %c9_148, %c0_149] : memref<17x17x8xf32, #tpu.memory_space<vmem>>, vector<8x8x8xf32>
    %138 = vector.shape_cast %137 : vector<8x8x8xf32> to vector<64x8xf32>
    %139 = arith.truncf %138 : vector<64x8xf32> to vector<64x8xbf16>
    %c0_150 = arith.constant 0 : index
    %c8_151 = arith.constant 8 : index
    %c0_152 = arith.constant 0 : index
    %c0_153 = arith.constant 0 : index
    %140 = vector.load %arg5[%c0_150, %c8_151, %c0_152, %c0_153] : memref<1x9x8x8xbf16, #tpu.memory_space<vmem>>, vector<1x1x8x8xbf16>
    %141 = vector.shape_cast %140 : vector<1x1x8x8xbf16> to vector<8x8xbf16>
    %cst_154 = arith.constant dense<0.000000e+00> : vector<64x8xf32>
    %142 = tpu.matmul %139, %141, %cst_154 {dimension_numbers = #tpu.dot_dimension_numbers<[1], [0], [0], [1], [0, 0, 1, 1], [], []>} : vector<64x8xbf16>, vector<8x8xbf16>, vector<64x8xf32> -> vector<64x8xf32>
    %143 = arith.addf %136, %142 : vector<64x8xf32>
    %c0_155 = arith.constant 0 : index
    %c0_156 = arith.constant 0 : index
    %c0_157 = arith.constant 0 : index
    %144 = vector.load %arg6[%c0_155, %c0_156, %c0_157] : memref<1x1x8xf32, #tpu.memory_space<vmem>>, vector<1x1x8xf32>
    %145 = vector.shape_cast %144 : vector<1x1x8xf32> to vector<1x8xf32>
    %146 = vector.broadcast %145 : vector<1x8xf32> to vector<64x8xf32>
    %147 = arith.addf %143, %146 : vector<64x8xf32>
    %cst_158 = arith.constant 0.000000e+00 : f32
    %148 = vector.broadcast %cst_158 : f32 to vector<64x8xf32>
    %149 = arith.cmpf oge, %147, %148 : vector<64x8xf32>
    %cst_159 = arith.constant 1.000000e-01 : f32
    %150 = vector.broadcast %cst_159 : f32 to vector<64x8xf32>
    %151 = arith.mulf %150, %147 : vector<64x8xf32>
    %152 = arith.select %149, %147, %151 : vector<64x8xi1>, vector<64x8xf32>
    %153 = vector.shape_cast %152 : vector<64x8xf32> to vector<8x8x8xf32>
    %154 = arith.addf %1, %153 : vector<8x8x8xf32>
    %c0_160 = arith.constant 0 : index
    %c0_161 = arith.constant 0 : index
    %c0_162 = arith.constant 0 : index
    %c0_163 = arith.constant 0 : index
    %c0_164 = arith.constant 0 : index
    %155 = vector.load %arg7[%c0_160, %c0_161, %c0_162, %c0_163, %c0_164] : memref<1x1x8x8x8xf32, #tpu.memory_space<vmem>>, vector<1x1x8x8x8xf32>
    %156 = vector.shape_cast %155 : vector<1x1x8x8x8xf32> to vector<8x8x8xf32>
    %157 = vector.shape_cast %154 : vector<8x8x8xf32> to vector<1x1x8x8x8xf32>
    tpu.vector_store %arg7[%c0_160, %c0_161, %c0_162, %c0_163, %c0_164], %157 {strides = array<i32>} : memref<1x1x8x8x8xf32, #tpu.memory_space<vmem>>, vector<1x1x8x8x8xf32>,
    return
  }
  func.func @transform_0(%arg0: i32, %arg1: i32) -> (i32, i32, i32, i32, i32) {
    %c0_i32 = arith.constant 0 : i32
    %c0_i32_0 = arith.constant 0 : i32
    %c0_i32_1 = arith.constant 0 : i32
    %c0_i32_2 = arith.constant 0 : i32
    return %arg0, %arg1, %c0_i32, %c0_i32_0, %c0_i32_1 : i32, i32, i32, i32, i32
  }
  func.func @transform_1(%arg0: i32, %arg1: i32) -> (i32, i32, i32, i32) {
    %c0_i32 = arith.constant 0 : i32
    %c0_i32_0 = arith.constant 0 : i32
    %c0_i32_1 = arith.constant 0 : i32
    %c0_i32_2 = arith.constant 0 : i32
    return %arg0, %c0_i32, %c0_i32_0, %c0_i32_1 : i32, i32, i32, i32
  }
  func.func @transform_2(%arg0: i32, %arg1: i32) -> (i32, i32, i32) {
    %c0_i32 = arith.constant 0 : i32
    %c0_i32_0 = arith.constant 0 : i32
    %c0_i32_1 = arith.constant 0 : i32
    return %arg0, %c0_i32, %c0_i32_0 : i32, i32, i32
  }
  func.func @transform_3(%arg0: i32, %arg1: i32) -> (i32, i32, i32, i32) {
    %c0_i32 = arith.constant 0 : i32
    %c0_i32_0 = arith.constant 0 : i32
    %c0_i32_1 = arith.constant 0 : i32
    %c0_i32_2 = arith.constant 0 : i32
    return %arg0, %c0_i32, %c0_i32_0, %c0_i32_1 : i32, i32, i32, i32
  }
  func.func @transform_4(%arg0: i32, %arg1: i32) -> (i32, i32, i32) {
    %c0_i32 = arith.constant 0 : i32
    %c0_i32_0 = arith.constant 0 : i32
    %c0_i32_1 = arith.constant 0 : i32
    return %arg0, %c0_i32, %c0_i32_0 : i32, i32, i32
  }
  func.func @transform_5(%arg0: i32, %arg1: i32) -> (i32, i32, i32, i32, i32) {
    %c0_i32 = arith.constant 0 : i32
    %c0_i32_0 = arith.constant 0 : i32
    %c0_i32_1 = arith.constant 0 : i32
    %c0_i32_2 = arith.constant 0 : i32
    return %arg0, %arg1, %c0_i32, %c0_i32_0, %c0_i32_1 : i32, i32, i32, i32, i32
  }
}

module attributes {stable_mosaic.version = 11 : i64} {
  func.func @_att_fuse_last_kernel(%arg0: i32, %arg1: memref<128x16xbf16, #tpu.memory_space<vmem>>, %arg2: memref<128x8xf32, #tpu.memory_space<vmem>>, %arg3: memref<128x8xf32, #tpu.memory_space<vmem>>, %arg4: memref<128x8xf32, #tpu.memory_space<vmem>>, %arg5: memref<128x8xf32, #tpu.memory_space<vmem>>, %arg6: memref<16x8xbf16, #tpu.memory_space<vmem>>, %arg7: memref<1x8xf32, #tpu.memory_space<vmem>>, %arg8: memref<8x4xbf16, #tpu.memory_space<vmem>>, %arg9: memref<1x4xf32, #tpu.memory_space<vmem>>, %arg10: memref<8x16xbf16, #tpu.memory_space<vmem>>, %arg11: memref<1x16xf32, #tpu.memory_space<vmem>>, %arg12: memref<128x16xf32, #tpu.memory_space<vmem>>) attributes {dimension_semantics = [#tpu.dimension_semantics<parallel>], iteration_bounds = array<i64: 1>, scalar_prefetch = 0 : i64, scratch_operands = 0 : i64, tpu.core_type = #tpu.core_type<tc>, window_params = [{transform_indices = @transform_0, window_bounds = array<i64: 128, 16>}, {transform_indices = @transform_1, window_bounds = array<i64: 128, 8>}, {transform_indices = @transform_2, window_bounds = array<i64: 128, 8>}, {transform_indices = @transform_3, window_bounds = array<i64: 128, 8>}, {transform_indices = @transform_4, window_bounds = array<i64: 128, 8>}, {pipeline_mode = #tpu.pipeline_mode<synchronous>, transform_indices = @transform_5, window_bounds = array<i64: 16, 8>}, {pipeline_mode = #tpu.pipeline_mode<synchronous>, transform_indices = @transform_6, window_bounds = array<i64: 1, 8>}, {pipeline_mode = #tpu.pipeline_mode<synchronous>, transform_indices = @transform_7, window_bounds = array<i64: 8, 4>}, {pipeline_mode = #tpu.pipeline_mode<synchronous>, transform_indices = @transform_8, window_bounds = array<i64: 1, 4>}, {pipeline_mode = #tpu.pipeline_mode<synchronous>, transform_indices = @transform_9, window_bounds = array<i64: 8, 16>}, {pipeline_mode = #tpu.pipeline_mode<synchronous>, transform_indices = @transform_10, window_bounds = array<i64: 1, 16>}, {transform_indices = @transform_11, window_bounds = array<i64: 128, 16>}]} {
    %c0 = arith.constant 0 : index
    %c0_0 = arith.constant 0 : index
    %0 = vector.load %arg1[%c0, %c0_0] : memref<128x16xbf16, #tpu.memory_space<vmem>>, vector<128x16xbf16>
    %c0_1 = arith.constant 0 : index
    %c0_2 = arith.constant 0 : index
    %1 = vector.load %arg6[%c0_1, %c0_2] : memref<16x8xbf16, #tpu.memory_space<vmem>>, vector<16x8xbf16>
    %cst = arith.constant dense<0.000000e+00> : vector<128x8xf32>
    %2 = tpu.matmul %0, %1, %cst {dimension_numbers = #tpu.dot_dimension_numbers<[1], [0], [0], [1], [0, 0, 1, 1], [], []>} : vector<128x16xbf16>, vector<16x8xbf16>, vector<128x8xf32> -> vector<128x8xf32>
    %c0_3 = arith.constant 0 : index
    %c0_4 = arith.constant 0 : index
    %3 = vector.load %arg7[%c0_3, %c0_4] : memref<1x8xf32, #tpu.memory_space<vmem>>, vector<1x8xf32>
    %4 = vector.broadcast %3 : vector<1x8xf32> to vector<128x8xf32>
    %5 = arith.addf %2, %4 : vector<128x8xf32>
    %cst_5 = arith.constant 0.000000e+00 : f32
    %6 = vector.broadcast %cst_5 : f32 to vector<128x8xf32>
    %7 = arith.maximumf %5, %6 : vector<128x8xf32>
    %8 = arith.truncf %7 : vector<128x8xf32> to vector<128x8xbf16>
    %c0_6 = arith.constant 0 : index
    %c0_7 = arith.constant 0 : index
    %9 = vector.load %arg8[%c0_6, %c0_7] : memref<8x4xbf16, #tpu.memory_space<vmem>>, vector<8x4xbf16>
    %cst_8 = arith.constant dense<0.000000e+00> : vector<128x4xf32>
    %10 = tpu.matmul %8, %9, %cst_8 {dimension_numbers = #tpu.dot_dimension_numbers<[1], [0], [0], [1], [0, 0, 1, 1], [], []>} : vector<128x8xbf16>, vector<8x4xbf16>, vector<128x4xf32> -> vector<128x4xf32>
    %c0_9 = arith.constant 0 : index
    %c0_10 = arith.constant 0 : index
    %11 = vector.load %arg9[%c0_9, %c0_10] : memref<1x4xf32, #tpu.memory_space<vmem>>, vector<1x4xf32>
    %12 = vector.broadcast %11 : vector<1x4xf32> to vector<128x4xf32>
    %13 = arith.addf %10, %12 : vector<128x4xf32>
    %cst_11 = arith.constant dense<0xFF800000> : vector<128xf32>
    %14 = vector.multi_reduction <maximumf>, %13, %cst_11 [1] : vector<128x4xf32> to vector<128xf32>
    %15 = vector.shape_cast %14 : vector<128xf32> to vector<128x1xf32>
    %16 = vector.broadcast %15 : vector<128x1xf32> to vector<128x4xf32>
    %17 = arith.subf %13, %16 : vector<128x4xf32>
    %18 = math.exp %17 : vector<128x4xf32>
    %cst_12 = arith.constant dense<0.000000e+00> : vector<128xf32>
    %19 = vector.multi_reduction <add>, %18, %cst_12 [1] : vector<128x4xf32> to vector<128xf32>
    %20 = vector.shape_cast %19 : vector<128xf32> to vector<128x1xf32>
    %21 = tpu.reciprocal %20 {approx = true} : vector<128x1xf32> -> vector<128x1xf32>
    %22 = vector.broadcast %21 : vector<128x1xf32> to vector<128x4xf32>
    %23 = arith.mulf %18, %22 : vector<128x4xf32>
    %24 = vector.extract_strided_slice %23 {offsets = [0, 0], sizes = [128, 1], strides = [1, 1]} : vector<128x4xf32> to vector<128x1xf32>
    %c0_13 = arith.constant 0 : index
    %c0_14 = arith.constant 0 : index
    %25 = vector.load %arg2[%c0_13, %c0_14] : memref<128x8xf32, #tpu.memory_space<vmem>>, vector<128x8xf32>
    %26 = vector.broadcast %24 : vector<128x1xf32> to vector<128x8xf32>
    %27 = arith.mulf %26, %25 : vector<128x8xf32>
    %28 = vector.extract_strided_slice %23 {offsets = [0, 1], sizes = [128, 1], strides = [1, 1]} : vector<128x4xf32> to vector<128x1xf32>
    %c0_15 = arith.constant 0 : index
    %c0_16 = arith.constant 0 : index
    %29 = vector.load %arg3[%c0_15, %c0_16] : memref<128x8xf32, #tpu.memory_space<vmem>>, vector<128x8xf32>
    %30 = vector.broadcast %28 : vector<128x1xf32> to vector<128x8xf32>
    %31 = arith.mulf %30, %29 : vector<128x8xf32>
    %32 = arith.addf %27, %31 : vector<128x8xf32>
    %33 = vector.extract_strided_slice %23 {offsets = [0, 2], sizes = [128, 1], strides = [1, 1]} : vector<128x4xf32> to vector<128x1xf32>
    %c0_17 = arith.constant 0 : index
    %c0_18 = arith.constant 0 : index
    %34 = vector.load %arg4[%c0_17, %c0_18] : memref<128x8xf32, #tpu.memory_space<vmem>>, vector<128x8xf32>
    %35 = vector.broadcast %33 : vector<128x1xf32> to vector<128x8xf32>
    %36 = arith.mulf %35, %34 : vector<128x8xf32>
    %37 = arith.addf %32, %36 : vector<128x8xf32>
    %38 = vector.extract_strided_slice %23 {offsets = [0, 3], sizes = [128, 1], strides = [1, 1]} : vector<128x4xf32> to vector<128x1xf32>
    %c0_19 = arith.constant 0 : index
    %c0_20 = arith.constant 0 : index
    %39 = vector.load %arg5[%c0_19, %c0_20] : memref<128x8xf32, #tpu.memory_space<vmem>>, vector<128x8xf32>
    %40 = vector.broadcast %38 : vector<128x1xf32> to vector<128x8xf32>
    %41 = arith.mulf %40, %39 : vector<128x8xf32>
    %42 = arith.addf %37, %41 : vector<128x8xf32>
    %43 = arith.truncf %42 : vector<128x8xf32> to vector<128x8xbf16>
    %c0_21 = arith.constant 0 : index
    %c0_22 = arith.constant 0 : index
    %44 = vector.load %arg10[%c0_21, %c0_22] : memref<8x16xbf16, #tpu.memory_space<vmem>>, vector<8x16xbf16>
    %cst_23 = arith.constant dense<0.000000e+00> : vector<128x16xf32>
    %45 = tpu.matmul %43, %44, %cst_23 {dimension_numbers = #tpu.dot_dimension_numbers<[1], [0], [0], [1], [0, 0, 1, 1], [], []>} : vector<128x8xbf16>, vector<8x16xbf16>, vector<128x16xf32> -> vector<128x16xf32>
    %c0_24 = arith.constant 0 : index
    %c0_25 = arith.constant 0 : index
    %46 = vector.load %arg11[%c0_24, %c0_25] : memref<1x16xf32, #tpu.memory_space<vmem>>, vector<1x16xf32>
    %47 = vector.broadcast %46 : vector<1x16xf32> to vector<128x16xf32>
    %48 = arith.addf %45, %47 : vector<128x16xf32>
    %cst_26 = arith.constant 0.000000e+00 : f32
    %49 = vector.broadcast %cst_26 : f32 to vector<128x16xf32>
    %50 = arith.maximumf %48, %49 : vector<128x16xf32>
    %c0_27 = arith.constant 0 : index
    %c0_28 = arith.constant 0 : index
    %51 = vector.load %arg12[%c0_27, %c0_28] : memref<128x16xf32, #tpu.memory_space<vmem>>, vector<128x16xf32>
    tpu.vector_store %arg12[%c0_27, %c0_28], %50 {strides = array<i32>} : memref<128x16xf32, #tpu.memory_space<vmem>>, vector<128x16xf32>,
    return
  }
  func.func @transform_0(%arg0: i32) -> (i32, i32) {
    %c0_i32 = arith.constant 0 : i32
    %c0_i32_0 = arith.constant 0 : i32
    return %arg0, %c0_i32 : i32, i32
  }
  func.func @transform_1(%arg0: i32) -> (i32, i32) {
    %c0_i32 = arith.constant 0 : i32
    %c0_i32_0 = arith.constant 0 : i32
    return %arg0, %c0_i32 : i32, i32
  }
  func.func @transform_2(%arg0: i32) -> (i32, i32) {
    %c0_i32 = arith.constant 0 : i32
    %c0_i32_0 = arith.constant 0 : i32
    return %arg0, %c0_i32 : i32, i32
  }
  func.func @transform_3(%arg0: i32) -> (i32, i32) {
    %c0_i32 = arith.constant 0 : i32
    %c0_i32_0 = arith.constant 0 : i32
    return %arg0, %c0_i32 : i32, i32
  }
  func.func @transform_4(%arg0: i32) -> (i32, i32) {
    %c0_i32 = arith.constant 0 : i32
    %c0_i32_0 = arith.constant 0 : i32
    return %arg0, %c0_i32 : i32, i32
  }
  func.func @transform_5(%arg0: i32) -> (i32, i32) {
    %c0_i32 = arith.constant 0 : i32
    %c0_i32_0 = arith.constant 0 : i32
    %c0_i32_1 = arith.constant 0 : i32
    return %c0_i32, %c0_i32_0 : i32, i32
  }
  func.func @transform_6(%arg0: i32) -> (i32, i32) {
    %c0_i32 = arith.constant 0 : i32
    %c0_i32_0 = arith.constant 0 : i32
    %c0_i32_1 = arith.constant 0 : i32
    return %c0_i32, %c0_i32_0 : i32, i32
  }
  func.func @transform_7(%arg0: i32) -> (i32, i32) {
    %c0_i32 = arith.constant 0 : i32
    %c0_i32_0 = arith.constant 0 : i32
    %c0_i32_1 = arith.constant 0 : i32
    return %c0_i32, %c0_i32_0 : i32, i32
  }
  func.func @transform_8(%arg0: i32) -> (i32, i32) {
    %c0_i32 = arith.constant 0 : i32
    %c0_i32_0 = arith.constant 0 : i32
    %c0_i32_1 = arith.constant 0 : i32
    return %c0_i32, %c0_i32_0 : i32, i32
  }
  func.func @transform_9(%arg0: i32) -> (i32, i32) {
    %c0_i32 = arith.constant 0 : i32
    %c0_i32_0 = arith.constant 0 : i32
    %c0_i32_1 = arith.constant 0 : i32
    return %c0_i32, %c0_i32_0 : i32, i32
  }
  func.func @transform_10(%arg0: i32) -> (i32, i32) {
    %c0_i32 = arith.constant 0 : i32
    %c0_i32_0 = arith.constant 0 : i32
    %c0_i32_1 = arith.constant 0 : i32
    return %c0_i32, %c0_i32_0 : i32, i32
  }
  func.func @transform_11(%arg0: i32) -> (i32, i32) {
    %c0_i32 = arith.constant 0 : i32
    %c0_i32_0 = arith.constant 0 : i32
    return %arg0, %c0_i32 : i32, i32
  }
}

</mosaic_0001>

<llo_original>
// kernel: conv_pillar_caf_forward.4
$region0: #{conv_pillar_caf_forward.4}
  #allocation0 [shape = 'u32[]', space=smem, size = 0x4, offset = 0x4, fixed_abs, tag = 'smem constant byte address 0x4 - core index']
  #allocation1 [shape = 'u32[144,128]{1,0:T(1,128)}', space=vmem, size = 0x12000, scoped, tag = 'internal scratch']
  %s0 = inlined_call_operand.hbm [shape: bf16[128,8], index: 0, kind: input, shape index: {}]
  %s1 = inlined_call_operand.hbm [shape: bf16[8,16], index: 1, kind: input, shape index: {}]
  %s2 = inlined_call_operand.hbm [shape: f32[1,16], index: 2, kind: input, shape index: {}]
  %s3 = inlined_call_operand.hbm [shape: f32[128,16], index: 3, kind: output, shape index: {}]
  %s4 = sld [smem:[#allocation0]]
  $region34: #{conv_pillar_caf_forward.4} parent=0
    _
  %s6 = ssub.s32 1, %s4
  %s7 = scalar_select 0, %s6, %s4
  $region1: #{conv_pillar_caf_forward.4} parent=0
    #allocation2 [shape = 'u8[32768]{0}', space=vmem, size = 0x8000, scoped, tag = 'input window, operand 0, single buffered']
    #allocation3 [shape = 's32[1]{0}', space=sflag, size = 0x4, scoped, tag = 'scoped memory for conv_pillar_caf_forward.4']
    #allocation4 [shape = 's32[1]{0}', space=sflag, size = 0x4, scoped, tag = 'scoped memory for conv_pillar_caf_forward.4']
    #allocation5 [shape = 'u8[2048]{0}', space=vmem, size = 0x800, scoped, tag = 'input window, operand 1, single buffered']
    #allocation6 [shape = 's32[1]{0}', space=sflag, size = 0x4, scoped, tag = 'scoped memory for conv_pillar_caf_forward.4']
    #allocation7 [shape = 'u8[512]{0}', space=vmem, size = 0x400, scoped, tag = 'input window, operand 2, single buffered']
    #allocation8 [shape = 'u8[65536]{0}', space=vmem, size = 0x10000, scoped, tag = 'output window, operand 0, single buffered']
    %8 = vsyncpa [#allocation3], 0
    %9 = vsyncpa [#allocation6], 0
    %10 = vsyncpa [#allocation4], 0
    // Predicated region
    $region2: #{conv_pillar_caf_forward.4} parent=1 // pred_check
      _
    $region3: #{conv_pillar_caf_forward.4} parent=1 // pred_check_branch
      %12 = sbr.rel (0) target = $region5
    $region4: #{conv_pillar_caf_forward.4} parent=1 // pred_region
      %s14 = ssub.s32 1024, 1024
      %15 = vsyncadd [#allocation3], %s14
      %s16 = sshll.u32 [#allocation2], 4
      %s17 = int_to_ptr.vmem [resolvable:$true] %s16
      %22 = dma.hbm_to_vmem [thread:$0]  %s0, 1024, %s17, [#allocation3], 64, 64, 4
    $region5: #{conv_pillar_caf_forward.4} parent=1 // pred_fallthru
      _
    // Predicated region
    $region6: #{conv_pillar_caf_forward.4} parent=1 // pred_check
      _
    $region7: #{conv_pillar_caf_forward.4} parent=1 // pred_check_branch
      %24 = sbr.rel (0) target = $region9
    $region8: #{conv_pillar_caf_forward.4} parent=1 // pred_region
      %s26 = ssub.s32 64, 64
      %27 = vsyncadd [#allocation6], %s26
      %s29 = sshll.u32 [#allocation5], 4
      %s30 = int_to_ptr.vmem [resolvable:$true] %s29
      %32 = dma.hbm_to_vmem [thread:$0]  %s1, 64, %s30, [#allocation6]
    $region9: #{conv_pillar_caf_forward.4} parent=1 // pred_fallthru
      _
    // Predicated region
    $region10: #{conv_pillar_caf_forward.4} parent=1 // pred_check
      _
    $region11: #{conv_pillar_caf_forward.4} parent=1 // pred_check_branch
      %34 = sbr.rel (0) target = $region13
    $region12: #{conv_pillar_caf_forward.4} parent=1 // pred_region
      %s36 = ssub.s32 16, 16
      %37 = vsyncadd [#allocation6], %s36
      %s39 = sshll.u32 [#allocation7], 4
      %s40 = int_to_ptr.vmem [resolvable:$true] %s39
      %42 = dma.hbm_to_vmem [thread:$0]  %s2, 16, %s40, [#allocation6]
    $region13: #{conv_pillar_caf_forward.4} parent=1 // pred_fallthru
      _
    // Predicated region
    $region14: #{conv_pillar_caf_forward.4} parent=1 // pred_check
      _
    $region15: #{conv_pillar_caf_forward.4} parent=1 // pred_check_branch
      %44 = sbr.rel (0) target = $region17
    $region16: #{conv_pillar_caf_forward.4} parent=1 // pred_region
      %45 = dma.done [#allocation3], 1024
    $region17: #{conv_pillar_caf_forward.4} parent=1 // pred_fallthru
      _
    // Predicated region
    $region18: #{conv_pillar_caf_forward.4} parent=1 // pred_check
      _
    $region19: #{conv_pillar_caf_forward.4} parent=1 // pred_check_branch
      %47 = sbr.rel (0) target = $region21
    $region20: #{conv_pillar_caf_forward.4} parent=1 // pred_region
      %48 = dma.done [#allocation6], 64
    $region21: #{conv_pillar_caf_forward.4} parent=1 // pred_fallthru
      _
    // Predicated region
    $region22: #{conv_pillar_caf_forward.4} parent=1 // pred_check
      _
    $region23: #{conv_pillar_caf_forward.4} parent=1 // pred_check_branch
      %50 = sbr.rel (0) target = $region25
    $region24: #{conv_pillar_caf_forward.4} parent=1 // pred_region
      %51 = dma.done [#allocation6], 16
    $region25: #{conv_pillar_caf_forward.4} parent=1 // pred_fallthru
      _
    %v53 = vld [vmem:[#allocation2] sm:$0xf]
    %v54 = vld [vmem:[#allocation2 + $0x4] sm:$0xf]
    %v55 = vld [vmem:[#allocation2 + $0x8] sm:$0xf]
    %v56 = vld [vmem:[#allocation2 + $0xc] sm:$0xf]
    %v57 = vld [vmem:[#allocation2 + $0x10] sm:$0xf]
    %v58 = vld [vmem:[#allocation2 + $0x14] sm:$0xf]
    %v59 = vld [vmem:[#allocation2 + $0x18] sm:$0xf]
    %v60 = vld [vmem:[#allocation2 + $0x1c] sm:$0xf]
    %v61 = vld [vmem:[#allocation2 + $0x20] sm:$0xf]
    %v62 = vld [vmem:[#allocation2 + $0x24] sm:$0xf]
    %v63 = vld [vmem:[#allocation2 + $0x28] sm:$0xf]
    %v64 = vld [vmem:[#allocation2 + $0x2c] sm:$0xf]
    %v65 = vld [vmem:[#allocation2 + $0x30] sm:$0xf]
    %v66 = vld [vmem:[#allocation2 + $0x34] sm:$0xf]
    %v67 = vld [vmem:[#allocation2 + $0x38] sm:$0xf]
    %v68 = vld [vmem:[#allocation2 + $0x3c] sm:$0xf]
    %v69 = vld [vmem:[#allocation5] sm:$0xf]
    %v70 = vld [vmem:[#allocation7] sm:$0x1]
    %v72 = vlaneseq
    %v73 = vshrl.u32 %v72, 7
    %v74 = vsub.s32 0, %v73
    %v75 = vrot.slane %v70, %v74
    %v93 = vunpack.c.l.b16 %v53
    %v94 = vunpack.c.l.b16 %v54
    %v95 = vunpack.c.l.b16 %v55
    %v96 = vunpack.c.l.b16 %v56
    %v97 = vunpack.c.l.b16 %v57
    %v98 = vunpack.c.l.b16 %v58
    %v99 = vunpack.c.l.b16 %v59
    %v100 = vunpack.c.l.b16 %v60
    %v101 = vunpack.c.l.b16 %v61
    %v102 = vunpack.c.l.b16 %v62
    %v103 = vunpack.c.l.b16 %v63
    %v104 = vunpack.c.l.b16 %v64
    %v105 = vunpack.c.l.b16 %v65
    %v106 = vunpack.c.l.b16 %v66
    %v107 = vunpack.c.l.b16 %v67
    %v108 = vunpack.c.l.b16 %v68
    %v109 = vpack.c.b16 %v94, %v93
    %v110 = vpack.c.b16 %v96, %v95
    %v111 = vpack.c.b16 %v98, %v97
    %v112 = vpack.c.b16 %v100, %v99
    %v113 = vpack.c.b16 %v102, %v101
    %v114 = vpack.c.b16 %v104, %v103
    %v115 = vpack.c.b16 %v106, %v105
    %v116 = vpack.c.b16 %v108, %v107
    %vm117 = vcmask 64512
    %v119 = vsel %vm117, %v109, 0
    %v122 = vsel %vm117, %v110, 0
    %v125 = vsel %vm117, %v111, 0
    %v128 = vsel %vm117, %v112, 0
    %v131 = vsel %vm117, %v113, 0
    %v134 = vsel %vm117, %v114, 0
    %v137 = vsel %vm117, %v115, 0
    %v140 = vsel %vm117, %v116, 0
    %vm142 = vcmask 1043456
    %v144 = vsel %vm142, %v69, 0
    %146 = vmatprep.subr.bf16.mxu0 0
    %147 = vmatpush1.bf16.msra.mxu0 %v144
    %148 = vmatprep.subr.bf16.mxu0 0
    %149 = vmatpush1.bf16.msra.mxu0 0
    %150 = vmatprep.subr.bf16.mxu0 0
    %151 = vmatpush1.bf16.msra.mxu0 0
    %152 = vmatprep.subr.bf16.mxu0 0
    %153 = vmatpush1.bf16.msra.mxu0 0
    %154 = vmatprep.subr.bf16.mxu0 0
    %155 = vmatpush1.bf16.msra.mxu0 0
    %156 = vmatprep.subr.bf16.mxu0 0
    %157 = vmatpush1.bf16.msra.mxu0 0
    %158 = vmatprep.subr.bf16.mxu0 0
    %159 = vmatpush1.bf16.msra.mxu0 0
    %160 = vmatprep.subr.bf16.mxu0 0
    %161 = vmatpush1.bf16.msra.mxu0 0
    %162 = vmatprep.subr.bf16.mxu0 0
    %163 = vmatpush1.bf16.msra.mxu0 0
    %164 = vmatprep.subr.bf16.mxu0 0
    %165 = vmatpush1.bf16.msra.mxu0 0
    %166 = vmatprep.subr.bf16.mxu0 0
    %167 = vmatpush1.bf16.msra.mxu0 0
    %168 = vmatprep.subr.bf16.mxu0 0
    %169 = vmatpush1.bf16.msra.mxu0 0
    %170 = vmatprep.subr.bf16.mxu0 0
    %171 = vmatpush1.bf16.msra.mxu0 0
    %172 = vmatprep.subr.bf16.mxu0 0
    %173 = vmatpush1.bf16.msra.mxu0 0
    %174 = vmatprep.subr.bf16.mxu0 0
    %175 = vmatpush1.bf16.msra.mxu0 0
    %176 = vmatprep.subr.bf16.mxu0 0
    %177 = vmatpush1.bf16.msra.mxu0 0
    %178 = vmatprep.mubr.bf16.mxu0 0
    %179 = vmatmul.mubr.bf16.gmra.mrb[0].mxu0 %v119
    %v180 = vpop.f32.mrb[0].mxu0
    %v181 = vadd.f32 %v75, %v180
    %v182 = vpop.f32.mrb[0].mxu0
    %v183 = vpop.f32.mrb[0].mxu0
    %v184 = vadd.f32 %v75, %v183
    %v185 = vpop.f32.mrb[0].mxu0
    %186 = vmatprep.mubr.bf16.mxu0 0
    %187 = vmatmul.mubr.bf16.gmra.mrb[0].mxu0 %v122
    %v188 = vpop.f32.mrb[0].mxu0
    %v189 = vadd.f32 %v75, %v188
    %v190 = vpop.f32.mrb[0].mxu0
    %v191 = vpop.f32.mrb[0].mxu0
    %v192 = vadd.f32 %v75, %v191
    %v193 = vpop.f32.mrb[0].mxu0
    %194 = vmatprep.mubr.bf16.mxu0 0
    %195 = vmatmul.mubr.bf16.gmra.mrb[0].mxu0 %v125
    %v196 = vpop.f32.mrb[0].mxu0
    %v197 = vadd.f32 %v75, %v196
    %v198 = vpop.f32.mrb[0].mxu0
    %v199 = vpop.f32.mrb[0].mxu0
    %v200 = vadd.f32 %v75, %v199
    %v201 = vpop.f32.mrb[0].mxu0
    %202 = vmatprep.mubr.bf16.mxu0 0
    %203 = vmatmul.mubr.bf16.gmra.mrb[0].mxu0 %v128
    %v204 = vpop.f32.mrb[0].mxu0
    %v205 = vadd.f32 %v75, %v204
    %v206 = vpop.f32.mrb[0].mxu0
    %v207 = vpop.f32.mrb[0].mxu0
    %v208 = vadd.f32 %v75, %v207
    %v209 = vpop.f32.mrb[0].mxu0
    %210 = vmatprep.mubr.bf16.mxu0 0
    %211 = vmatmul.mubr.bf16.gmra.mrb[0].mxu0 %v131
    %v212 = vpop.f32.mrb[0].mxu0
    %v213 = vadd.f32 %v75, %v212
    %v214 = vpop.f32.mrb[0].mxu0
    %v215 = vpop.f32.mrb[0].mxu0
    %v216 = vadd.f32 %v75, %v215
    %v217 = vpop.f32.mrb[0].mxu0
    %218 = vmatprep.mubr.bf16.mxu0 0
    %219 = vmatmul.mubr.bf16.gmra.mrb[0].mxu0 %v134
    %v220 = vpop.f32.mrb[0].mxu0
    %v221 = vadd.f32 %v75, %v220
    %v222 = vpop.f32.mrb[0].mxu0
    %v223 = vpop.f32.mrb[0].mxu0
    %v224 = vadd.f32 %v75, %v223
    %v225 = vpop.f32.mrb[0].mxu0
    %226 = vmatprep.mubr.bf16.mxu0 0
    %227 = vmatmul.mubr.bf16.gmra.mrb[0].mxu0 %v137
    %v228 = vpop.f32.mrb[0].mxu0
    %v229 = vadd.f32 %v75, %v228
    %v230 = vpop.f32.mrb[0].mxu0
    %v231 = vpop.f32.mrb[0].mxu0
    %v232 = vadd.f32 %v75, %v231
    %v233 = vpop.f32.mrb[0].mxu0
    %234 = vmatprep.mubr.bf16.mxu0 0
    %235 = vmatmul.mubr.bf16.gmra.mrb[0].mxu0 %v140
    %v236 = vpop.f32.mrb[0].mxu0
    %v237 = vadd.f32 %v75, %v236
    %v238 = vpop.f32.mrb[0].mxu0
    %v239 = vpop.f32.mrb[0].mxu0
    %v240 = vadd.f32 %v75, %v239
    %v241 = vpop.f32.mrb[0].mxu0
    %242 = vdwg.mxu0
    %v243 = vmax.f32 %v181, 0.0
    %v244 = vmax.f32 %v184, 0.0
    %v245 = vmax.f32 %v189, 0.0
    %v246 = vmax.f32 %v192, 0.0
    %v247 = vmax.f32 %v197, 0.0
    %v248 = vmax.f32 %v200, 0.0
    %v249 = vmax.f32 %v205, 0.0
    %v250 = vmax.f32 %v208, 0.0
    %v251 = vmax.f32 %v213, 0.0
    %v252 = vmax.f32 %v216, 0.0
    %v253 = vmax.f32 %v221, 0.0
    %v254 = vmax.f32 %v224, 0.0
    %v255 = vmax.f32 %v229, 0.0
    %v256 = vmax.f32 %v232, 0.0
    %v257 = vmax.f32 %v237, 0.0
    %v258 = vmax.f32 %v240, 0.0
    %vm259 = vcmask 130048
    %260 = vst.msk [vmem:[#allocation8] sm:$0xff] %vm259, %v243
    %261 = vst.msk [vmem:[#allocation8 + $0x8] sm:$0xff] %vm259, %v244
    %262 = vst.msk [vmem:[#allocation8 + $0x10] sm:$0xff] %vm259, %v245
    %263 = vst.msk [vmem:[#allocation8 + $0x18] sm:$0xff] %vm259, %v246
    %264 = vst.msk [vmem:[#allocation8 + $0x20] sm:$0xff] %vm259, %v247
    %265 = vst.msk [vmem:[#allocation8 + $0x28] sm:$0xff] %vm259, %v248
    %266 = vst.msk [vmem:[#allocation8 + $0x30] sm:$0xff] %vm259, %v249
    %267 = vst.msk [vmem:[#allocation8 + $0x38] sm:$0xff] %vm259, %v250
    %268 = vst.msk [vmem:[#allocation8 + $0x40] sm:$0xff] %vm259, %v251
    %269 = vst.msk [vmem:[#allocation8 + $0x48] sm:$0xff] %vm259, %v252
    %270 = vst.msk [vmem:[#allocation8 + $0x50] sm:$0xff] %vm259, %v253
    %271 = vst.msk [vmem:[#allocation8 + $0x58] sm:$0xff] %vm259, %v254
    %272 = vst.msk [vmem:[#allocation8 + $0x60] sm:$0xff] %vm259, %v255
    %273 = vst.msk [vmem:[#allocation8 + $0x68] sm:$0xff] %vm259, %v256
    %274 = vst.msk [vmem:[#allocation8 + $0x70] sm:$0xff] %vm259, %v257
    %275 = vst.msk [vmem:[#allocation8 + $0x78] sm:$0xff] %vm259, %v258
    // Predicated region
    $region26: #{conv_pillar_caf_forward.4} parent=1 // pred_check
      _
    $region27: #{conv_pillar_caf_forward.4} parent=1 // pred_check_branch
      %277 = sbr.rel (0) target = $region29
    $region28: #{conv_pillar_caf_forward.4} parent=1 // pred_region
      %s279 = ssub.s32 2048, 2048
      %280 = vsyncadd [#allocation4], %s279
      %s281 = sshll.u32 [#allocation8], 4
      %s282 = int_to_ptr.vmem [resolvable:$true] %s281
      %287 = dma.vmem_to_hbm [thread:$0]  %s282, 2048, %s3, [#allocation4], 128, 128, 8
    $region29: #{conv_pillar_caf_forward.4} parent=1 // pred_fallthru
      _
    // Predicated region
    $region30: #{conv_pillar_caf_forward.4} parent=1 // pred_check
      _
    $region31: #{conv_pillar_caf_forward.4} parent=1 // pred_check_branch
      %289 = sbr.rel (0) target = $region33
    $region32: #{conv_pillar_caf_forward.4} parent=1 // pred_region
      %290 = dma.done [#allocation4], 2048
    $region33: #{conv_pillar_caf_forward.4} parent=1 // pred_fallthru
      _
    %291 = vsyncpa [#allocation3], 1
    %292 = vsyncpa [#allocation6], 1
    %293 = vsyncpa [#allocation4], 1

// kernel: conv_pillar_caf_forward.6
$region0: #{conv_pillar_caf_forward.6}
  #allocation0 [shape = 'u32[]', space=smem, size = 0x4, offset = 0x4, fixed_abs, tag = 'smem constant byte address 0x4 - core index']
  #allocation1 [shape = 'u32[144,128]{1,0:T(1,128)}', space=vmem, size = 0x12000, scoped, tag = 'internal scratch']
  %s0 = inlined_call_operand.hbm [shape: bf16[128,6], index: 0, kind: input, shape index: {}]
  %s1 = inlined_call_operand.hbm [shape: bf16[6,8], index: 1, kind: input, shape index: {}]
  %s2 = inlined_call_operand.hbm [shape: f32[1,8], index: 2, kind: input, shape index: {}]
  %s3 = inlined_call_operand.hbm [shape: bf16[8,8], index: 3, kind: input, shape index: {}]
  %s4 = inlined_call_operand.hbm [shape: f32[1,8], index: 4, kind: input, shape index: {}]
  %s5 = inlined_call_operand.hbm [shape: f32[128,8], index: 5, kind: output, shape index: {}]
  %s6 = sld [smem:[#allocation0]]
  $region50: #{conv_pillar_caf_forward.6} parent=0
    _
  %s8 = ssub.s32 1, %s6
  %s9 = scalar_select 0, %s8, %s6
  $region1: #{conv_pillar_caf_forward.6} parent=0
    #allocation2 [shape = 'u8[32768]{0}', space=vmem, size = 0x8000, scoped, tag = 'input window, operand 0, single buffered']
    #allocation3 [shape = 's32[1]{0}', space=sflag, size = 0x4, scoped, tag = 'scoped memory for conv_pillar_caf_forward.6']
    #allocation4 [shape = 's32[1]{0}', space=sflag, size = 0x4, scoped, tag = 'scoped memory for conv_pillar_caf_forward.6']
    #allocation5 [shape = 'u8[2048]{0}', space=vmem, size = 0x800, scoped, tag = 'input window, operand 1, single buffered']
    #allocation6 [shape = 's32[1]{0}', space=sflag, size = 0x4, scoped, tag = 'scoped memory for conv_pillar_caf_forward.6']
    #allocation7 [shape = 'u8[512]{0}', space=vmem, size = 0x400, scoped, tag = 'input window, operand 2, single buffered']
    #allocation8 [shape = 'u8[2048]{0}', space=vmem, size = 0x800, scoped, tag = 'input window, operand 3, single buffered']
    #allocation9 [shape = 's32[1]{0}', space=sflag, size = 0x4, scoped, tag = 'scoped memory for conv_pillar_caf_forward.6']
    #allocation10 [shape = 'u8[512]{0}', space=vmem, size = 0x400, scoped, tag = 'input window, operand 4, single buffered']
    #allocation11 [shape = 'u8[65536]{0}', space=vmem, size = 0x10000, scoped, tag = 'output window, operand 0, single buffered']
    %10 = vsyncpa [#allocation3], 0
    %11 = vsyncpa [#allocation6], 0
    %12 = vsyncpa [#allocation9], 0
    %13 = vsyncpa [#allocation4], 0
    // Predicated region
    $region2: #{conv_pillar_caf_forward.6} parent=1 // pred_check
      _
    $region3: #{conv_pillar_caf_forward.6} parent=1 // pred_check_branch
      %15 = sbr.rel (0) target = $region5
    $region4: #{conv_pillar_caf_forward.6} parent=1 // pred_region
      %s17 = ssub.s32 1024, 1024
      %18 = vsyncadd [#allocation3], %s17
      %s19 = sshll.u32 [#allocation2], 4
      %s20 = int_to_ptr.vmem [resolvable:$true] %s19
      %25 = dma.hbm_to_vmem [thread:$0]  %s0, 1024, %s20, [#allocation3], 64, 64, 4
    $region5: #{conv_pillar_caf_forward.6} parent=1 // pred_fallthru
      _
    // Predicated region
    $region6: #{conv_pillar_caf_forward.6} parent=1 // pred_check
      _
    $region7: #{conv_pillar_caf_forward.6} parent=1 // pred_check_branch
      %27 = sbr.rel (0) target = $region9
    $region8: #{conv_pillar_caf_forward.6} parent=1 // pred_region
      %s29 = ssub.s32 64, 64
      %30 = vsyncadd [#allocation6], %s29
      %s32 = sshll.u32 [#allocation5], 4
      %s33 = int_to_ptr.vmem [resolvable:$true] %s32
      %35 = dma.hbm_to_vmem [thread:$0]  %s1, 64, %s33, [#allocation6]
    $region9: #{conv_pillar_caf_forward.6} parent=1 // pred_fallthru
      _
    // Predicated region
    $region10: #{conv_pillar_caf_forward.6} parent=1 // pred_check
      _
    $region11: #{conv_pillar_caf_forward.6} parent=1 // pred_check_branch
      %37 = sbr.rel (0) target = $region13
    $region12: #{conv_pillar_caf_forward.6} parent=1 // pred_region
      %s39 = ssub.s32 16, 16
      %40 = vsyncadd [#allocation6], %s39
      %s42 = sshll.u32 [#allocation7], 4
      %s43 = int_to_ptr.vmem [resolvable:$true] %s42
      %45 = dma.hbm_to_vmem [thread:$0]  %s2, 16, %s43, [#allocation6]
    $region13: #{conv_pillar_caf_forward.6} parent=1 // pred_fallthru
      _
    // Predicated region
    $region14: #{conv_pillar_caf_forward.6} parent=1 // pred_check
      _
    $region15: #{conv_pillar_caf_forward.6} parent=1 // pred_check_branch
      %47 = sbr.rel (0) target = $region17
    $region16: #{conv_pillar_caf_forward.6} parent=1 // pred_region
      %s49 = ssub.s32 64, 64
      %50 = vsyncadd [#allocation9], %s49
      %s52 = sshll.u32 [#allocation8], 4
      %s53 = int_to_ptr.vmem [resolvable:$true] %s52
      %55 = dma.hbm_to_vmem [thread:$0]  %s3, 64, %s53, [#allocation9]
    $region17: #{conv_pillar_caf_forward.6} parent=1 // pred_fallthru
      _
    // Predicated region
    $region18: #{conv_pillar_caf_forward.6} parent=1 // pred_check
      _
    $region19: #{conv_pillar_caf_forward.6} parent=1 // pred_check_branch
      %57 = sbr.rel (0) target = $region21
    $region20: #{conv_pillar_caf_forward.6} parent=1 // pred_region
      %s59 = ssub.s32 16, 16
      %60 = vsyncadd [#allocation9], %s59
      %s62 = sshll.u32 [#allocation10], 4
      %s63 = int_to_ptr.vmem [resolvable:$true] %s62
      %65 = dma.hbm_to_vmem [thread:$0]  %s4, 16, %s63, [#allocation9]
    $region21: #{conv_pillar_caf_forward.6} parent=1 // pred_fallthru
      _
    // Predicated region
    $region22: #{conv_pillar_caf_forward.6} parent=1 // pred_check
      _
    $region23: #{conv_pillar_caf_forward.6} parent=1 // pred_check_branch
      %67 = sbr.rel (0) target = $region25
    $region24: #{conv_pillar_caf_forward.6} parent=1 // pred_region
      %68 = dma.done [#allocation3], 1024
    $region25: #{conv_pillar_caf_forward.6} parent=1 // pred_fallthru
      _
    // Predicated region
    $region26: #{conv_pillar_caf_forward.6} parent=1 // pred_check
      _
    $region27: #{conv_pillar_caf_forward.6} parent=1 // pred_check_branch
      %70 = sbr.rel (0) target = $region29
    $region28: #{conv_pillar_caf_forward.6} parent=1 // pred_region
      %71 = dma.done [#allocation6], 64
    $region29: #{conv_pillar_caf_forward.6} parent=1 // pred_fallthru
      _
    // Predicated region
    $region30: #{conv_pillar_caf_forward.6} parent=1 // pred_check
      _
    $region31: #{conv_pillar_caf_forward.6} parent=1 // pred_check_branch
      %73 = sbr.rel (0) target = $region33
    $region32: #{conv_pillar_caf_forward.6} parent=1 // pred_region
      %74 = dma.done [#allocation6], 16
    $region33: #{conv_pillar_caf_forward.6} parent=1 // pred_fallthru
      _
    // Predicated region
    $region34: #{conv_pillar_caf_forward.6} parent=1 // pred_check
      _
    $region35: #{conv_pillar_caf_forward.6} parent=1 // pred_check_branch
      %76 = sbr.rel (0) target = $region37
    $region36: #{conv_pillar_caf_forward.6} parent=1 // pred_region
      %77 = dma.done [#allocation9], 64
    $region37: #{conv_pillar_caf_forward.6} parent=1 // pred_fallthru
      _
    // Predicated region
    $region38: #{conv_pillar_caf_forward.6} parent=1 // pred_check
      _
    $region39: #{conv_pillar_caf_forward.6} parent=1 // pred_check_branch
      %79 = sbr.rel (0) target = $region41
    $region40: #{conv_pillar_caf_forward.6} parent=1 // pred_region
      %80 = dma.done [#allocation9], 16
    $region41: #{conv_pillar_caf_forward.6} parent=1 // pred_fallthru
      _
    %v82 = vld [vmem:[#allocation2] sm:$0xf]
    %v83 = vld [vmem:[#allocation2 + $0x4] sm:$0xf]
    %v84 = vld [vmem:[#allocation2 + $0x8] sm:$0xf]
    %v85 = vld [vmem:[#allocation2 + $0xc] sm:$0xf]
    %v86 = vld [vmem:[#allocation2 + $0x10] sm:$0xf]
    %v87 = vld [vmem:[#allocation2 + $0x14] sm:$0xf]
    %v88 = vld [vmem:[#allocation2 + $0x18] sm:$0xf]
    %v89 = vld [vmem:[#allocation2 + $0x1c] sm:$0xf]
    %v90 = vld [vmem:[#allocation2 + $0x20] sm:$0xf]
    %v91 = vld [vmem:[#allocation2 + $0x24] sm:$0xf]
    %v92 = vld [vmem:[#allocation2 + $0x28] sm:$0xf]
    %v93 = vld [vmem:[#allocation2 + $0x2c] sm:$0xf]
    %v94 = vld [vmem:[#allocation2 + $0x30] sm:$0xf]
    %v95 = vld [vmem:[#allocation2 + $0x34] sm:$0xf]
    %v96 = vld [vmem:[#allocation2 + $0x38] sm:$0xf]
    %v97 = vld [vmem:[#allocation2 + $0x3c] sm:$0xf]
    %v98 = vld [vmem:[#allocation5] sm:$0x7]
    %v99 = vld [vmem:[#allocation7] sm:$0x1]
    %v101 = vlaneseq
    %v102 = vshrl.u32 %v101, 7
    %v103 = vsub.s32 0, %v102
    %v104 = vrot.slane %v99, %v103
    %v122 = vunpack.c.l.b16 %v82
    %v123 = vunpack.c.l.b16 %v83
    %v124 = vunpack.c.l.b16 %v84
    %v125 = vunpack.c.l.b16 %v85
    %v126 = vunpack.c.l.b16 %v86
    %v127 = vunpack.c.l.b16 %v87
    %v128 = vunpack.c.l.b16 %v88
    %v129 = vunpack.c.l.b16 %v89
    %v130 = vunpack.c.l.b16 %v90
    %v131 = vunpack.c.l.b16 %v91
    %v132 = vunpack.c.l.b16 %v92
    %v133 = vunpack.c.l.b16 %v93
    %v134 = vunpack.c.l.b16 %v94
    %v135 = vunpack.c.l.b16 %v95
    %v136 = vunpack.c.l.b16 %v96
    %v137 = vunpack.c.l.b16 %v97
    %v138 = vpack.c.b16 %v123, %v122
    %v139 = vpack.c.b16 %v125, %v124
    %v140 = vpack.c.b16 %v127, %v126
    %v141 = vpack.c.b16 %v129, %v128
    %v142 = vpack.c.b16 %v131, %v130
    %v143 = vpack.c.b16 %v133, %v132
    %v144 = vpack.c.b16 %v135, %v134
    %v145 = vpack.c.b16 %v137, %v136
    %vm146 = vcmask 48128
    %v148 = vsel %vm146, %v138, 0
    %v151 = vsel %vm146, %v139, 0
    %v154 = vsel %vm146, %v140, 0
    %v157 = vsel %vm146, %v141, 0
    %v160 = vsel %vm146, %v142, 0
    %v163 = vsel %vm146, %v143, 0
    %v166 = vsel %vm146, %v144, 0
    %v169 = vsel %vm146, %v145, 0
    %vm171 = vcmask 1042432
    %v173 = vsel %vm171, %v98, 0
    %175 = vmatprep.subr.bf16.mxu0 0
    %176 = vmatpush1.bf16.msra.mxu0 %v173
    %177 = vmatprep.subr.bf16.mxu0 0
    %178 = vmatpush1.bf16.msra.mxu0 0
    %179 = vmatprep.subr.bf16.mxu0 0
    %180 = vmatpush1.bf16.msra.mxu0 0
    %181 = vmatprep.subr.bf16.mxu0 0
    %182 = vmatpush1.bf16.msra.mxu0 0
    %183 = vmatprep.subr.bf16.mxu0 0
    %184 = vmatpush1.bf16.msra.mxu0 0
    %185 = vmatprep.subr.bf16.mxu0 0
    %186 = vmatpush1.bf16.msra.mxu0 0
    %187 = vmatprep.subr.bf16.mxu0 0
    %188 = vmatpush1.bf16.msra.mxu0 0
    %189 = vmatprep.subr.bf16.mxu0 0
    %190 = vmatpush1.bf16.msra.mxu0 0
    %191 = vmatprep.subr.bf16.mxu0 0
    %192 = vmatpush1.bf16.msra.mxu0 0
    %193 = vmatprep.subr.bf16.mxu0 0
    %194 = vmatpush1.bf16.msra.mxu0 0
    %195 = vmatprep.subr.bf16.mxu0 0
    %196 = vmatpush1.bf16.msra.mxu0 0
    %197 = vmatprep.subr.bf16.mxu0 0
    %198 = vmatpush1.bf16.msra.mxu0 0
    %199 = vmatprep.subr.bf16.mxu0 0
    %200 = vmatpush1.bf16.msra.mxu0 0
    %201 = vmatprep.subr.bf16.mxu0 0
    %202 = vmatpush1.bf16.msra.mxu0 0
    %203 = vmatprep.subr.bf16.mxu0 0
    %204 = vmatpush1.bf16.msra.mxu0 0
    %205 = vmatprep.subr.bf16.mxu0 0
    %206 = vmatpush1.bf16.msra.mxu0 0
    %207 = vmatprep.mubr.bf16.mxu0 0
    %208 = vmatmul.mubr.bf16.gmra.mrb[0].mxu0 %v148
    %v209 = vpop.f32.mrb[0].mxu0
    %v210 = vadd.f32 %v104, %v209
    %v211 = vpop.f32.mrb[0].mxu0
    %v212 = vpop.f32.mrb[0].mxu0
    %v213 = vadd.f32 %v104, %v212
    %v214 = vpop.f32.mrb[0].mxu0
    %215 = vmatprep.mubr.bf16.mxu0 0
    %216 = vmatmul.mubr.bf16.gmra.mrb[0].mxu0 %v151
    %v217 = vpop.f32.mrb[0].mxu0
    %v218 = vadd.f32 %v104, %v217
    %v219 = vpop.f32.mrb[0].mxu0
    %v220 = vpop.f32.mrb[0].mxu0
    %v221 = vadd.f32 %v104, %v220
    %v222 = vpop.f32.mrb[0].mxu0
    %223 = vmatprep.mubr.bf16.mxu0 0
    %224 = vmatmul.mubr.bf16.gmra.mrb[0].mxu0 %v154
    %v225 = vpop.f32.mrb[0].mxu0
    %v226 = vadd.f32 %v104, %v225
    %v227 = vpop.f32.mrb[0].mxu0
    %v228 = vpop.f32.mrb[0].mxu0
    %v229 = vadd.f32 %v104, %v228
    %v230 = vpop.f32.mrb[0].mxu0
    %231 = vmatprep.mubr.bf16.mxu0 0
    %232 = vmatmul.mubr.bf16.gmra.mrb[0].mxu0 %v157
    %v233 = vpop.f32.mrb[0].mxu0
    %v234 = vadd.f32 %v104, %v233
    %v235 = vpop.f32.mrb[0].mxu0
    %v236 = vpop.f32.mrb[0].mxu0
    %v237 = vadd.f32 %v104, %v236
    %v238 = vpop.f32.mrb[0].mxu0
    %239 = vmatprep.mubr.bf16.mxu0 0
    %240 = vmatmul.mubr.bf16.gmra.mrb[0].mxu0 %v160
    %v241 = vpop.f32.mrb[0].mxu0
    %v242 = vadd.f32 %v104, %v241
    %v243 = vpop.f32.mrb[0].mxu0
    %v244 = vpop.f32.mrb[0].mxu0
    %v245 = vadd.f32 %v104, %v244
    %v246 = vpop.f32.mrb[0].mxu0
    %247 = vmatprep.mubr.bf16.mxu0 0
    %248 = vmatmul.mubr.bf16.gmra.mrb[0].mxu0 %v163
    %v249 = vpop.f32.mrb[0].mxu0
    %v250 = vadd.f32 %v104, %v249
    %v251 = vpop.f32.mrb[0].mxu0
    %v252 = vpop.f32.mrb[0].mxu0
    %v253 = vadd.f32 %v104, %v252
    %v254 = vpop.f32.mrb[0].mxu0
    %255 = vmatprep.mubr.bf16.mxu0 0
    %256 = vmatmul.mubr.bf16.gmra.mrb[0].mxu0 %v166
    %v257 = vpop.f32.mrb[0].mxu0
    %v258 = vadd.f32 %v104, %v257
    %v259 = vpop.f32.mrb[0].mxu0
    %v260 = vpop.f32.mrb[0].mxu0
    %v261 = vadd.f32 %v104, %v260
    %v262 = vpop.f32.mrb[0].mxu0
    %263 = vmatprep.mubr.bf16.mxu0 0
    %264 = vmatmul.mubr.bf16.gmra.mrb[0].mxu0 %v169
    %v265 = vpop.f32.mrb[0].mxu0
    %v266 = vadd.f32 %v104, %v265
    %v267 = vpop.f32.mrb[0].mxu0
    %v268 = vpop.f32.mrb[0].mxu0
    %v269 = vadd.f32 %v104, %v268
    %v270 = vpop.f32.mrb[0].mxu0
    %271 = vdwg.mxu0
    %v272 = vmax.f32 %v210, 0.0
    %v273 = vmax.f32 %v213, 0.0
    %v274 = vmax.f32 %v218, 0.0
    %v275 = vmax.f32 %v221, 0.0
    %v276 = vmax.f32 %v226, 0.0
    %v277 = vmax.f32 %v229, 0.0
    %v278 = vmax.f32 %v234, 0.0
    %v279 = vmax.f32 %v237, 0.0
    %v280 = vmax.f32 %v242, 0.0
    %v281 = vmax.f32 %v245, 0.0
    %v282 = vmax.f32 %v250, 0.0
    %v283 = vmax.f32 %v253, 0.0
    %v284 = vmax.f32 %v258, 0.0
    %v285 = vmax.f32 %v261, 0.0
    %v286 = vmax.f32 %v266, 0.0
    %v287 = vmax.f32 %v269, 0.0
    %v288 = vpack.c.bf16 %v273, %v272
    %v289 = vpack.c.bf16 %v275, %v274
    %v290 = vpack.c.bf16 %v277, %v276
    %v291 = vpack.c.bf16 %v279, %v278
    %v292 = vpack.c.bf16 %v281, %v280
    %v293 = vpack.c.bf16 %v283, %v282
    %v294 = vpack.c.bf16 %v285, %v284
    %v295 = vpack.c.bf16 %v287, %v286
    %v296 = vld [vmem:[#allocation8] sm:$0xf]
    %v297 = vld [vmem:[#allocation10] sm:$0x1]
    %v299 = vlaneseq
    %v300 = vshrl.u32 %v299, 7
    %v301 = vsub.s32 0, %v300
    %v302 = vrot.slane %v297, %v301
    %vm304 = vcmask 64512
    %v306 = vsel %vm304, %v288, 0
    %v309 = vsel %vm304, %v289, 0
    %v312 = vsel %vm304, %v290, 0
    %v315 = vsel %vm304, %v291, 0
    %v318 = vsel %vm304, %v292, 0
    %v321 = vsel %vm304, %v293, 0
    %v324 = vsel %vm304, %v294, 0
    %v327 = vsel %vm304, %v295, 0
    %vm329 = vcmask 1043456
    %v331 = vsel %vm329, %v296, 0
    %333 = vmatprep.subr.bf16.mxu0 0
    %334 = vmatpush1.bf16.msra.mxu0 %v331
    %335 = vmatprep.subr.bf16.mxu0 0
    %336 = vmatpush1.bf16.msra.mxu0 0
    %337 = vmatprep.subr.bf16.mxu0 0
    %338 = vmatpush1.bf16.msra.mxu0 0
    %339 = vmatprep.subr.bf16.mxu0 0
    %340 = vmatpush1.bf16.msra.mxu0 0
    %341 = vmatprep.subr.bf16.mxu0 0
    %342 = vmatpush1.bf16.msra.mxu0 0
    %343 = vmatprep.subr.bf16.mxu0 0
    %344 = vmatpush1.bf16.msra.mxu0 0
    %345 = vmatprep.subr.bf16.mxu0 0
    %346 = vmatpush1.bf16.msra.mxu0 0
    %347 = vmatprep.subr.bf16.mxu0 0
    %348 = vmatpush1.bf16.msra.mxu0 0
    %349 = vmatprep.subr.bf16.mxu0 0
    %350 = vmatpush1.bf16.msra.mxu0 0
    %351 = vmatprep.subr.bf16.mxu0 0
    %352 = vmatpush1.bf16.msra.mxu0 0
    %353 = vmatprep.subr.bf16.mxu0 0
    %354 = vmatpush1.bf16.msra.mxu0 0
    %355 = vmatprep.subr.bf16.mxu0 0
    %356 = vmatpush1.bf16.msra.mxu0 0
    %357 = vmatprep.subr.bf16.mxu0 0
    %358 = vmatpush1.bf16.msra.mxu0 0
    %359 = vmatprep.subr.bf16.mxu0 0
    %360 = vmatpush1.bf16.msra.mxu0 0
    %361 = vmatprep.subr.bf16.mxu0 0
    %362 = vmatpush1.bf16.msra.mxu0 0
    %363 = vmatprep.subr.bf16.mxu0 0
    %364 = vmatpush1.bf16.msra.mxu0 0
    %365 = vmatprep.mubr.bf16.mxu0 0
    %366 = vmatmul.mubr.bf16.gmra.mrb[0].mxu0 %v306
    %v367 = vpop.f32.mrb[0].mxu0
    %v368 = vadd.f32 %v302, %v367
    %v369 = vpop.f32.mrb[0].mxu0
    %v370 = vpop.f32.mrb[0].mxu0
    %v371 = vadd.f32 %v302, %v370
    %v372 = vpop.f32.mrb[0].mxu0
    %373 = vmatprep.mubr.bf16.mxu0 0
    %374 = vmatmul.mubr.bf16.gmra.mrb[0].mxu0 %v309
    %v375 = vpop.f32.mrb[0].mxu0
    %v376 = vadd.f32 %v302, %v375
    %v377 = vpop.f32.mrb[0].mxu0
    %v378 = vpop.f32.mrb[0].mxu0
    %v379 = vadd.f32 %v302, %v378
    %v380 = vpop.f32.mrb[0].mxu0
    %381 = vmatprep.mubr.bf16.mxu0 0
    %382 = vmatmul.mubr.bf16.gmra.mrb[0].mxu0 %v312
    %v383 = vpop.f32.mrb[0].mxu0
    %v384 = vadd.f32 %v302, %v383
    %v385 = vpop.f32.mrb[0].mxu0
    %v386 = vpop.f32.mrb[0].mxu0
    %v387 = vadd.f32 %v302, %v386
    %v388 = vpop.f32.mrb[0].mxu0
    %389 = vmatprep.mubr.bf16.mxu0 0
    %390 = vmatmul.mubr.bf16.gmra.mrb[0].mxu0 %v315
    %v391 = vpop.f32.mrb[0].mxu0
    %v392 = vadd.f32 %v302, %v391
    %v393 = vpop.f32.mrb[0].mxu0
    %v394 = vpop.f32.mrb[0].mxu0
    %v395 = vadd.f32 %v302, %v394
    %v396 = vpop.f32.mrb[0].mxu0
    %397 = vmatprep.mubr.bf16.mxu0 0
    %398 = vmatmul.mubr.bf16.gmra.mrb[0].mxu0 %v318
    %v399 = vpop.f32.mrb[0].mxu0
    %v400 = vadd.f32 %v302, %v399
    %v401 = vpop.f32.mrb[0].mxu0
    %v402 = vpop.f32.mrb[0].mxu0
    %v403 = vadd.f32 %v302, %v402
    %v404 = vpop.f32.mrb[0].mxu0
    %405 = vmatprep.mubr.bf16.mxu0 0
    %406 = vmatmul.mubr.bf16.gmra.mrb[0].mxu0 %v321
    %v407 = vpop.f32.mrb[0].mxu0
    %v408 = vadd.f32 %v302, %v407
    %v409 = vpop.f32.mrb[0].mxu0
    %v410 = vpop.f32.mrb[0].mxu0
    %v411 = vadd.f32 %v302, %v410
    %v412 = vpop.f32.mrb[0].mxu0
    %413 = vmatprep.mubr.bf16.mxu0 0
    %414 = vmatmul.mubr.bf16.gmra.mrb[0].mxu0 %v324
    %v415 = vpop.f32.mrb[0].mxu0
    %v416 = vadd.f32 %v302, %v415
    %v417 = vpop.f32.mrb[0].mxu0
    %v418 = vpop.f32.mrb[0].mxu0
    %v419 = vadd.f32 %v302, %v418
    %v420 = vpop.f32.mrb[0].mxu0
    %421 = vmatprep.mubr.bf16.mxu0 0
    %422 = vmatmul.mubr.bf16.gmra.mrb[0].mxu0 %v327
    %v423 = vpop.f32.mrb[0].mxu0
    %v424 = vadd.f32 %v302, %v423
    %v425 = vpop.f32.mrb[0].mxu0
    %v426 = vpop.f32.mrb[0].mxu0
    %v427 = vadd.f32 %v302, %v426
    %v428 = vpop.f32.mrb[0].mxu0
    %429 = vdwg.mxu0
    %430 = vst.msk [vmem:[#allocation11] sm:$0xff] %vm304, %v368
    %431 = vst.msk [vmem:[#allocation11 + $0x8] sm:$0xff] %vm304, %v371
    %432 = vst.msk [vmem:[#allocation11 + $0x10] sm:$0xff] %vm304, %v376
    %433 = vst.msk [vmem:[#allocation11 + $0x18] sm:$0xff] %vm304, %v379
    %434 = vst.msk [vmem:[#allocation11 + $0x20] sm:$0xff] %vm304, %v384
    %435 = vst.msk [vmem:[#allocation11 + $0x28] sm:$0xff] %vm304, %v387
    %436 = vst.msk [vmem:[#allocation11 + $0x30] sm:$0xff] %vm304, %v392
    %437 = vst.msk [vmem:[#allocation11 + $0x38] sm:$0xff] %vm304, %v395
    %438 = vst.msk [vmem:[#allocation11 + $0x40] sm:$0xff] %vm304, %v400
    %439 = vst.msk [vmem:[#allocation11 + $0x48] sm:$0xff] %vm304, %v403
    %440 = vst.msk [vmem:[#allocation11 + $0x50] sm:$0xff] %vm304, %v408
    %441 = vst.msk [vmem:[#allocation11 + $0x58] sm:$0xff] %vm304, %v411
    %442 = vst.msk [vmem:[#allocation11 + $0x60] sm:$0xff] %vm304, %v416
    %443 = vst.msk [vmem:[#allocation11 + $0x68] sm:$0xff] %vm304, %v419
    %444 = vst.msk [vmem:[#allocation11 + $0x70] sm:$0xff] %vm304, %v424
    %445 = vst.msk [vmem:[#allocation11 + $0x78] sm:$0xff] %vm304, %v427
    // Predicated region
    $region42: #{conv_pillar_caf_forward.6} parent=1 // pred_check
      _
    $region43: #{conv_pillar_caf_forward.6} parent=1 // pred_check_branch
      %447 = sbr.rel (0) target = $region45
    $region44: #{conv_pillar_caf_forward.6} parent=1 // pred_region
      %s449 = ssub.s32 2048, 2048
      %450 = vsyncadd [#allocation4], %s449
      %s451 = sshll.u32 [#allocation11], 4
      %s452 = int_to_ptr.vmem [resolvable:$true] %s451
      %457 = dma.vmem_to_hbm [thread:$0]  %s452, 2048, %s5, [#allocation4], 128, 128, 8
    $region45: #{conv_pillar_caf_forward.6} parent=1 // pred_fallthru
      _
    // Predicated region
    $region46: #{conv_pillar_caf_forward.6} parent=1 // pred_check
      _
    $region47: #{conv_pillar_caf_forward.6} parent=1 // pred_check_branch
      %459 = sbr.rel (0) target = $region49
    $region48: #{conv_pillar_caf_forward.6} parent=1 // pred_region
      %460 = dma.done [#allocation4], 2048
    $region49: #{conv_pillar_caf_forward.6} parent=1 // pred_fallthru
      _
    %461 = vsyncpa [#allocation3], 1
    %462 = vsyncpa [#allocation6], 1
    %463 = vsyncpa [#allocation9], 1
    %464 = vsyncpa [#allocation4], 1

// kernel: conv_pillar_caf_forward.5
$region0: #{conv_pillar_caf_forward.5}
  #allocation0 [shape = 'u32[]', space=smem, size = 0x4, offset = 0x4, fixed_abs, tag = 'smem constant byte address 0x4 - core index']
  #allocation1 [shape = 'u32[144,128]{1,0:T(1,128)}', space=vmem, size = 0x12000, scoped, tag = 'internal scratch']
  #allocation2 [shape = 'f32[17,17,8]{2,1,0:T(8,128)}', space=vmem, size = 0x33000, scoped, tag = 'scratch operand']
  %s0 = inlined_call_operand.hbm [shape: f32[3,2,8,8,8], index: 0, kind: input, shape index: {}]
  %s1 = inlined_call_operand.hbm [shape: bf16[3,9,8,8], index: 1, kind: input, shape index: {}]
  %s2 = inlined_call_operand.hbm [shape: f32[3,1,8], index: 2, kind: input, shape index: {}]
  %s3 = inlined_call_operand.hbm [shape: bf16[3,9,8,8], index: 3, kind: input, shape index: {}]
  %s4 = inlined_call_operand.hbm [shape: f32[3,1,8], index: 4, kind: input, shape index: {}]
  %s5 = inlined_call_operand.hbm [shape: f32[3,2,8,8,8], index: 5, kind: output, shape index: {}]
  %s6 = sld [smem:[#allocation0]]
  $region73: #{conv_pillar_caf_forward.5} parent=0
    _
  %s8 = ssub.s32 1, %s6
  %s9 = scalar_select 0, %s8, %s6
  $region1: #{conv_pillar_caf_forward.5} parent=0
    #allocation3 [shape = 'u8[65536]{0}', space=vmem, size = 0x10000, scoped, tag = 'input window, operand 0']
    #allocation4 [shape = 's32[2]{0}', space=sflag, size = 0x8, scoped, tag = 'scoped memory for conv_pillar_caf_forward.5']
    #allocation5 [shape = 's32[2]{0}', space=sflag, size = 0x8, scoped, tag = 'scoped memory for conv_pillar_caf_forward.5']
    #allocation6 [shape = 'u8[36864]{0}', space=vmem, size = 0x9000, scoped, tag = 'input window, operand 1']
    #allocation7 [shape = 's32[2]{0}', space=sflag, size = 0x8, scoped, tag = 'scoped memory for conv_pillar_caf_forward.5']
    #allocation8 [shape = 'u8[1024]{0}', space=vmem, size = 0x400, scoped, tag = 'input window, operand 2']
    #allocation9 [shape = 'u8[36864]{0}', space=vmem, size = 0x9000, scoped, tag = 'input window, operand 3']
    #allocation10 [shape = 's32[2]{0}', space=sflag, size = 0x8, scoped, tag = 'scoped memory for conv_pillar_caf_forward.5']
    #allocation11 [shape = 'u8[1024]{0}', space=vmem, size = 0x400, scoped, tag = 'input window, operand 4']
    #allocation12 [shape = 'u8[65536]{0}', space=vmem, size = 0x10000, scoped, tag = 'output window, operand 0']
    %10 = vsyncpa [#allocation4], 0
    %s11 = scalar_lea.sflag [#allocation4], 1
    %12 = vsyncpa %s11, 0
    %13 = vsyncpa [#allocation7], 0
    %s14 = scalar_lea.sflag [#allocation7], 1
    %15 = vsyncpa %s14, 0
    %16 = vsyncpa [#allocation10], 0
    %s17 = scalar_lea.sflag [#allocation10], 1
    %18 = vsyncpa %s17, 0
    %19 = vsyncpa [#allocation5], 0
    %s20 = scalar_lea.sflag [#allocation5], 1
    %21 = vsyncpa %s20, 0
    loop: start=0, step=1, limit=8
    $region2: #{conv_pillar_caf_forward.5} parent=1 // loop_pre_header
      _
    $region3: #{conv_pillar_caf_forward.5} parent=1 // loop_header
      %s23 = sphi 0, %s27
      %p24 = scmp.ge.s32.totalorder %s23, 8
      %s30 = sphi 0, %s42
      %s31 = sphi 0, %s38
      %s32 = sphi 0, %s30
      %s33 = sphi 0, %s31
      %s34 = sphi 0, %s32
      %s35 = sphi 0, %s33
      %s47 = sphi 0, %s49
      %s50 = sphi 0, %s47
      %s51 = sphi 0, %s50
      %s67 = sphi 0, %s51
      %s73 = sphi 0, %s75
      %s76 = sphi 0, %s73
      %s77 = sphi 0, %s76
      %s93 = sphi 0, %s77
      %s99 = sphi 0, %s101
      %s102 = sphi 0, %s99
      %s103 = sphi 0, %s102
      %s119 = sphi 0, %s103
      %s125 = sphi 0, %s127
      %s128 = sphi 0, %s125
      %s129 = sphi 0, %s128
      %s145 = sphi 0, %s129
      %s151 = sphi 0, %s153
      %s154 = sphi 0, %s151
      %s155 = sphi 0, %s154
      %s171 = sphi 0, %s155
      %s179 = sphi 0, %s181
      %s182 = sphi 0, %s179
      %s183 = sphi 0, %s182
      %s199 = sphi 0, %s183
    $region4: #{conv_pillar_caf_forward.5} parent=1 // loop_header_branch
      %26 = sbr.rel (%p24) target = $region8
    $region5: #{conv_pillar_caf_forward.5} parent=1 // loop_body
      %s28 = ssub.s32 %s23, 1
      %s29 = ssub.s32 %s23, 2
      %s36 = sadd.s32 1, %s31
      %p37 = scmp.ge.s32.totalorder %s36, 2
      %s38 = scalar_select %p37, 0, %s36
      %s39 = sadd.s32 1, %s30
      %s40 = scalar_select %p37, %s39, %s30
      %p41 = scmp.ge.s32.totalorder %s40, 3
      %s42 = scalar_select %p41, 0, %s40
      %s43 = ssub.s32 %s30, %s42
      %s44 = ssub.s32 %s31, %s38
      %s45 = sor.u32 %s43, %s44
      %p46 = scmp.eq.s32.totalorder %s45, 0
      %s48 = sadd.s32 %s47, 1
      %s49 = scalar_select %p46, %s47, %s48
      %p52 = pneg %p46
      %p53 = scmp.eq.s32.totalorder %s23, 5
      %p54 = por %p52, %p53
      %p55 = scmp.ne.s32.totalorder %s47, %s50
      %p56 = scmp.eq.s32.totalorder %s23, 0
      %p57 = por %p55, %p56
      %p58 = scmp.ne.s32.totalorder %s47, %s50
      %p59 = scmp.eq.s32.totalorder %s28, 5
      %p60 = por %p58, %p59
      %p61 = scmp.ne.s32.totalorder %s50, %s51
      %p62 = scmp.eq.s32.totalorder %s28, 0
      %p63 = por %p61, %p62
      %p64 = scmp.ne.s32.totalorder %s50, %s51
      %p65 = scmp.eq.s32.totalorder %s29, 5
      %p66 = por %p64, %p65
      %p68 = scmp.ne.s32.totalorder %s51, %s67
      %p69 = scmp.eq.s32.totalorder %s29, 0
      %p70 = por %p68, %p69
      %s71 = ssub.s32 %s30, %s42
      %p72 = scmp.eq.s32.totalorder %s71, 0
      %s74 = sadd.s32 %s73, 1
      %s75 = scalar_select %p72, %s73, %s74
      %p78 = pneg %p72
      %p79 = scmp.eq.s32.totalorder %s23, 5
      %p80 = por %p78, %p79
      %p81 = scmp.ne.s32.totalorder %s73, %s76
      %p82 = scmp.eq.s32.totalorder %s23, 0
      %p83 = por %p81, %p82
      %p84 = scmp.ne.s32.totalorder %s73, %s76
      %p85 = scmp.eq.s32.totalorder %s28, 5
      %p86 = por %p84, %p85
      %p87 = scmp.ne.s32.totalorder %s76, %s77
      %p88 = scmp.eq.s32.totalorder %s28, 0
      %p89 = por %p87, %p88
      %p90 = scmp.ne.s32.totalorder %s76, %s77
      %p91 = scmp.eq.s32.totalorder %s29, 5
      %p92 = por %p90, %p91
      %p94 = scmp.ne.s32.totalorder %s77, %s93
      %p95 = scmp.eq.s32.totalorder %s29, 0
      %p96 = por %p94, %p95
      %s97 = ssub.s32 %s30, %s42
      %p98 = scmp.eq.s32.totalorder %s97, 0
      %s100 = sadd.s32 %s99, 1
      %s101 = scalar_select %p98, %s99, %s100
      %p104 = pneg %p98
      %p105 = scmp.eq.s32.totalorder %s23, 5
      %p106 = por %p104, %p105
      %p107 = scmp.ne.s32.totalorder %s99, %s102
      %p108 = scmp.eq.s32.totalorder %s23, 0
      %p109 = por %p107, %p108
      %p110 = scmp.ne.s32.totalorder %s99, %s102
      %p111 = scmp.eq.s32.totalorder %s28, 5
      %p112 = por %p110, %p111
      %p113 = scmp.ne.s32.totalorder %s102, %s103
      %p114 = scmp.eq.s32.totalorder %s28, 0
      %p115 = por %p113, %p114
      %p116 = scmp.ne.s32.totalorder %s102, %s103
      %p117 = scmp.eq.s32.totalorder %s29, 5
      %p118 = por %p116, %p117
      %p120 = scmp.ne.s32.totalorder %s103, %s119
      %p121 = scmp.eq.s32.totalorder %s29, 0
      %p122 = por %p120, %p121
      %s123 = ssub.s32 %s30, %s42
      %p124 = scmp.eq.s32.totalorder %s123, 0
      %s126 = sadd.s32 %s125, 1
      %s127 = scalar_select %p124, %s125, %s126
      %p130 = pneg %p124
      %p131 = scmp.eq.s32.totalorder %s23, 5
      %p132 = por %p130, %p131
      %p133 = scmp.ne.s32.totalorder %s125, %s128
      %p134 = scmp.eq.s32.totalorder %s23, 0
      %p135 = por %p133, %p134
      %p136 = scmp.ne.s32.totalorder %s125, %s128
      %p137 = scmp.eq.s32.totalorder %s28, 5
      %p138 = por %p136, %p137
      %p139 = scmp.ne.s32.totalorder %s128, %s129
      %p140 = scmp.eq.s32.totalorder %s28, 0
      %p141 = por %p139, %p140
      %p142 = scmp.ne.s32.totalorder %s128, %s129
      %p143 = scmp.eq.s32.totalorder %s29, 5
      %p144 = por %p142, %p143
      %p146 = scmp.ne.s32.totalorder %s129, %s145
      %p147 = scmp.eq.s32.totalorder %s29, 0
      %p148 = por %p146, %p147
      %s149 = ssub.s32 %s30, %s42
      %p150 = scmp.eq.s32.totalorder %s149, 0
      %s152 = sadd.s32 %s151, 1
      %s153 = scalar_select %p150, %s151, %s152
      %p156 = pneg %p150
      %p157 = scmp.eq.s32.totalorder %s23, 5
      %p158 = por %p156, %p157
      %p159 = scmp.ne.s32.totalorder %s151, %s154
      %p160 = scmp.eq.s32.totalorder %s23, 0
      %p161 = por %p159, %p160
      %p162 = scmp.ne.s32.totalorder %s151, %s154
      %p163 = scmp.eq.s32.totalorder %s28, 5
      %p164 = por %p162, %p163
      %p165 = scmp.ne.s32.totalorder %s154, %s155
      %p166 = scmp.eq.s32.totalorder %s28, 0
      %p167 = por %p165, %p166
      %p168 = scmp.ne.s32.totalorder %s154, %s155
      %p169 = scmp.eq.s32.totalorder %s29, 5
      %p170 = por %p168, %p169
      %p172 = scmp.ne.s32.totalorder %s155, %s171
      %p173 = scmp.eq.s32.totalorder %s29, 0
      %p174 = por %p172, %p173
      %s175 = ssub.s32 %s30, %s42
      %s176 = ssub.s32 %s31, %s38
      %s177 = sor.u32 %s175, %s176
      %p178 = scmp.eq.s32.totalorder %s177, 0
      %s180 = sadd.s32 %s179, 1
      %s181 = scalar_select %p178, %s179, %s180
      %p184 = pneg %p178
      %p185 = scmp.eq.s32.totalorder %s23, 5
      %p186 = por %p184, %p185
      %p187 = scmp.ne.s32.totalorder %s179, %s182
      %p188 = scmp.eq.s32.totalorder %s23, 0
      %p189 = por %p187, %p188
      %p190 = scmp.ne.s32.totalorder %s179, %s182
      %p191 = scmp.eq.s32.totalorder %s28, 5
      %p192 = por %p190, %p191
      %p193 = scmp.ne.s32.totalorder %s182, %s183
      %p194 = scmp.eq.s32.totalorder %s28, 0
      %p195 = por %p193, %p194
      %p196 = scmp.ne.s32.totalorder %s182, %s183
      %p197 = scmp.eq.s32.totalorder %s29, 5
      %p198 = por %p196, %p197
      %p200 = scmp.ne.s32.totalorder %s183, %s199
      %p201 = scmp.eq.s32.totalorder %s29, 0
      %p202 = por %p200, %p201
      %p203 = scmp.le.s32.totalorder 1, %s23
      %p204 = scmp.lt.s32.totalorder %s23, 7
      %p205 = pnand %p203, %p204
      %p206 = pneg %p205
      // Predicated region
      $region9: #{conv_pillar_caf_forward.5} parent=5 // pred_check
        _
      $region10: #{conv_pillar_caf_forward.5} parent=5 // pred_check_branch
        %208 = sbr.rel (%p205) target = $region12
      $region11: #{conv_pillar_caf_forward.5} parent=5 // pred_region
        %s209 = ssub.s32 %s23, 1
      $region12: #{conv_pillar_caf_forward.5} parent=5 // pred_fallthru
        _
      %p210 = scmp.lt.s32.totalorder %s23, 6
      // Predicated region
      $region13: #{conv_pillar_caf_forward.5} parent=5 // pred_check
        %p211 = pneg %p210
      $region14: #{conv_pillar_caf_forward.5} parent=5 // pred_check_branch
        %213 = sbr.rel (%p211) target = $region16
      $region15: #{conv_pillar_caf_forward.5} parent=5 // pred_region
        // Predicated region
        $region17: #{conv_pillar_caf_forward.5} parent=15 // pred_check
          %p214 = pneg %p57
        $region18: #{conv_pillar_caf_forward.5} parent=15 // pred_check_branch
          %216 = sbr.rel (%p214) target = $region20
        $region19: #{conv_pillar_caf_forward.5} parent=15 // pred_region
          %s217 = sand.u32 %s47, 1
          %s218 = scalar_lea.sflag [#allocation4], %s217
          %s219 = sand.u32 %s47, 1
          %s220 = smul.addr %s219, 64
          %s221 = scalar_lea.vmem [#allocation3], %s220
          %s223 = ssub.s32 1024, 1024
          %224 = vsyncadd %s218, %s223
          %s225 = smul.addr %s31, 8
          %s226 = smul.addr %s30, 16
          %s227 = sadd.s32 %s225, %s226
          %s228 = smul.addr %s227, 128
          %s229 = scalar_lea.hbm %s0, %s228
          %s230 = sshll.u32 %s221, 4
          %s231 = int_to_ptr.vmem [resolvable:$true] %s230
          %236 = dma.hbm_to_vmem [thread:$0]  %s229, 1024, %s231, %s218, 128, 128, 8
        $region20: #{conv_pillar_caf_forward.5} parent=15 // pred_fallthru
          _
        // Predicated region
        $region21: #{conv_pillar_caf_forward.5} parent=15 // pred_check
          %p237 = pneg %p83
        $region22: #{conv_pillar_caf_forward.5} parent=15 // pred_check_branch
          %239 = sbr.rel (%p237) target = $region24
        $region23: #{conv_pillar_caf_forward.5} parent=15 // pred_region
          %s240 = sand.u32 %s23, 1
          %s241 = scalar_lea.sflag [#allocation7], %s240
          %s242 = sand.u32 %s73, 1
          %s243 = smul.addr %s242, 36
          %s244 = scalar_lea.vmem [#allocation6], %s243
          %s246 = ssub.s32 576, 576
          %247 = vsyncadd %s241, %s246
          %s248 = smul.addr %s30, 9
          %s249 = smul.addr %s248, 64
          %s250 = scalar_lea.hbm %s1, %s249
          %s251 = sshll.u32 %s244, 4
          %s252 = int_to_ptr.vmem [resolvable:$true] %s251
          %257 = dma.hbm_to_vmem [thread:$0]  %s250, 576, %s252, %s241, 64, 64, 4
        $region24: #{conv_pillar_caf_forward.5} parent=15 // pred_fallthru
          _
        // Predicated region
        $region25: #{conv_pillar_caf_forward.5} parent=15 // pred_check
          %p258 = pneg %p109
        $region26: #{conv_pillar_caf_forward.5} parent=15 // pred_check_branch
          %260 = sbr.rel (%p258) target = $region28
        $region27: #{conv_pillar_caf_forward.5} parent=15 // pred_region
          %s261 = sand.u32 %s23, 1
          %s262 = scalar_lea.sflag [#allocation7], %s261
          %s263 = sand.u32 %s99, 1
          %s264 = scalar_lea.vmem [#allocation8], %s263
          %s266 = ssub.s32 16, 16
          %267 = vsyncadd %s262, %s266
          %s268 = smul.addr %s30, 16
          %s269 = scalar_lea.hbm %s2, %s268
          %s271 = sshll.u32 %s264, 4
          %s272 = int_to_ptr.vmem [resolvable:$true] %s271
          %274 = dma.hbm_to_vmem [thread:$0]  %s269, 16, %s272, %s262
        $region28: #{conv_pillar_caf_forward.5} parent=15 // pred_fallthru
          _
        // Predicated region
        $region29: #{conv_pillar_caf_forward.5} parent=15 // pred_check
          %p275 = pneg %p135
        $region30: #{conv_pillar_caf_forward.5} parent=15 // pred_check_branch
          %277 = sbr.rel (%p275) target = $region32
        $region31: #{conv_pillar_caf_forward.5} parent=15 // pred_region
          %s278 = sand.u32 %s23, 1
          %s279 = scalar_lea.sflag [#allocation10], %s278
          %s280 = sand.u32 %s125, 1
          %s281 = smul.addr %s280, 36
          %s282 = scalar_lea.vmem [#allocation9], %s281
          %s284 = ssub.s32 576, 576
          %285 = vsyncadd %s279, %s284
          %s286 = smul.addr %s30, 9
          %s287 = smul.addr %s286, 64
          %s288 = scalar_lea.hbm %s3, %s287
          %s289 = sshll.u32 %s282, 4
          %s290 = int_to_ptr.vmem [resolvable:$true] %s289
          %295 = dma.hbm_to_vmem [thread:$0]  %s288, 576, %s290, %s279, 64, 64, 4
        $region32: #{conv_pillar_caf_forward.5} parent=15 // pred_fallthru
          _
        // Predicated region
        $region33: #{conv_pillar_caf_forward.5} parent=15 // pred_check
          %p296 = pneg %p161
        $region34: #{conv_pillar_caf_forward.5} parent=15 // pred_check_branch
          %298 = sbr.rel (%p296) target = $region36
        $region35: #{conv_pillar_caf_forward.5} parent=15 // pred_region
          %s299 = sand.u32 %s23, 1
          %s300 = scalar_lea.sflag [#allocation10], %s299
          %s301 = sand.u32 %s151, 1
          %s302 = scalar_lea.vmem [#allocation11], %s301
          %s304 = ssub.s32 16, 16
          %305 = vsyncadd %s300, %s304
          %s306 = smul.addr %s30, 16
          %s307 = scalar_lea.hbm %s4, %s306
          %s309 = sshll.u32 %s302, 4
          %s310 = int_to_ptr.vmem [resolvable:$true] %s309
          %312 = dma.hbm_to_vmem [thread:$0]  %s307, 16, %s310, %s300
        $region36: #{conv_pillar_caf_forward.5} parent=15 // pred_fallthru
          _
      $region16: #{conv_pillar_caf_forward.5} parent=5 // pred_fallthru
        _
      %p313 = scmp.le.s32.totalorder 1, %s23
      %p314 = scmp.lt.s32.totalorder %s23, 7
      %p315 = pnand %p313, %p314
      %p316 = pneg %p315
      // Predicated region
      $region37: #{conv_pillar_caf_forward.5} parent=5 // pred_check
        _
      $region38: #{conv_pillar_caf_forward.5} parent=5 // pred_check_branch
        %318 = sbr.rel (%p315) target = $region40
      $region39: #{conv_pillar_caf_forward.5} parent=5 // pred_region
        %s319 = ssub.s32 %s23, 1
        %s320 = sand.u32 %s50, 1
        %s321 = scalar_lea.sflag [#allocation4], %s320
        %s322 = sand.u32 %s50, 1
        %s323 = smul.addr %s322, 64
        %s324 = scalar_lea.vmem [#allocation3], %s323
        // Predicated region
        $region41: #{conv_pillar_caf_forward.5} parent=39 // pred_check
          %p325 = pneg %p63
        $region42: #{conv_pillar_caf_forward.5} parent=39 // pred_check_branch
          %327 = sbr.rel (%p325) target = $region44
        $region43: #{conv_pillar_caf_forward.5} parent=39 // pred_region
          %328 = dma.done %s321, 1024
        $region44: #{conv_pillar_caf_forward.5} parent=39 // pred_fallthru
          _
        %s329 = sand.u32 %s28, 1
        %s330 = scalar_lea.sflag [#allocation7], %s329
        %s331 = sand.u32 %s76, 1
        %s332 = smul.addr %s331, 36
        %s333 = scalar_lea.vmem [#allocation6], %s332
        // Predicated region
        $region45: #{conv_pillar_caf_forward.5} parent=39 // pred_check
          %p334 = pneg %p89
        $region46: #{conv_pillar_caf_forward.5} parent=39 // pred_check_branch
          %336 = sbr.rel (%p334) target = $region48
        $region47: #{conv_pillar_caf_forward.5} parent=39 // pred_region
          %337 = dma.done %s330, 576
        $region48: #{conv_pillar_caf_forward.5} parent=39 // pred_fallthru
          _
        %s338 = sand.u32 %s28, 1
        %s339 = scalar_lea.sflag [#allocation7], %s338
        %s340 = sand.u32 %s102, 1
        %s341 = scalar_lea.vmem [#allocation8], %s340
        // Predicated region
        $region49: #{conv_pillar_caf_forward.5} parent=39 // pred_check
          %p342 = pneg %p115
        $region50: #{conv_pillar_caf_forward.5} parent=39 // pred_check_branch
          %344 = sbr.rel (%p342) target = $region52
        $region51: #{conv_pillar_caf_forward.5} parent=39 // pred_region
          %345 = dma.done %s339, 16
        $region52: #{conv_pillar_caf_forward.5} parent=39 // pred_fallthru
          _
        %s346 = sand.u32 %s28, 1
        %s347 = scalar_lea.sflag [#allocation10], %s346
        %s348 = sand.u32 %s128, 1
        %s349 = smul.addr %s348, 36
        %s350 = scalar_lea.vmem [#allocation9], %s349
        // Predicated region
        $region53: #{conv_pillar_caf_forward.5} parent=39 // pred_check
          %p351 = pneg %p141
        $region54: #{conv_pillar_caf_forward.5} parent=39 // pred_check_branch
          %353 = sbr.rel (%p351) target = $region56
        $region55: #{conv_pillar_caf_forward.5} parent=39 // pred_region
          %354 = dma.done %s347, 576
        $region56: #{conv_pillar_caf_forward.5} parent=39 // pred_fallthru
          _
        %s355 = sand.u32 %s28, 1
        %s356 = scalar_lea.sflag [#allocation10], %s355
        %s357 = sand.u32 %s154, 1
        %s358 = scalar_lea.vmem [#allocation11], %s357
        // Predicated region
        $region57: #{conv_pillar_caf_forward.5} parent=39 // pred_check
          %p359 = pneg %p167
        $region58: #{conv_pillar_caf_forward.5} parent=39 // pred_check_branch
          %361 = sbr.rel (%p359) target = $region60
        $region59: #{conv_pillar_caf_forward.5} parent=39 // pred_region
          %362 = dma.done %s356, 16
        $region60: #{conv_pillar_caf_forward.5} parent=39 // pred_fallthru
          _
        %s363 = sand.u32 %s50, 1
        %s364 = scalar_lea.sflag [#allocation4], %s363
        %s365 = sand.u32 %s50, 1
        %s366 = smul.addr %s365, 64
        %s367 = scalar_lea.vmem [#allocation3], %s366
        %p368 = pneg %p63
        %p369 = pneg %p60
        %s370 = sand.u32 %s28, 1
        %s371 = scalar_lea.sflag [#allocation7], %s370
        %s372 = sand.u32 %s76, 1
        %s373 = smul.addr %s372, 36
        %s374 = scalar_lea.vmem [#allocation6], %s373
        %p375 = pneg %p89
        %p376 = pneg %p86
        %s377 = sand.u32 %s28, 1
        %s378 = scalar_lea.sflag [#allocation7], %s377
        %s379 = sand.u32 %s102, 1
        %s380 = scalar_lea.vmem [#allocation8], %s379
        %p381 = pneg %p115
        %p382 = pneg %p112
        %s383 = sand.u32 %s28, 1
        %s384 = scalar_lea.sflag [#allocation10], %s383
        %s385 = sand.u32 %s128, 1
        %s386 = smul.addr %s385, 36
        %s387 = scalar_lea.vmem [#allocation9], %s386
        %p388 = pneg %p141
        %p389 = pneg %p138
        %s390 = sand.u32 %s28, 1
        %s391 = scalar_lea.sflag [#allocation10], %s390
        %s392 = sand.u32 %s154, 1
        %s393 = scalar_lea.vmem [#allocation11], %s392
        %p394 = pneg %p167
        %p395 = pneg %p164
        %p396 = pneg %p195
        %p397 = pneg %p192
        %s398 = sand.u32 %s182, 1
        %s399 = scalar_lea.sflag [#allocation5], %s398
        %s400 = sand.u32 %s182, 1
        %s401 = smul.addr %s400, 64
        %s402 = scalar_lea.vmem [#allocation12], %s401
        %v404 = vld [vmem:[%s324] sm:$0xff]
        %v405 = vld [vmem:[%s324 + $0x8] sm:$0xff]
        %v406 = vld [vmem:[%s324 + $0x10] sm:$0xff]
        %v407 = vld [vmem:[%s324 + $0x18] sm:$0xff]
        %v408 = vld [vmem:[%s324 + $0x20] sm:$0xff]
        %v409 = vld [vmem:[%s324 + $0x28] sm:$0xff]
        %v410 = vld [vmem:[%s324 + $0x30] sm:$0xff]
        %v411 = vld [vmem:[%s324 + $0x38] sm:$0xff]
        %vm412 = vcmask 64512
        %413 = vst.msk [vmem:[#allocation2] sm:$0xff] %vm412, 0.0
        %414 = vst.msk [vmem:[#allocation2 + $0x8] sm:$0xff] %vm412, 0.0
        %vm415 = vcmask 57344
        %416 = vst.msk [vmem:[#allocation2 + $0x10] sm:$0x1] %vm415, 0.0
        %417 = vst.msk [vmem:[#allocation2 + $0x18] sm:$0xff] %vm412, 0.0
        %418 = vst.msk [vmem:[#allocation2 + $0x20] sm:$0xff] %vm412, 0.0
        %419 = vst.msk [vmem:[#allocation2 + $0x28] sm:$0x1] %vm415, 0.0
        %420 = vst.msk [vmem:[#allocation2 + $0x30] sm:$0xff] %vm412, 0.0
        %421 = vst.msk [vmem:[#allocation2 + $0x38] sm:$0xff] %vm412, 0.0
        %422 = vst.msk [vmem:[#allocation2 + $0x40] sm:$0x1] %vm415, 0.0
        %423 = vst.msk [vmem:[#allocation2 + $0x48] sm:$0xff] %vm412, 0.0
        %424 = vst.msk [vmem:[#allocation2 + $0x50] sm:$0xff] %vm412, 0.0
        %425 = vst.msk [vmem:[#allocation2 + $0x58] sm:$0x1] %vm415, 0.0
        %426 = vst.msk [vmem:[#allocation2 + $0x60] sm:$0xff] %vm412, 0.0
        %427 = vst.msk [vmem:[#allocation2 + $0x68] sm:$0xff] %vm412, 0.0
        %428 = vst.msk [vmem:[#allocation2 + $0x70] sm:$0x1] %vm415, 0.0
        %429 = vst.msk [vmem:[#allocation2 + $0x78] sm:$0xff] %vm412, 0.0
        %430 = vst.msk [vmem:[#allocation2 + $0x80] sm:$0xff] %vm412, 0.0
        %431 = vst.msk [vmem:[#allocation2 + $0x88] sm:$0x1] %vm415, 0.0
        %432 = vst.msk [vmem:[#allocation2 + $0x90] sm:$0xff] %vm412, 0.0
        %433 = vst.msk [vmem:[#allocation2 + $0x98] sm:$0xff] %vm412, 0.0
        %434 = vst.msk [vmem:[#allocation2 + $0xa0] sm:$0x1] %vm415, 0.0
        %435 = vst.msk [vmem:[#allocation2 + $0xa8] sm:$0xff] %vm412, 0.0
        %436 = vst.msk [vmem:[#allocation2 + $0xb0] sm:$0xff] %vm412, 0.0
        %437 = vst.msk [vmem:[#allocation2 + $0xb8] sm:$0x1] %vm415, 0.0
        %438 = vst.msk [vmem:[#allocation2 + $0xc0] sm:$0xff] %vm412, 0.0
        %439 = vst.msk [vmem:[#allocation2 + $0xc8] sm:$0xff] %vm412, 0.0
        %440 = vst.msk [vmem:[#allocation2 + $0xd0] sm:$0x1] %vm415, 0.0
        %441 = vst.msk [vmem:[#allocation2 + $0xd8] sm:$0xff] %vm412, 0.0
        %442 = vst.msk [vmem:[#allocation2 + $0xe0] sm:$0xff] %vm412, 0.0
        %443 = vst.msk [vmem:[#allocation2 + $0xe8] sm:$0x1] %vm415, 0.0
        %444 = vst.msk [vmem:[#allocation2 + $0xf0] sm:$0xff] %vm412, 0.0
        %445 = vst.msk [vmem:[#allocation2 + $0xf8] sm:$0xff] %vm412, 0.0
        %446 = vst.msk [vmem:[#allocation2 + $0x100] sm:$0x1] %vm415, 0.0
        %447 = vst.msk [vmem:[#allocation2 + $0x108] sm:$0xff] %vm412, 0.0
        %448 = vst.msk [vmem:[#allocation2 + $0x110] sm:$0xff] %vm412, 0.0
        %449 = vst.msk [vmem:[#allocation2 + $0x118] sm:$0x1] %vm415, 0.0
        %450 = vst.msk [vmem:[#allocation2 + $0x120] sm:$0xff] %vm412, 0.0
        %451 = vst.msk [vmem:[#allocation2 + $0x128] sm:$0xff] %vm412, 0.0
        %452 = vst.msk [vmem:[#allocation2 + $0x130] sm:$0x1] %vm415, 0.0
        %453 = vst.msk [vmem:[#allocation2 + $0x138] sm:$0xff] %vm412, 0.0
        %454 = vst.msk [vmem:[#allocation2 + $0x140] sm:$0xff] %vm412, 0.0
        %455 = vst.msk [vmem:[#allocation2 + $0x148] sm:$0x1] %vm415, 0.0
        %456 = vst.msk [vmem:[#allocation2 + $0x150] sm:$0xff] %vm412, 0.0
        %457 = vst.msk [vmem:[#allocation2 + $0x158] sm:$0xff] %vm412, 0.0
        %458 = vst.msk [vmem:[#allocation2 + $0x160] sm:$0x1] %vm415, 0.0
        %459 = vst.msk [vmem:[#allocation2 + $0x168] sm:$0xff] %vm412, 0.0
        %460 = vst.msk [vmem:[#allocation2 + $0x170] sm:$0xff] %vm412, 0.0
        %461 = vst.msk [vmem:[#allocation2 + $0x178] sm:$0x1] %vm415, 0.0
        %462 = vst.msk [vmem:[#allocation2 + $0x180] sm:$0xff] %vm412, 0.0
        %463 = vst.msk [vmem:[#allocation2 + $0x188] sm:$0xff] %vm412, 0.0
        %464 = vst.msk [vmem:[#allocation2 + $0x190] sm:$0x1] %vm415, 0.0
        %s465 = scalar_lea.vmem [#allocation2], 192
        %466 = vst.msk [vmem:[%s465 + $0x8] sm:$0xff] %vm412, %v404
        %467 = vst.msk [vmem:[%s465 + $0x20] sm:$0xff] %vm412, %v405
        %468 = vst.msk [vmem:[%s465 + $0x38] sm:$0xff] %vm412, %v406
        %469 = vst.msk [vmem:[%s465 + $0x50] sm:$0xff] %vm412, %v407
        %470 = vst.msk [vmem:[%s465 + $0x68] sm:$0xff] %vm412, %v408
        %471 = vst.msk [vmem:[%s465 + $0x80] sm:$0xff] %vm412, %v409
        %472 = vst.msk [vmem:[%s465 + $0x98] sm:$0xff] %vm412, %v410
        %473 = vst.msk [vmem:[%s465 + $0xb0] sm:$0xff] %vm412, %v411
        %s474 = scalar_lea.vmem [#allocation2], 168
        %v475 = vld [vmem:[%s474 + $0x7] sm:$0xff]
        %v476 = vld [vmem:[%s474 + $0x1f] sm:$0xff]
        %v477 = vld [vmem:[%s474 + $0x37] sm:$0xff]
        %v478 = vld [vmem:[%s474 + $0x4f] sm:$0xff]
        %v479 = vld [vmem:[%s474 + $0x67] sm:$0xff]
        %v480 = vld [vmem:[%s474 + $0x7f] sm:$0xff]
        %v481 = vld [vmem:[%s474 + $0x97] sm:$0xff]
        %v482 = vld [vmem:[%s474 + $0xaf] sm:$0xff]
        %v483 = vpack.c.bf16 %v476, %v475
        %v484 = vpack.c.bf16 %v478, %v477
        %v485 = vpack.c.bf16 %v480, %v479
        %v486 = vpack.c.bf16 %v482, %v481
        %v487 = vld [vmem:[%s333] sm:$0xf]
        %v488 = vld [vmem:[%s474 + $0x8] sm:$0xff]
        %v489 = vld [vmem:[%s474 + $0x20] sm:$0xff]
        %v490 = vld [vmem:[%s474 + $0x38] sm:$0xff]
        %v491 = vld [vmem:[%s474 + $0x50] sm:$0xff]
        %v492 = vld [vmem:[%s474 + $0x68] sm:$0xff]
        %v493 = vld [vmem:[%s474 + $0x80] sm:$0xff]
        %v494 = vld [vmem:[%s474 + $0x98] sm:$0xff]
        %v495 = vld [vmem:[%s474 + $0xb0] sm:$0xff]
        %v496 = vpack.c.bf16 %v489, %v488
        %v497 = vpack.c.bf16 %v491, %v490
        %v498 = vpack.c.bf16 %v493, %v492
        %v499 = vpack.c.bf16 %v495, %v494
        %s500 = scalar_lea.vmem %s333, 4 [#allocation6]
        %v501 = vld [vmem:[%s500] sm:$0xf]
        %v503 = vsel %vm412, %v496, 0
        %v506 = vsel %vm412, %v497, 0
        %v509 = vsel %vm412, %v498, 0
        %v512 = vsel %vm412, %v499, 0
        %vm514 = vcmask 1043456
        %v516 = vsel %vm514, %v501, 0
        %518 = vmatprep.subr.bf16.mxu0 0
        %519 = vmatpush1.bf16.msra.mxu0 %v516
        %520 = vmatprep.subr.bf16.mxu0 0
        %521 = vmatpush1.bf16.msra.mxu0 0
        %522 = vmatprep.subr.bf16.mxu0 0
        %523 = vmatpush1.bf16.msra.mxu0 0
        %524 = vmatprep.subr.bf16.mxu0 0
        %525 = vmatpush1.bf16.msra.mxu0 0
        %526 = vmatprep.subr.bf16.mxu0 0
        %527 = vmatpush1.bf16.msra.mxu0 0
        %528 = vmatprep.subr.bf16.mxu0 0
        %529 = vmatpush1.bf16.msra.mxu0 0
        %530 = vmatprep.subr.bf16.mxu0 0
        %531 = vmatpush1.bf16.msra.mxu0 0
        %532 = vmatprep.subr.bf16.mxu0 0
        %533 = vmatpush1.bf16.msra.mxu0 0
        %534 = vmatprep.subr.bf16.mxu0 0
        %535 = vmatpush1.bf16.msra.mxu0 0
        %536 = vmatprep.subr.bf16.mxu0 0
        %537 = vmatpush1.bf16.msra.mxu0 0
        %538 = vmatprep.subr.bf16.mxu0 0
        %539 = vmatpush1.bf16.msra.mxu0 0
        %540 = vmatprep.subr.bf16.mxu0 0
        %541 = vmatpush1.bf16.msra.mxu0 0
        %542 = vmatprep.subr.bf16.mxu0 0
        %543 = vmatpush1.bf16.msra.mxu0 0
        %544 = vmatprep.subr.bf16.mxu0 0
        %545 = vmatpush1.bf16.msra.mxu0 0
        %546 = vmatprep.subr.bf16.mxu0 0
        %547 = vmatpush1.bf16.msra.mxu0 0
        %548 = vmatprep.subr.bf16.mxu0 0
        %549 = vmatpush1.bf16.msra.mxu0 0
        %550 = vmatprep.mubr.bf16.mxu0 0
        %551 = vmatmul.mubr.bf16.gmra.mrb[0].mxu0 %v503
        %v552 = vpop.f32.mrb[0].mxu0
        %v553 = vadd.f32 0.0, %v552
        %v554 = vpop.f32.mrb[0].mxu0
        %v555 = vpop.f32.mrb[0].mxu0
        %v556 = vadd.f32 0.0, %v555
        %v557 = vpop.f32.mrb[0].mxu0
        %558 = vmatprep.mubr.bf16.mxu0 0
        %559 = vmatmul.mubr.bf16.gmra.mrb[0].mxu0 %v506
        %v560 = vpop.f32.mrb[0].mxu0
        %v561 = vadd.f32 0.0, %v560
        %v562 = vpop.f32.mrb[0].mxu0
        %v563 = vpop.f32.mrb[0].mxu0
        %v564 = vadd.f32 0.0, %v563
        %v565 = vpop.f32.mrb[0].mxu0
        %566 = vmatprep.mubr.bf16.mxu0 0
        %567 = vmatmul.mubr.bf16.gmra.mrb[0].mxu0 %v509
        %v568 = vpop.f32.mrb[0].mxu0
        %v569 = vadd.f32 0.0, %v568
        %v570 = vpop.f32.mrb[0].mxu0
        %v571 = vpop.f32.mrb[0].mxu0
        %v572 = vadd.f32 0.0, %v571
        %v573 = vpop.f32.mrb[0].mxu0
        %574 = vmatprep.mubr.bf16.mxu0 0
        %575 = vmatmul.mubr.bf16.gmra.mrb[0].mxu0 %v512
        %v576 = vpop.f32.mrb[0].mxu0
        %v577 = vadd.f32 0.0, %v576
        %v578 = vpop.f32.mrb[0].mxu0
        %v579 = vpop.f32.mrb[0].mxu0
        %v580 = vadd.f32 0.0, %v579
        %v581 = vpop.f32.mrb[0].mxu0
        %582 = vdwg.mxu0
        %v584 = vsel %vm412, %v483, 0
        %v587 = vsel %vm412, %v484, 0
        %v590 = vsel %vm412, %v485, 0
        %v593 = vsel %vm412, %v486, 0
        %v596 = vsel %vm514, %v487, 0
        %598 = vmatprep.subr.bf16.mxu0 0
        %599 = vmatpush1.bf16.msra.mxu0 %v596
        %600 = vmatprep.subr.bf16.mxu0 0
        %601 = vmatpush1.bf16.msra.mxu0 0
        %602 = vmatprep.subr.bf16.mxu0 0
        %603 = vmatpush1.bf16.msra.mxu0 0
        %604 = vmatprep.subr.bf16.mxu0 0
        %605 = vmatpush1.bf16.msra.mxu0 0
        %606 = vmatprep.subr.bf16.mxu0 0
        %607 = vmatpush1.bf16.msra.mxu0 0
        %608 = vmatprep.subr.bf16.mxu0 0
        %609 = vmatpush1.bf16.msra.mxu0 0
        %610 = vmatprep.subr.bf16.mxu0 0
        %611 = vmatpush1.bf16.msra.mxu0 0
        %612 = vmatprep.subr.bf16.mxu0 0
        %613 = vmatpush1.bf16.msra.mxu0 0
        %614 = vmatprep.subr.bf16.mxu0 0
        %615 = vmatpush1.bf16.msra.mxu0 0
        %616 = vmatprep.subr.bf16.mxu0 0
        %617 = vmatpush1.bf16.msra.mxu0 0
        %618 = vmatprep.subr.bf16.mxu0 0
        %619 = vmatpush1.bf16.msra.mxu0 0
        %620 = vmatprep.subr.bf16.mxu0 0
        %621 = vmatpush1.bf16.msra.mxu0 0
        %622 = vmatprep.subr.bf16.mxu0 0
        %623 = vmatpush1.bf16.msra.mxu0 0
        %624 = vmatprep.subr.bf16.mxu0 0
        %625 = vmatpush1.bf16.msra.mxu0 0
        %626 = vmatprep.subr.bf16.mxu0 0
        %627 = vmatpush1.bf16.msra.mxu0 0
        %628 = vmatprep.subr.bf16.mxu0 0
        %629 = vmatpush1.bf16.msra.mxu0 0
        %630 = vmatprep.mubr.bf16.mxu0 0
        %631 = vmatmul.mubr.bf16.gmra.mrb[0].mxu0 %v584
        %v632 = vpop.f32.mrb[0].mxu0
        %v633 = vadd.f32 %v553, %v632
        %v634 = vpop.f32.mrb[0].mxu0
        %v635 = vpop.f32.mrb[0].mxu0
        %v636 = vadd.f32 %v556, %v635
        %v637 = vpop.f32.mrb[0].mxu0
        %638 = vmatprep.mubr.bf16.mxu0 0
        %639 = vmatmul.mubr.bf16.gmra.mrb[0].mxu0 %v587
        %v640 = vpop.f32.mrb[0].mxu0
        %v641 = vadd.f32 %v561, %v640
        %v642 = vpop.f32.mrb[0].mxu0
        %v643 = vpop.f32.mrb[0].mxu0
        %v644 = vadd.f32 %v564, %v643
        %v645 = vpop.f32.mrb[0].mxu0
        %646 = vmatprep.mubr.bf16.mxu0 0
        %647 = vmatmul.mubr.bf16.gmra.mrb[0].mxu0 %v590
        %v648 = vpop.f32.mrb[0].mxu0
        %v649 = vadd.f32 %v569, %v648
        %v650 = vpop.f32.mrb[0].mxu0
        %v651 = vpop.f32.mrb[0].mxu0
        %v652 = vadd.f32 %v572, %v651
        %v653 = vpop.f32.mrb[0].mxu0
        %654 = vmatprep.mubr.bf16.mxu0 0
        %655 = vmatmul.mubr.bf16.gmra.mrb[0].mxu0 %v593
        %v656 = vpop.f32.mrb[0].mxu0
        %v657 = vadd.f32 %v577, %v656
        %v658 = vpop.f32.mrb[0].mxu0
        %v659 = vpop.f32.mrb[0].mxu0
        %v660 = vadd.f32 %v580, %v659
        %v661 = vpop.f32.mrb[0].mxu0
        %662 = vdwg.mxu0
        %v663 = vld [vmem:[%s474 + $0x9] sm:$0xff]
        %v664 = vld [vmem:[%s474 + $0x21] sm:$0xff]
        %v665 = vld [vmem:[%s474 + $0x39] sm:$0xff]
        %v666 = vld [vmem:[%s474 + $0x51] sm:$0xff]
        %v667 = vld [vmem:[%s474 + $0x69] sm:$0xff]
        %v668 = vld [vmem:[%s474 + $0x81] sm:$0xff]
        %v669 = vld [vmem:[%s474 + $0x99] sm:$0xff]
        %v670 = vld [vmem:[%s474 + $0xb1] sm:$0xff]
        %v671 = vpack.c.bf16 %v664, %v663
        %v672 = vpack.c.bf16 %v666, %v665
        %v673 = vpack.c.bf16 %v668, %v667
        %v674 = vpack.c.bf16 %v670, %v669
        %s675 = scalar_lea.vmem %s333, 8 [#allocation6]
        %v676 = vld [vmem:[%s675] sm:$0xf]
        %v678 = vsel %vm412, %v671, 0
        %v681 = vsel %vm412, %v672, 0
        %v684 = vsel %vm412, %v673, 0
        %v687 = vsel %vm412, %v674, 0
        %v690 = vsel %vm514, %v676, 0
        %692 = vmatprep.subr.bf16.mxu0 0
        %693 = vmatpush1.bf16.msra.mxu0 %v690
        %694 = vmatprep.subr.bf16.mxu0 0
        %695 = vmatpush1.bf16.msra.mxu0 0
        %696 = vmatprep.subr.bf16.mxu0 0
        %697 = vmatpush1.bf16.msra.mxu0 0
        %698 = vmatprep.subr.bf16.mxu0 0
        %699 = vmatpush1.bf16.msra.mxu0 0
        %700 = vmatprep.subr.bf16.mxu0 0
        %701 = vmatpush1.bf16.msra.mxu0 0
        %702 = vmatprep.subr.bf16.mxu0 0
        %703 = vmatpush1.bf16.msra.mxu0 0
        %704 = vmatprep.subr.bf16.mxu0 0
        %705 = vmatpush1.bf16.msra.mxu0 0
        %706 = vmatprep.subr.bf16.mxu0 0
        %707 = vmatpush1.bf16.msra.mxu0 0
        %708 = vmatprep.subr.bf16.mxu0 0
        %709 = vmatpush1.bf16.msra.mxu0 0
        %710 = vmatprep.subr.bf16.mxu0 0
        %711 = vmatpush1.bf16.msra.mxu0 0
        %712 = vmatprep.subr.bf16.mxu0 0
        %713 = vmatpush1.bf16.msra.mxu0 0
        %714 = vmatprep.subr.bf16.mxu0 0
        %715 = vmatpush1.bf16.msra.mxu0 0
        %716 = vmatprep.subr.bf16.mxu0 0
        %717 = vmatpush1.bf16.msra.mxu0 0
        %718 = vmatprep.subr.bf16.mxu0 0
        %719 = vmatpush1.bf16.msra.mxu0 0
        %720 = vmatprep.subr.bf16.mxu0 0
        %721 = vmatpush1.bf16.msra.mxu0 0
        %722 = vmatprep.subr.bf16.mxu0 0
        %723 = vmatpush1.bf16.msra.mxu0 0
        %724 = vmatprep.mubr.bf16.mxu0 0
        %725 = vmatmul.mubr.bf16.gmra.mrb[0].mxu0 %v678
        %v726 = vpop.f32.mrb[0].mxu0
        %v727 = vadd.f32 0.0, %v726
        %v728 = vpop.f32.mrb[0].mxu0
        %v729 = vpop.f32.mrb[0].mxu0
        %v730 = vadd.f32 0.0, %v729
        %v731 = vpop.f32.mrb[0].mxu0
        %732 = vmatprep.mubr.bf16.mxu0 0
        %733 = vmatmul.mubr.bf16.gmra.mrb[0].mxu0 %v681
        %v734 = vpop.f32.mrb[0].mxu0
        %v735 = vadd.f32 0.0, %v734
        %v736 = vpop.f32.mrb[0].mxu0
        %v737 = vpop.f32.mrb[0].mxu0
        %v738 = vadd.f32 0.0, %v737
        %v739 = vpop.f32.mrb[0].mxu0
        %740 = vmatprep.mubr.bf16.mxu0 0
        %741 = vmatmul.mubr.bf16.gmra.mrb[0].mxu0 %v684
        %v742 = vpop.f32.mrb[0].mxu0
        %v743 = vadd.f32 0.0, %v742
        %v744 = vpop.f32.mrb[0].mxu0
        %v745 = vpop.f32.mrb[0].mxu0
        %v746 = vadd.f32 0.0, %v745
        %v747 = vpop.f32.mrb[0].mxu0
        %748 = vmatprep.mubr.bf16.mxu0 0
        %749 = vmatmul.mubr.bf16.gmra.mrb[0].mxu0 %v687
        %v750 = vpop.f32.mrb[0].mxu0
        %v751 = vadd.f32 0.0, %v750
        %v752 = vpop.f32.mrb[0].mxu0
        %v753 = vpop.f32.mrb[0].mxu0
        %v754 = vadd.f32 0.0, %v753
        %v755 = vpop.f32.mrb[0].mxu0
        %756 = vdwg.mxu0
        %v757 = vadd.f32 %v633, %v727
        %v758 = vadd.f32 %v636, %v730
        %v759 = vadd.f32 %v641, %v735
        %v760 = vadd.f32 %v644, %v738
        %v761 = vadd.f32 %v649, %v743
        %v762 = vadd.f32 %v652, %v746
        %v763 = vadd.f32 %v657, %v751
        %v764 = vadd.f32 %v660, %v754
        %v765 = vld [vmem:[%s465 + $0x7] sm:$0xff]
        %v766 = vld [vmem:[%s465 + $0x1f] sm:$0xff]
        %v767 = vld [vmem:[%s465 + $0x37] sm:$0xff]
        %v768 = vld [vmem:[%s465 + $0x4f] sm:$0xff]
        %v769 = vld [vmem:[%s465 + $0x67] sm:$0xff]
        %v770 = vld [vmem:[%s465 + $0x7f] sm:$0xff]
        %v771 = vld [vmem:[%s465 + $0x97] sm:$0xff]
        %v772 = vld [vmem:[%s465 + $0xaf] sm:$0xff]
        %v773 = vpack.c.bf16 %v766, %v765
        %v774 = vpack.c.bf16 %v768, %v767
        %v775 = vpack.c.bf16 %v770, %v769
        %v776 = vpack.c.bf16 %v772, %v771
        %s777 = scalar_lea.vmem %s333, 12 [#allocation6]
        %v778 = vld [vmem:[%s777] sm:$0xf]
        %v780 = vsel %vm412, %v773, 0
        %v783 = vsel %vm412, %v774, 0
        %v786 = vsel %vm412, %v775, 0
        %v789 = vsel %vm412, %v776, 0
        %v792 = vsel %vm514, %v778, 0
        %794 = vmatprep.subr.bf16.mxu0 0
        %795 = vmatpush1.bf16.msra.mxu0 %v792
        %796 = vmatprep.subr.bf16.mxu0 0
        %797 = vmatpush1.bf16.msra.mxu0 0
        %798 = vmatprep.subr.bf16.mxu0 0
        %799 = vmatpush1.bf16.msra.mxu0 0
        %800 = vmatprep.subr.bf16.mxu0 0
        %801 = vmatpush1.bf16.msra.mxu0 0
        %802 = vmatprep.subr.bf16.mxu0 0
        %803 = vmatpush1.bf16.msra.mxu0 0
        %804 = vmatprep.subr.bf16.mxu0 0
        %805 = vmatpush1.bf16.msra.mxu0 0
        %806 = vmatprep.subr.bf16.mxu0 0
        %807 = vmatpush1.bf16.msra.mxu0 0
        %808 = vmatprep.subr.bf16.mxu0 0
        %809 = vmatpush1.bf16.msra.mxu0 0
        %810 = vmatprep.subr.bf16.mxu0 0
        %811 = vmatpush1.bf16.msra.mxu0 0
        %812 = vmatprep.subr.bf16.mxu0 0
        %813 = vmatpush1.bf16.msra.mxu0 0
        %814 = vmatprep.subr.bf16.mxu0 0
        %815 = vmatpush1.bf16.msra.mxu0 0
        %816 = vmatprep.subr.bf16.mxu0 0
        %817 = vmatpush1.bf16.msra.mxu0 0
        %818 = vmatprep.subr.bf16.mxu0 0
        %819 = vmatpush1.bf16.msra.mxu0 0
        %820 = vmatprep.subr.bf16.mxu0 0
        %821 = vmatpush1.bf16.msra.mxu0 0
        %822 = vmatprep.subr.bf16.mxu0 0
        %823 = vmatpush1.bf16.msra.mxu0 0
        %824 = vmatprep.subr.bf16.mxu0 0
        %825 = vmatpush1.bf16.msra.mxu0 0
        %826 = vmatprep.mubr.bf16.mxu0 0
        %827 = vmatmul.mubr.bf16.gmra.mrb[0].mxu0 %v780
        %v828 = vpop.f32.mrb[0].mxu0
        %v829 = vadd.f32 0.0, %v828
        %v830 = vpop.f32.mrb[0].mxu0
        %v831 = vpop.f32.mrb[0].mxu0
        %v832 = vadd.f32 0.0, %v831
        %v833 = vpop.f32.mrb[0].mxu0
        %834 = vmatprep.mubr.bf16.mxu0 0
        %835 = vmatmul.mubr.bf16.gmra.mrb[0].mxu0 %v783
        %v836 = vpop.f32.mrb[0].mxu0
        %v837 = vadd.f32 0.0, %v836
        %v838 = vpop.f32.mrb[0].mxu0
        %v839 = vpop.f32.mrb[0].mxu0
        %v840 = vadd.f32 0.0, %v839
        %v841 = vpop.f32.mrb[0].mxu0
        %842 = vmatprep.mubr.bf16.mxu0 0
        %843 = vmatmul.mubr.bf16.gmra.mrb[0].mxu0 %v786
        %v844 = vpop.f32.mrb[0].mxu0
        %v845 = vadd.f32 0.0, %v844
        %v846 = vpop.f32.mrb[0].mxu0
        %v847 = vpop.f32.mrb[0].mxu0
        %v848 = vadd.f32 0.0, %v847
        %v849 = vpop.f32.mrb[0].mxu0
        %850 = vmatprep.mubr.bf16.mxu0 0
        %851 = vmatmul.mubr.bf16.gmra.mrb[0].mxu0 %v789
        %v852 = vpop.f32.mrb[0].mxu0
        %v853 = vadd.f32 0.0, %v852
        %v854 = vpop.f32.mrb[0].mxu0
        %v855 = vpop.f32.mrb[0].mxu0
        %v856 = vadd.f32 0.0, %v855
        %v857 = vpop.f32.mrb[0].mxu0
        %858 = vdwg.mxu0
        %v859 = vadd.f32 %v757, %v829
        %v860 = vadd.f32 %v758, %v832
        %v861 = vadd.f32 %v759, %v837
        %v862 = vadd.f32 %v760, %v840
        %v863 = vadd.f32 %v761, %v845
        %v864 = vadd.f32 %v762, %v848
        %v865 = vadd.f32 %v763, %v853
        %v866 = vadd.f32 %v764, %v856
        %v867 = vld [vmem:[%s465 + $0x8] sm:$0xff]
        %v868 = vld [vmem:[%s465 + $0x20] sm:$0xff]
        %v869 = vld [vmem:[%s465 + $0x38] sm:$0xff]
        %v870 = vld [vmem:[%s465 + $0x50] sm:$0xff]
        %v871 = vld [vmem:[%s465 + $0x68] sm:$0xff]
        %v872 = vld [vmem:[%s465 + $0x80] sm:$0xff]
        %v873 = vld [vmem:[%s465 + $0x98] sm:$0xff]
        %v874 = vld [vmem:[%s465 + $0xb0] sm:$0xff]
        %v875 = vpack.c.bf16 %v868, %v867
        %v876 = vpack.c.bf16 %v870, %v869
        %v877 = vpack.c.bf16 %v872, %v871
        %v878 = vpack.c.bf16 %v874, %v873
        %s879 = scalar_lea.vmem %s333, 16 [#allocation6]
        %v880 = vld [vmem:[%s879] sm:$0xf]
        %v882 = vsel %vm412, %v875, 0
        %v885 = vsel %vm412, %v876, 0
        %v888 = vsel %vm412, %v877, 0
        %v891 = vsel %vm412, %v878, 0
        %v894 = vsel %vm514, %v880, 0
        %896 = vmatprep.subr.bf16.mxu0 0
        %897 = vmatpush1.bf16.msra.mxu0 %v894
        %898 = vmatprep.subr.bf16.mxu0 0
        %899 = vmatpush1.bf16.msra.mxu0 0
        %900 = vmatprep.subr.bf16.mxu0 0
        %901 = vmatpush1.bf16.msra.mxu0 0
        %902 = vmatprep.subr.bf16.mxu0 0
        %903 = vmatpush1.bf16.msra.mxu0 0
        %904 = vmatprep.subr.bf16.mxu0 0
        %905 = vmatpush1.bf16.msra.mxu0 0
        %906 = vmatprep.subr.bf16.mxu0 0
        %907 = vmatpush1.bf16.msra.mxu0 0
        %908 = vmatprep.subr.bf16.mxu0 0
        %909 = vmatpush1.bf16.msra.mxu0 0
        %910 = vmatprep.subr.bf16.mxu0 0
        %911 = vmatpush1.bf16.msra.mxu0 0
        %912 = vmatprep.subr.bf16.mxu0 0
        %913 = vmatpush1.bf16.msra.mxu0 0
        %914 = vmatprep.subr.bf16.mxu0 0
        %915 = vmatpush1.bf16.msra.mxu0 0
        %916 = vmatprep.subr.bf16.mxu0 0
        %917 = vmatpush1.bf16.msra.mxu0 0
        %918 = vmatprep.subr.bf16.mxu0 0
        %919 = vmatpush1.bf16.msra.mxu0 0
        %920 = vmatprep.subr.bf16.mxu0 0
        %921 = vmatpush1.bf16.msra.mxu0 0
        %922 = vmatprep.subr.bf16.mxu0 0
        %923 = vmatpush1.bf16.msra.mxu0 0
        %924 = vmatprep.subr.bf16.mxu0 0
        %925 = vmatpush1.bf16.msra.mxu0 0
        %926 = vmatprep.subr.bf16.mxu0 0
        %927 = vmatpush1.bf16.msra.mxu0 0
        %928 = vmatprep.mubr.bf16.mxu0 0
        %929 = vmatmul.mubr.bf16.gmra.mrb[0].mxu0 %v882
        %v930 = vpop.f32.mrb[0].mxu0
        %v931 = vadd.f32 0.0, %v930
        %v932 = vpop.f32.mrb[0].mxu0
        %v933 = vpop.f32.mrb[0].mxu0
        %v934 = vadd.f32 0.0, %v933
        %v935 = vpop.f32.mrb[0].mxu0
        %936 = vmatprep.mubr.bf16.mxu0 0
        %937 = vmatmul.mubr.bf16.gmra.mrb[0].mxu0 %v885
        %v938 = vpop.f32.mrb[0].mxu0
        %v939 = vadd.f32 0.0, %v938
        %v940 = vpop.f32.mrb[0].mxu0
        %v941 = vpop.f32.mrb[0].mxu0
        %v942 = vadd.f32 0.0, %v941
        %v943 = vpop.f32.mrb[0].mxu0
        %944 = vmatprep.mubr.bf16.mxu0 0
        %945 = vmatmul.mubr.bf16.gmra.mrb[0].mxu0 %v888
        %v946 = vpop.f32.mrb[0].mxu0
        %v947 = vadd.f32 0.0, %v946
        %v948 = vpop.f32.mrb[0].mxu0
        %v949 = vpop.f32.mrb[0].mxu0
        %v950 = vadd.f32 0.0, %v949
        %v951 = vpop.f32.mrb[0].mxu0
        %952 = vmatprep.mubr.bf16.mxu0 0
        %953 = vmatmul.mubr.bf16.gmra.mrb[0].mxu0 %v891
        %v954 = vpop.f32.mrb[0].mxu0
        %v955 = vadd.f32 0.0, %v954
        %v956 = vpop.f32.mrb[0].mxu0
        %v957 = vpop.f32.mrb[0].mxu0
        %v958 = vadd.f32 0.0, %v957
        %v959 = vpop.f32.mrb[0].mxu0
        %960 = vdwg.mxu0
        %v961 = vadd.f32 %v859, %v931
        %v962 = vadd.f32 %v860, %v934
        %v963 = vadd.f32 %v861, %v939
        %v964 = vadd.f32 %v862, %v942
        %v965 = vadd.f32 %v863, %v947
        %v966 = vadd.f32 %v864, %v950
        %v967 = vadd.f32 %v865, %v955
        %v968 = vadd.f32 %v866, %v958
        %v969 = vld [vmem:[%s465 + $0x9] sm:$0xff]
        %v970 = vld [vmem:[%s465 + $0x21] sm:$0xff]
        %v971 = vld [vmem:[%s465 + $0x39] sm:$0xff]
        %v972 = vld [vmem:[%s465 + $0x51] sm:$0xff]
        %v973 = vld [vmem:[%s465 + $0x69] sm:$0xff]
        %v974 = vld [vmem:[%s465 + $0x81] sm:$0xff]
        %v975 = vld [vmem:[%s465 + $0x99] sm:$0xff]
        %v976 = vld [vmem:[%s465 + $0xb1] sm:$0xff]
        %v977 = vpack.c.bf16 %v970, %v969
        %v978 = vpack.c.bf16 %v972, %v971
        %v979 = vpack.c.bf16 %v974, %v973
        %v980 = vpack.c.bf16 %v976, %v975
        %s981 = scalar_lea.vmem %s333, 20 [#allocation6]
        %v982 = vld [vmem:[%s981] sm:$0xf]
        %v984 = vsel %vm412, %v977, 0
        %v987 = vsel %vm412, %v978, 0
        %v990 = vsel %vm412, %v979, 0
        %v993 = vsel %vm412, %v980, 0
        %v996 = vsel %vm514, %v982, 0
        %998 = vmatprep.subr.bf16.mxu0 0
        %999 = vmatpush1.bf16.msra.mxu0 %v996
        %1000 = vmatprep.subr.bf16.mxu0 0
        %1001 = vmatpush1.bf16.msra.mxu0 0
        %1002 = vmatprep.subr.bf16.mxu0 0
        %1003 = vmatpush1.bf16.msra.mxu0 0
        %1004 = vmatprep.subr.bf16.mxu0 0
        %1005 = vmatpush1.bf16.msra.mxu0 0
        %1006 = vmatprep.subr.bf16.mxu0 0
        %1007 = vmatpush1.bf16.msra.mxu0 0
        %1008 = vmatprep.subr.bf16.mxu0 0
        %1009 = vmatpush1.bf16.msra.mxu0 0
        %1010 = vmatprep.subr.bf16.mxu0 0
        %1011 = vmatpush1.bf16.msra.mxu0 0
        %1012 = vmatprep.subr.bf16.mxu0 0
        %1013 = vmatpush1.bf16.msra.mxu0 0
        %1014 = vmatprep.subr.bf16.mxu0 0
        %1015 = vmatpush1.bf16.msra.mxu0 0
        %1016 = vmatprep.subr.bf16.mxu0 0
        %1017 = vmatpush1.bf16.msra.mxu0 0
        %1018 = vmatprep.subr.bf16.mxu0 0
        %1019 = vmatpush1.bf16.msra.mxu0 0
        %1020 = vmatprep.subr.bf16.mxu0 0
        %1021 = vmatpush1.bf16.msra.mxu0 0
        %1022 = vmatprep.subr.bf16.mxu0 0
        %1023 = vmatpush1.bf16.msra.mxu0 0
        %1024 = vmatprep.subr.bf16.mxu0 0
        %1025 = vmatpush1.bf16.msra.mxu0 0
        %1026 = vmatprep.subr.bf16.mxu0 0
        %1027 = vmatpush1.bf16.msra.mxu0 0
        %1028 = vmatprep.subr.bf16.mxu0 0
        %1029 = vmatpush1.bf16.msra.mxu0 0
        %1030 = vmatprep.mubr.bf16.mxu0 0
        %1031 = vmatmul.mubr.bf16.gmra.mrb[0].mxu0 %v984
        %v1032 = vpop.f32.mrb[0].mxu0
        %v1033 = vadd.f32 0.0, %v1032
        %v1034 = vpop.f32.mrb[0].mxu0
        %v1035 = vpop.f32.mrb[0].mxu0
        %v1036 = vadd.f32 0.0, %v1035
        %v1037 = vpop.f32.mrb[0].mxu0
        %1038 = vmatprep.mubr.bf16.mxu0 0
        %1039 = vmatmul.mubr.bf16.gmra.mrb[0].mxu0 %v987
        %v1040 = vpop.f32.mrb[0].mxu0
        %v1041 = vadd.f32 0.0, %v1040
        %v1042 = vpop.f32.mrb[0].mxu0
        %v1043 = vpop.f32.mrb[0].mxu0
        %v1044 = vadd.f32 0.0, %v1043
        %v1045 = vpop.f32.mrb[0].mxu0
        %1046 = vmatprep.mubr.bf16.mxu0 0
        %1047 = vmatmul.mubr.bf16.gmra.mrb[0].mxu0 %v990
        %v1048 = vpop.f32.mrb[0].mxu0
        %v1049 = vadd.f32 0.0, %v1048
        %v1050 = vpop.f32.mrb[0].mxu0
        %v1051 = vpop.f32.mrb[0].mxu0
        %v1052 = vadd.f32 0.0, %v1051
        %v1053 = vpop.f32.mrb[0].mxu0
        %1054 = vmatprep.mubr.bf16.mxu0 0
        %1055 = vmatmul.mubr.bf16.gmra.mrb[0].mxu0 %v993
        %v1056 = vpop.f32.mrb[0].mxu0
        %v1057 = vadd.f32 0.0, %v1056
        %v1058 = vpop.f32.mrb[0].mxu0
        %v1059 = vpop.f32.mrb[0].mxu0
        %v1060 = vadd.f32 0.0, %v1059
        %v1061 = vpop.f32.mrb[0].mxu0
        %1062 = vdwg.mxu0
        %v1063 = vadd.f32 %v961, %v1033
        %v1064 = vadd.f32 %v962, %v1036
        %v1065 = vadd.f32 %v963, %v1041
        %v1066 = vadd.f32 %v964, %v1044
        %v1067 = vadd.f32 %v965, %v1049
        %v1068 = vadd.f32 %v966, %v1052
        %v1069 = vadd.f32 %v967, %v1057
        %v1070 = vadd.f32 %v968, %v1060
        %s1071 = scalar_lea.vmem [#allocation2], 216
        %v1072 = vld [vmem:[%s1071 + $0x7] sm:$0xff]
        %v1073 = vld [vmem:[%s1071 + $0x1f] sm:$0xff]
        %v1074 = vld [vmem:[%s1071 + $0x37] sm:$0xff]
        %v1075 = vld [vmem:[%s1071 + $0x4f] sm:$0xff]
        %v1076 = vld [vmem:[%s1071 + $0x67] sm:$0xff]
        %v1077 = vld [vmem:[%s1071 + $0x7f] sm:$0xff]
        %v1078 = vld [vmem:[%s1071 + $0x97] sm:$0xff]
        %v1079 = vld [vmem:[%s1071 + $0xaf] sm:$0xff]
        %v1080 = vpack.c.bf16 %v1073, %v1072
        %v1081 = vpack.c.bf16 %v1075, %v1074
        %v1082 = vpack.c.bf16 %v1077, %v1076
        %v1083 = vpack.c.bf16 %v1079, %v1078
        %s1084 = scalar_lea.vmem %s333, 24 [#allocation6]
        %v1085 = vld [vmem:[%s1084] sm:$0xf]
        %v1087 = vsel %vm412, %v1080, 0
        %v1090 = vsel %vm412, %v1081, 0
        %v1093 = vsel %vm412, %v1082, 0
        %v1096 = vsel %vm412, %v1083, 0
        %v1099 = vsel %vm514, %v1085, 0
        %1101 = vmatprep.subr.bf16.mxu0 0
        %1102 = vmatpush1.bf16.msra.mxu0 %v1099
        %1103 = vmatprep.subr.bf16.mxu0 0
        %1104 = vmatpush1.bf16.msra.mxu0 0
        %1105 = vmatprep.subr.bf16.mxu0 0
        %1106 = vmatpush1.bf16.msra.mxu0 0
        %1107 = vmatprep.subr.bf16.mxu0 0
        %1108 = vmatpush1.bf16.msra.mxu0 0
        %1109 = vmatprep.subr.bf16.mxu0 0
        %1110 = vmatpush1.bf16.msra.mxu0 0
        %1111 = vmatprep.subr.bf16.mxu0 0
        %1112 = vmatpush1.bf16.msra.mxu0 0
        %1113 = vmatprep.subr.bf16.mxu0 0
        %1114 = vmatpush1.bf16.msra.mxu0 0
        %1115 = vmatprep.subr.bf16.mxu0 0
        %1116 = vmatpush1.bf16.msra.mxu0 0
        %1117 = vmatprep.subr.bf16.mxu0 0
        %1118 = vmatpush1.bf16.msra.mxu0 0
        %1119 = vmatprep.subr.bf16.mxu0 0
        %1120 = vmatpush1.bf16.msra.mxu0 0
        %1121 = vmatprep.subr.bf16.mxu0 0
        %1122 = vmatpush1.bf16.msra.mxu0 0
        %1123 = vmatprep.subr.bf16.mxu0 0
        %1124 = vmatpush1.bf16.msra.mxu0 0
        %1125 = vmatprep.subr.bf16.mxu0 0
        %1126 = vmatpush1.bf16.msra.mxu0 0
        %1127 = vmatprep.subr.bf16.mxu0 0
        %1128 = vmatpush1.bf16.msra.mxu0 0
        %1129 = vmatprep.subr.bf16.mxu0 0
        %1130 = vmatpush1.bf16.msra.mxu0 0
        %1131 = vmatprep.subr.bf16.mxu0 0
        %1132 = vmatpush1.bf16.msra.mxu0 0
        %1133 = vmatprep.mubr.bf16.mxu0 0
        %1134 = vmatmul.mubr.bf16.gmra.mrb[0].mxu0 %v1087
        %v1135 = vpop.f32.mrb[0].mxu0
        %v1136 = vadd.f32 0.0, %v1135
        %v1137 = vpop.f32.mrb[0].mxu0
        %v1138 = vpop.f32.mrb[0].mxu0
        %v1139 = vadd.f32 0.0, %v1138
        %v1140 = vpop.f32.mrb[0].mxu0
        %1141 = vmatprep.mubr.bf16.mxu0 0
        %1142 = vmatmul.mubr.bf16.gmra.mrb[0].mxu0 %v1090
        %v1143 = vpop.f32.mrb[0].mxu0
        %v1144 = vadd.f32 0.0, %v1143
        %v1145 = vpop.f32.mrb[0].mxu0
        %v1146 = vpop.f32.mrb[0].mxu0
        %v1147 = vadd.f32 0.0, %v1146
        %v1148 = vpop.f32.mrb[0].mxu0
        %1149 = vmatprep.mubr.bf16.mxu0 0
        %1150 = vmatmul.mubr.bf16.gmra.mrb[0].mxu0 %v1093
        %v1151 = vpop.f32.mrb[0].mxu0
        %v1152 = vadd.f32 0.0, %v1151
        %v1153 = vpop.f32.mrb[0].mxu0
        %v1154 = vpop.f32.mrb[0].mxu0
        %v1155 = vadd.f32 0.0, %v1154
        %v1156 = vpop.f32.mrb[0].mxu0
        %1157 = vmatprep.mubr.bf16.mxu0 0
        %1158 = vmatmul.mubr.bf16.gmra.mrb[0].mxu0 %v1096
        %v1159 = vpop.f32.mrb[0].mxu0
        %v1160 = vadd.f32 0.0, %v1159
        %v1161 = vpop.f32.mrb[0].mxu0
        %v1162 = vpop.f32.mrb[0].mxu0
        %v1163 = vadd.f32 0.0, %v1162
        %v1164 = vpop.f32.mrb[0].mxu0
        %1165 = vdwg.mxu0
        %v1166 = vadd.f32 %v1063, %v1136
        %v1167 = vadd.f32 %v1064, %v1139
        %v1168 = vadd.f32 %v1065, %v1144
        %v1169 = vadd.f32 %v1066, %v1147
        %v1170 = vadd.f32 %v1067, %v1152
        %v1171 = vadd.f32 %v1068, %v1155
        %v1172 = vadd.f32 %v1069, %v1160
        %v1173 = vadd.f32 %v1070, %v1163
        %v1174 = vld [vmem:[%s1071 + $0x8] sm:$0xff]
        %v1175 = vld [vmem:[%s1071 + $0x20] sm:$0xff]
        %v1176 = vld [vmem:[%s1071 + $0x38] sm:$0xff]
        %v1177 = vld [vmem:[%s1071 + $0x50] sm:$0xff]
        %v1178 = vld [vmem:[%s1071 + $0x68] sm:$0xff]
        %v1179 = vld [vmem:[%s1071 + $0x80] sm:$0xff]
        %v1180 = vld [vmem:[%s1071 + $0x98] sm:$0xff]
        %v1181 = vld [vmem:[%s1071 + $0xb0] sm:$0xff]
        %v1182 = vpack.c.bf16 %v1175, %v1174
        %v1183 = vpack.c.bf16 %v1177, %v1176
        %v1184 = vpack.c.bf16 %v1179, %v1178
        %v1185 = vpack.c.bf16 %v1181, %v1180
        %s1186 = scalar_lea.vmem %s333, 28 [#allocation6]
        %v1187 = vld [vmem:[%s1186] sm:$0xf]
        %v1189 = vsel %vm412, %v1182, 0
        %v1192 = vsel %vm412, %v1183, 0
        %v1195 = vsel %vm412, %v1184, 0
        %v1198 = vsel %vm412, %v1185, 0
        %v1201 = vsel %vm514, %v1187, 0
        %1203 = vmatprep.subr.bf16.mxu0 0
        %1204 = vmatpush1.bf16.msra.mxu0 %v1201
        %1205 = vmatprep.subr.bf16.mxu0 0
        %1206 = vmatpush1.bf16.msra.mxu0 0
        %1207 = vmatprep.subr.bf16.mxu0 0
        %1208 = vmatpush1.bf16.msra.mxu0 0
        %1209 = vmatprep.subr.bf16.mxu0 0
        %1210 = vmatpush1.bf16.msra.mxu0 0
        %1211 = vmatprep.subr.bf16.mxu0 0
        %1212 = vmatpush1.bf16.msra.mxu0 0
        %1213 = vmatprep.subr.bf16.mxu0 0
        %1214 = vmatpush1.bf16.msra.mxu0 0
        %1215 = vmatprep.subr.bf16.mxu0 0
        %1216 = vmatpush1.bf16.msra.mxu0 0
        %1217 = vmatprep.subr.bf16.mxu0 0
        %1218 = vmatpush1.bf16.msra.mxu0 0
        %1219 = vmatprep.subr.bf16.mxu0 0
        %1220 = vmatpush1.bf16.msra.mxu0 0
        %1221 = vmatprep.subr.bf16.mxu0 0
        %1222 = vmatpush1.bf16.msra.mxu0 0
        %1223 = vmatprep.subr.bf16.mxu0 0
        %1224 = vmatpush1.bf16.msra.mxu0 0
        %1225 = vmatprep.subr.bf16.mxu0 0
        %1226 = vmatpush1.bf16.msra.mxu0 0
        %1227 = vmatprep.subr.bf16.mxu0 0
        %1228 = vmatpush1.bf16.msra.mxu0 0
        %1229 = vmatprep.subr.bf16.mxu0 0
        %1230 = vmatpush1.bf16.msra.mxu0 0
        %1231 = vmatprep.subr.bf16.mxu0 0
        %1232 = vmatpush1.bf16.msra.mxu0 0
        %1233 = vmatprep.subr.bf16.mxu0 0
        %1234 = vmatpush1.bf16.msra.mxu0 0
        %1235 = vmatprep.mubr.bf16.mxu0 0
        %1236 = vmatmul.mubr.bf16.gmra.mrb[0].mxu0 %v1189
        %v1237 = vpop.f32.mrb[0].mxu0
        %v1238 = vadd.f32 0.0, %v1237
        %v1239 = vpop.f32.mrb[0].mxu0
        %v1240 = vpop.f32.mrb[0].mxu0
        %v1241 = vadd.f32 0.0, %v1240
        %v1242 = vpop.f32.mrb[0].mxu0
        %1243 = vmatprep.mubr.bf16.mxu0 0
        %1244 = vmatmul.mubr.bf16.gmra.mrb[0].mxu0 %v1192
        %v1245 = vpop.f32.mrb[0].mxu0
        %v1246 = vadd.f32 0.0, %v1245
        %v1247 = vpop.f32.mrb[0].mxu0
        %v1248 = vpop.f32.mrb[0].mxu0
        %v1249 = vadd.f32 0.0, %v1248
        %v1250 = vpop.f32.mrb[0].mxu0
        %1251 = vmatprep.mubr.bf16.mxu0 0
        %1252 = vmatmul.mubr.bf16.gmra.mrb[0].mxu0 %v1195
        %v1253 = vpop.f32.mrb[0].mxu0
        %v1254 = vadd.f32 0.0, %v1253
        %v1255 = vpop.f32.mrb[0].mxu0
        %v1256 = vpop.f32.mrb[0].mxu0
        %v1257 = vadd.f32 0.0, %v1256
        %v1258 = vpop.f32.mrb[0].mxu0
        %1259 = vmatprep.mubr.bf16.mxu0 0
        %1260 = vmatmul.mubr.bf16.gmra.mrb[0].mxu0 %v1198
        %v1261 = vpop.f32.mrb[0].mxu0
        %v1262 = vadd.f32 0.0, %v1261
        %v1263 = vpop.f32.mrb[0].mxu0
        %v1264 = vpop.f32.mrb[0].mxu0
        %v1265 = vadd.f32 0.0, %v1264
        %v1266 = vpop.f32.mrb[0].mxu0
        %1267 = vdwg.mxu0
        %v1268 = vadd.f32 %v1166, %v1238
        %v1269 = vadd.f32 %v1167, %v1241
        %v1270 = vadd.f32 %v1168, %v1246
        %v1271 = vadd.f32 %v1169, %v1249
        %v1272 = vadd.f32 %v1170, %v1254
        %v1273 = vadd.f32 %v1171, %v1257
        %v1274 = vadd.f32 %v1172, %v1262
        %v1275 = vadd.f32 %v1173, %v1265
        %v1276 = vld [vmem:[%s1071 + $0x9] sm:$0xff]
        %v1277 = vld [vmem:[%s1071 + $0x21] sm:$0xff]
        %v1278 = vld [vmem:[%s1071 + $0x39] sm:$0xff]
        %v1279 = vld [vmem:[%s1071 + $0x51] sm:$0xff]
        %v1280 = vld [vmem:[%s1071 + $0x69] sm:$0xff]
        %v1281 = vld [vmem:[%s1071 + $0x81] sm:$0xff]
        %v1282 = vld [vmem:[%s1071 + $0x99] sm:$0xff]
        %v1283 = vld [vmem:[%s1071 + $0xb1] sm:$0xff]
        %v1284 = vpack.c.bf16 %v1277, %v1276
        %v1285 = vpack.c.bf16 %v1279, %v1278
        %v1286 = vpack.c.bf16 %v1281, %v1280
        %v1287 = vpack.c.bf16 %v1283, %v1282
        %s1288 = scalar_lea.vmem %s333, 32 [#allocation6]
        %v1289 = vld [vmem:[%s1288] sm:$0xf]
        %v1291 = vsel %vm412, %v1284, 0
        %v1294 = vsel %vm412, %v1285, 0
        %v1297 = vsel %vm412, %v1286, 0
        %v1300 = vsel %vm412, %v1287, 0
        %v1303 = vsel %vm514, %v1289, 0
        %1305 = vmatprep.subr.bf16.mxu0 0
        %1306 = vmatpush1.bf16.msra.mxu0 %v1303
        %1307 = vmatprep.subr.bf16.mxu0 0
        %1308 = vmatpush1.bf16.msra.mxu0 0
        %1309 = vmatprep.subr.bf16.mxu0 0
        %1310 = vmatpush1.bf16.msra.mxu0 0
        %1311 = vmatprep.subr.bf16.mxu0 0
        %1312 = vmatpush1.bf16.msra.mxu0 0
        %1313 = vmatprep.subr.bf16.mxu0 0
        %1314 = vmatpush1.bf16.msra.mxu0 0
        %1315 = vmatprep.subr.bf16.mxu0 0
        %1316 = vmatpush1.bf16.msra.mxu0 0
        %1317 = vmatprep.subr.bf16.mxu0 0
        %1318 = vmatpush1.bf16.msra.mxu0 0
        %1319 = vmatprep.subr.bf16.mxu0 0
        %1320 = vmatpush1.bf16.msra.mxu0 0
        %1321 = vmatprep.subr.bf16.mxu0 0
        %1322 = vmatpush1.bf16.msra.mxu0 0
        %1323 = vmatprep.subr.bf16.mxu0 0
        %1324 = vmatpush1.bf16.msra.mxu0 0
        %1325 = vmatprep.subr.bf16.mxu0 0
        %1326 = vmatpush1.bf16.msra.mxu0 0
        %1327 = vmatprep.subr.bf16.mxu0 0
        %1328 = vmatpush1.bf16.msra.mxu0 0
        %1329 = vmatprep.subr.bf16.mxu0 0
        %1330 = vmatpush1.bf16.msra.mxu0 0
        %1331 = vmatprep.subr.bf16.mxu0 0
        %1332 = vmatpush1.bf16.msra.mxu0 0
        %1333 = vmatprep.subr.bf16.mxu0 0
        %1334 = vmatpush1.bf16.msra.mxu0 0
        %1335 = vmatprep.subr.bf16.mxu0 0
        %1336 = vmatpush1.bf16.msra.mxu0 0
        %1337 = vmatprep.mubr.bf16.mxu0 0
        %1338 = vmatmul.mubr.bf16.gmra.mrb[0].mxu0 %v1291
        %v1339 = vpop.f32.mrb[0].mxu0
        %v1340 = vadd.f32 0.0, %v1339
        %v1341 = vpop.f32.mrb[0].mxu0
        %v1342 = vpop.f32.mrb[0].mxu0
        %v1343 = vadd.f32 0.0, %v1342
        %v1344 = vpop.f32.mrb[0].mxu0
        %1345 = vmatprep.mubr.bf16.mxu0 0
        %1346 = vmatmul.mubr.bf16.gmra.mrb[0].mxu0 %v1294
        %v1347 = vpop.f32.mrb[0].mxu0
        %v1348 = vadd.f32 0.0, %v1347
        %v1349 = vpop.f32.mrb[0].mxu0
        %v1350 = vpop.f32.mrb[0].mxu0
        %v1351 = vadd.f32 0.0, %v1350
        %v1352 = vpop.f32.mrb[0].mxu0
        %1353 = vmatprep.mubr.bf16.mxu0 0
        %1354 = vmatmul.mubr.bf16.gmra.mrb[0].mxu0 %v1297
        %v1355 = vpop.f32.mrb[0].mxu0
        %v1356 = vadd.f32 0.0, %v1355
        %v1357 = vpop.f32.mrb[0].mxu0
        %v1358 = vpop.f32.mrb[0].mxu0
        %v1359 = vadd.f32 0.0, %v1358
        %v1360 = vpop.f32.mrb[0].mxu0
        %1361 = vmatprep.mubr.bf16.mxu0 0
        %1362 = vmatmul.mubr.bf16.gmra.mrb[0].mxu0 %v1300
        %v1363 = vpop.f32.mrb[0].mxu0
        %v1364 = vadd.f32 0.0, %v1363
        %v1365 = vpop.f32.mrb[0].mxu0
        %v1366 = vpop.f32.mrb[0].mxu0
        %v1367 = vadd.f32 0.0, %v1366
        %v1368 = vpop.f32.mrb[0].mxu0
        %1369 = vdwg.mxu0
        %v1370 = vadd.f32 %v1268, %v1340
        %v1371 = vadd.f32 %v1269, %v1343
        %v1372 = vadd.f32 %v1270, %v1348
        %v1373 = vadd.f32 %v1271, %v1351
        %v1374 = vadd.f32 %v1272, %v1356
        %v1375 = vadd.f32 %v1273, %v1359
        %v1376 = vadd.f32 %v1274, %v1364
        %v1377 = vadd.f32 %v1275, %v1367
        %v1378 = vld [vmem:[%s341] sm:$0x1]
        %v1380 = vlaneseq
        %v1381 = vshrl.u32 %v1380, 7
        %v1382 = vsub.s32 0, %v1381
        %v1383 = vrot.slane %v1378, %v1382
        %v1385 = vadd.f32 %v1370, %v1383
        %v1386 = vadd.f32 %v1371, %v1383
        %v1387 = vadd.f32 %v1372, %v1383
        %v1388 = vadd.f32 %v1373, %v1383
        %v1389 = vadd.f32 %v1374, %v1383
        %v1390 = vadd.f32 %v1375, %v1383
        %v1391 = vadd.f32 %v1376, %v1383
        %v1392 = vadd.f32 %v1377, %v1383
        %vm1393 = vcmp.ge.f32.partialorder %v1385, 0.0
        %vm1394 = vcmp.ge.f32.partialorder %v1386, 0.0
        %vm1395 = vcmp.ge.f32.partialorder %v1387, 0.0
        %vm1396 = vcmp.ge.f32.partialorder %v1388, 0.0
        %vm1397 = vcmp.ge.f32.partialorder %v1389, 0.0
        %vm1398 = vcmp.ge.f32.partialorder %v1390, 0.0
        %vm1399 = vcmp.ge.f32.partialorder %v1391, 0.0
        %vm1400 = vcmp.ge.f32.partialorder %v1392, 0.0
        %v1401 = vmul.f32 %v1385, 0.1
        %v1402 = vmul.f32 %v1386, 0.1
        %v1403 = vmul.f32 %v1387, 0.1
        %v1404 = vmul.f32 %v1388, 0.1
        %v1405 = vmul.f32 %v1389, 0.1
        %v1406 = vmul.f32 %v1390, 0.1
        %v1407 = vmul.f32 %v1391, 0.1
        %v1408 = vmul.f32 %v1392, 0.1
        %v1409 = vsel %vm1393, %v1385, %v1401
        %v1410 = vsel %vm1394, %v1386, %v1402
        %v1411 = vsel %vm1395, %v1387, %v1403
        %v1412 = vsel %vm1396, %v1388, %v1404
        %v1413 = vsel %vm1397, %v1389, %v1405
        %v1414 = vsel %vm1398, %v1390, %v1406
        %v1415 = vsel %vm1399, %v1391, %v1407
        %v1416 = vsel %vm1400, %v1392, %v1408
        %1417 = vst.msk [vmem:[%s465 + $0x8] sm:$0xff] %vm412, %v1409
        %1418 = vst.msk [vmem:[%s465 + $0x20] sm:$0xff] %vm412, %v1410
        %1419 = vst.msk [vmem:[%s465 + $0x38] sm:$0xff] %vm412, %v1411
        %1420 = vst.msk [vmem:[%s465 + $0x50] sm:$0xff] %vm412, %v1412
        %1421 = vst.msk [vmem:[%s465 + $0x68] sm:$0xff] %vm412, %v1413
        %1422 = vst.msk [vmem:[%s465 + $0x80] sm:$0xff] %vm412, %v1414
        %1423 = vst.msk [vmem:[%s465 + $0x98] sm:$0xff] %vm412, %v1415
        %1424 = vst.msk [vmem:[%s465 + $0xb0] sm:$0xff] %vm412, %v1416
        %v1425 = vld [vmem:[%s474 + $0x7] sm:$0xff]
        %v1426 = vld [vmem:[%s474 + $0x1f] sm:$0xff]
        %v1427 = vld [vmem:[%s474 + $0x37] sm:$0xff]
        %v1428 = vld [vmem:[%s474 + $0x4f] sm:$0xff]
        %v1429 = vld [vmem:[%s474 + $0x67] sm:$0xff]
        %v1430 = vld [vmem:[%s474 + $0x7f] sm:$0xff]
        %v1431 = vld [vmem:[%s474 + $0x97] sm:$0xff]
        %v1432 = vld [vmem:[%s474 + $0xaf] sm:$0xff]
        %v1433 = vpack.c.bf16 %v1426, %v1425
        %v1434 = vpack.c.bf16 %v1428, %v1427
        %v1435 = vpack.c.bf16 %v1430, %v1429
        %v1436 = vpack.c.bf16 %v1432, %v1431
        %v1437 = vld [vmem:[%s350] sm:$0xf]
        %v1438 = vld [vmem:[%s474 + $0x8] sm:$0xff]
        %v1439 = vld [vmem:[%s474 + $0x20] sm:$0xff]
        %v1440 = vld [vmem:[%s474 + $0x38] sm:$0xff]
        %v1441 = vld [vmem:[%s474 + $0x50] sm:$0xff]
        %v1442 = vld [vmem:[%s474 + $0x68] sm:$0xff]
        %v1443 = vld [vmem:[%s474 + $0x80] sm:$0xff]
        %v1444 = vld [vmem:[%s474 + $0x98] sm:$0xff]
        %v1445 = vld [vmem:[%s474 + $0xb0] sm:$0xff]
        %v1446 = vpack.c.bf16 %v1439, %v1438
        %v1447 = vpack.c.bf16 %v1441, %v1440
        %v1448 = vpack.c.bf16 %v1443, %v1442
        %v1449 = vpack.c.bf16 %v1445, %v1444
        %s1450 = scalar_lea.vmem %s350, 4 [#allocation9]
        %v1451 = vld [vmem:[%s1450] sm:$0xf]
        %v1453 = vsel %vm412, %v1446, 0
        %v1456 = vsel %vm412, %v1447, 0
        %v1459 = vsel %vm412, %v1448, 0
        %v1462 = vsel %vm412, %v1449, 0
        %v1465 = vsel %vm514, %v1451, 0
        %1467 = vmatprep.subr.bf16.mxu0 0
        %1468 = vmatpush1.bf16.msra.mxu0 %v1465
        %1469 = vmatprep.subr.bf16.mxu0 0
        %1470 = vmatpush1.bf16.msra.mxu0 0
        %1471 = vmatprep.subr.bf16.mxu0 0
        %1472 = vmatpush1.bf16.msra.mxu0 0
        %1473 = vmatprep.subr.bf16.mxu0 0
        %1474 = vmatpush1.bf16.msra.mxu0 0
        %1475 = vmatprep.subr.bf16.mxu0 0
        %1476 = vmatpush1.bf16.msra.mxu0 0
        %1477 = vmatprep.subr.bf16.mxu0 0
        %1478 = vmatpush1.bf16.msra.mxu0 0
        %1479 = vmatprep.subr.bf16.mxu0 0
        %1480 = vmatpush1.bf16.msra.mxu0 0
        %1481 = vmatprep.subr.bf16.mxu0 0
        %1482 = vmatpush1.bf16.msra.mxu0 0
        %1483 = vmatprep.subr.bf16.mxu0 0
        %1484 = vmatpush1.bf16.msra.mxu0 0
        %1485 = vmatprep.subr.bf16.mxu0 0
        %1486 = vmatpush1.bf16.msra.mxu0 0
        %1487 = vmatprep.subr.bf16.mxu0 0
        %1488 = vmatpush1.bf16.msra.mxu0 0
        %1489 = vmatprep.subr.bf16.mxu0 0
        %1490 = vmatpush1.bf16.msra.mxu0 0
        %1491 = vmatprep.subr.bf16.mxu0 0
        %1492 = vmatpush1.bf16.msra.mxu0 0
        %1493 = vmatprep.subr.bf16.mxu0 0
        %1494 = vmatpush1.bf16.msra.mxu0 0
        %1495 = vmatprep.subr.bf16.mxu0 0
        %1496 = vmatpush1.bf16.msra.mxu0 0
        %1497 = vmatprep.subr.bf16.mxu0 0
        %1498 = vmatpush1.bf16.msra.mxu0 0
        %1499 = vmatprep.mubr.bf16.mxu0 0
        %1500 = vmatmul.mubr.bf16.gmra.mrb[0].mxu0 %v1453
        %v1501 = vpop.f32.mrb[0].mxu0
        %v1502 = vadd.f32 0.0, %v1501
        %v1503 = vpop.f32.mrb[0].mxu0
        %v1504 = vpop.f32.mrb[0].mxu0
        %v1505 = vadd.f32 0.0, %v1504
        %v1506 = vpop.f32.mrb[0].mxu0
        %1507 = vmatprep.mubr.bf16.mxu0 0
        %1508 = vmatmul.mubr.bf16.gmra.mrb[0].mxu0 %v1456
        %v1509 = vpop.f32.mrb[0].mxu0
        %v1510 = vadd.f32 0.0, %v1509
        %v1511 = vpop.f32.mrb[0].mxu0
        %v1512 = vpop.f32.mrb[0].mxu0
        %v1513 = vadd.f32 0.0, %v1512
        %v1514 = vpop.f32.mrb[0].mxu0
        %1515 = vmatprep.mubr.bf16.mxu0 0
        %1516 = vmatmul.mubr.bf16.gmra.mrb[0].mxu0 %v1459
        %v1517 = vpop.f32.mrb[0].mxu0
        %v1518 = vadd.f32 0.0, %v1517
        %v1519 = vpop.f32.mrb[0].mxu0
        %v1520 = vpop.f32.mrb[0].mxu0
        %v1521 = vadd.f32 0.0, %v1520
        %v1522 = vpop.f32.mrb[0].mxu0
        %1523 = vmatprep.mubr.bf16.mxu0 0
        %1524 = vmatmul.mubr.bf16.gmra.mrb[0].mxu0 %v1462
        %v1525 = vpop.f32.mrb[0].mxu0
        %v1526 = vadd.f32 0.0, %v1525
        %v1527 = vpop.f32.mrb[0].mxu0
        %v1528 = vpop.f32.mrb[0].mxu0
        %v1529 = vadd.f32 0.0, %v1528
        %v1530 = vpop.f32.mrb[0].mxu0
        %1531 = vdwg.mxu0
        %v1533 = vsel %vm412, %v1433, 0
        %v1536 = vsel %vm412, %v1434, 0
        %v1539 = vsel %vm412, %v1435, 0
        %v1542 = vsel %vm412, %v1436, 0
        %v1545 = vsel %vm514, %v1437, 0
        %1547 = vmatprep.subr.bf16.mxu0 0
        %1548 = vmatpush1.bf16.msra.mxu0 %v1545
        %1549 = vmatprep.subr.bf16.mxu0 0
        %1550 = vmatpush1.bf16.msra.mxu0 0
        %1551 = vmatprep.subr.bf16.mxu0 0
        %1552 = vmatpush1.bf16.msra.mxu0 0
        %1553 = vmatprep.subr.bf16.mxu0 0
        %1554 = vmatpush1.bf16.msra.mxu0 0
        %1555 = vmatprep.subr.bf16.mxu0 0
        %1556 = vmatpush1.bf16.msra.mxu0 0
        %1557 = vmatprep.subr.bf16.mxu0 0
        %1558 = vmatpush1.bf16.msra.mxu0 0
        %1559 = vmatprep.subr.bf16.mxu0 0
        %1560 = vmatpush1.bf16.msra.mxu0 0
        %1561 = vmatprep.subr.bf16.mxu0 0
        %1562 = vmatpush1.bf16.msra.mxu0 0
        %1563 = vmatprep.subr.bf16.mxu0 0
        %1564 = vmatpush1.bf16.msra.mxu0 0
        %1565 = vmatprep.subr.bf16.mxu0 0
        %1566 = vmatpush1.bf16.msra.mxu0 0
        %1567 = vmatprep.subr.bf16.mxu0 0
        %1568 = vmatpush1.bf16.msra.mxu0 0
        %1569 = vmatprep.subr.bf16.mxu0 0
        %1570 = vmatpush1.bf16.msra.mxu0 0
        %1571 = vmatprep.subr.bf16.mxu0 0
        %1572 = vmatpush1.bf16.msra.mxu0 0
        %1573 = vmatprep.subr.bf16.mxu0 0
        %1574 = vmatpush1.bf16.msra.mxu0 0
        %1575 = vmatprep.subr.bf16.mxu0 0
        %1576 = vmatpush1.bf16.msra.mxu0 0
        %1577 = vmatprep.subr.bf16.mxu0 0
        %1578 = vmatpush1.bf16.msra.mxu0 0
        %1579 = vmatprep.mubr.bf16.mxu0 0
        %1580 = vmatmul.mubr.bf16.gmra.mrb[0].mxu0 %v1533
        %v1581 = vpop.f32.mrb[0].mxu0
        %v1582 = vadd.f32 %v1502, %v1581
        %v1583 = vpop.f32.mrb[0].mxu0
        %v1584 = vpop.f32.mrb[0].mxu0
        %v1585 = vadd.f32 %v1505, %v1584
        %v1586 = vpop.f32.mrb[0].mxu0
        %1587 = vmatprep.mubr.bf16.mxu0 0
        %1588 = vmatmul.mubr.bf16.gmra.mrb[0].mxu0 %v1536
        %v1589 = vpop.f32.mrb[0].mxu0
        %v1590 = vadd.f32 %v1510, %v1589
        %v1591 = vpop.f32.mrb[0].mxu0
        %v1592 = vpop.f32.mrb[0].mxu0
        %v1593 = vadd.f32 %v1513, %v1592
        %v1594 = vpop.f32.mrb[0].mxu0
        %1595 = vmatprep.mubr.bf16.mxu0 0
        %1596 = vmatmul.mubr.bf16.gmra.mrb[0].mxu0 %v1539
        %v1597 = vpop.f32.mrb[0].mxu0
        %v1598 = vadd.f32 %v1518, %v1597
        %v1599 = vpop.f32.mrb[0].mxu0
        %v1600 = vpop.f32.mrb[0].mxu0
        %v1601 = vadd.f32 %v1521, %v1600
        %v1602 = vpop.f32.mrb[0].mxu0
        %1603 = vmatprep.mubr.bf16.mxu0 0
        %1604 = vmatmul.mubr.bf16.gmra.mrb[0].mxu0 %v1542
        %v1605 = vpop.f32.mrb[0].mxu0
        %v1606 = vadd.f32 %v1526, %v1605
        %v1607 = vpop.f32.mrb[0].mxu0
        %v1608 = vpop.f32.mrb[0].mxu0
        %v1609 = vadd.f32 %v1529, %v1608
        %v1610 = vpop.f32.mrb[0].mxu0
        %1611 = vdwg.mxu0
        %v1612 = vld [vmem:[%s474 + $0x9] sm:$0xff]
        %v1613 = vld [vmem:[%s474 + $0x21] sm:$0xff]
        %v1614 = vld [vmem:[%s474 + $0x39] sm:$0xff]
        %v1615 = vld [vmem:[%s474 + $0x51] sm:$0xff]
        %v1616 = vld [vmem:[%s474 + $0x69] sm:$0xff]
        %v1617 = vld [vmem:[%s474 + $0x81] sm:$0xff]
        %v1618 = vld [vmem:[%s474 + $0x99] sm:$0xff]
        %v1619 = vld [vmem:[%s474 + $0xb1] sm:$0xff]
        %v1620 = vpack.c.bf16 %v1613, %v1612
        %v1621 = vpack.c.bf16 %v1615, %v1614
        %v1622 = vpack.c.bf16 %v1617, %v1616
        %v1623 = vpack.c.bf16 %v1619, %v1618
        %s1624 = scalar_lea.vmem %s350, 8 [#allocation9]
        %v1625 = vld [vmem:[%s1624] sm:$0xf]
        %v1627 = vsel %vm412, %v1620, 0
        %v1630 = vsel %vm412, %v1621, 0
        %v1633 = vsel %vm412, %v1622, 0
        %v1636 = vsel %vm412, %v1623, 0
        %v1639 = vsel %vm514, %v1625, 0
        %1641 = vmatprep.subr.bf16.mxu0 0
        %1642 = vmatpush1.bf16.msra.mxu0 %v1639
        %1643 = vmatprep.subr.bf16.mxu0 0
        %1644 = vmatpush1.bf16.msra.mxu0 0
        %1645 = vmatprep.subr.bf16.mxu0 0
        %1646 = vmatpush1.bf16.msra.mxu0 0
        %1647 = vmatprep.subr.bf16.mxu0 0
        %1648 = vmatpush1.bf16.msra.mxu0 0
        %1649 = vmatprep.subr.bf16.mxu0 0
        %1650 = vmatpush1.bf16.msra.mxu0 0
        %1651 = vmatprep.subr.bf16.mxu0 0
        %1652 = vmatpush1.bf16.msra.mxu0 0
        %1653 = vmatprep.subr.bf16.mxu0 0
        %1654 = vmatpush1.bf16.msra.mxu0 0
        %1655 = vmatprep.subr.bf16.mxu0 0
        %1656 = vmatpush1.bf16.msra.mxu0 0
        %1657 = vmatprep.subr.bf16.mxu0 0
        %1658 = vmatpush1.bf16.msra.mxu0 0
        %1659 = vmatprep.subr.bf16.mxu0 0
        %1660 = vmatpush1.bf16.msra.mxu0 0
        %1661 = vmatprep.subr.bf16.mxu0 0
        %1662 = vmatpush1.bf16.msra.mxu0 0
        %1663 = vmatprep.subr.bf16.mxu0 0
        %1664 = vmatpush1.bf16.msra.mxu0 0
        %1665 = vmatprep.subr.bf16.mxu0 0
        %1666 = vmatpush1.bf16.msra.mxu0 0
        %1667 = vmatprep.subr.bf16.mxu0 0
        %1668 = vmatpush1.bf16.msra.mxu0 0
        %1669 = vmatprep.subr.bf16.mxu0 0
        %1670 = vmatpush1.bf16.msra.mxu0 0
        %1671 = vmatprep.subr.bf16.mxu0 0
        %1672 = vmatpush1.bf16.msra.mxu0 0
        %1673 = vmatprep.mubr.bf16.mxu0 0
        %1674 = vmatmul.mubr.bf16.gmra.mrb[0].mxu0 %v1627
        %v1675 = vpop.f32.mrb[0].mxu0
        %v1676 = vadd.f32 0.0, %v1675
        %v1677 = vpop.f32.mrb[0].mxu0
        %v1678 = vpop.f32.mrb[0].mxu0
        %v1679 = vadd.f32 0.0, %v1678
        %v1680 = vpop.f32.mrb[0].mxu0
        %1681 = vmatprep.mubr.bf16.mxu0 0
        %1682 = vmatmul.mubr.bf16.gmra.mrb[0].mxu0 %v1630
        %v1683 = vpop.f32.mrb[0].mxu0
        %v1684 = vadd.f32 0.0, %v1683
        %v1685 = vpop.f32.mrb[0].mxu0
        %v1686 = vpop.f32.mrb[0].mxu0
        %v1687 = vadd.f32 0.0, %v1686
        %v1688 = vpop.f32.mrb[0].mxu0
        %1689 = vmatprep.mubr.bf16.mxu0 0
        %1690 = vmatmul.mubr.bf16.gmra.mrb[0].mxu0 %v1633
        %v1691 = vpop.f32.mrb[0].mxu0
        %v1692 = vadd.f32 0.0, %v1691
        %v1693 = vpop.f32.mrb[0].mxu0
        %v1694 = vpop.f32.mrb[0].mxu0
        %v1695 = vadd.f32 0.0, %v1694
        %v1696 = vpop.f32.mrb[0].mxu0
        %1697 = vmatprep.mubr.bf16.mxu0 0
        %1698 = vmatmul.mubr.bf16.gmra.mrb[0].mxu0 %v1636
        %v1699 = vpop.f32.mrb[0].mxu0
        %v1700 = vadd.f32 0.0, %v1699
        %v1701 = vpop.f32.mrb[0].mxu0
        %v1702 = vpop.f32.mrb[0].mxu0
        %v1703 = vadd.f32 0.0, %v1702
        %v1704 = vpop.f32.mrb[0].mxu0
        %1705 = vdwg.mxu0
        %v1706 = vadd.f32 %v1582, %v1676
        %v1707 = vadd.f32 %v1585, %v1679
        %v1708 = vadd.f32 %v1590, %v1684
        %v1709 = vadd.f32 %v1593, %v1687
        %v1710 = vadd.f32 %v1598, %v1692
        %v1711 = vadd.f32 %v1601, %v1695
        %v1712 = vadd.f32 %v1606, %v1700
        %v1713 = vadd.f32 %v1609, %v1703
        %v1714 = vld [vmem:[%s465 + $0x7] sm:$0xff]
        %v1715 = vld [vmem:[%s465 + $0x1f] sm:$0xff]
        %v1716 = vld [vmem:[%s465 + $0x37] sm:$0xff]
        %v1717 = vld [vmem:[%s465 + $0x4f] sm:$0xff]
        %v1718 = vld [vmem:[%s465 + $0x67] sm:$0xff]
        %v1719 = vld [vmem:[%s465 + $0x7f] sm:$0xff]
        %v1720 = vld [vmem:[%s465 + $0x97] sm:$0xff]
        %v1721 = vld [vmem:[%s465 + $0xaf] sm:$0xff]
        %v1722 = vpack.c.bf16 %v1715, %v1714
        %v1723 = vpack.c.bf16 %v1717, %v1716
        %v1724 = vpack.c.bf16 %v1719, %v1718
        %v1725 = vpack.c.bf16 %v1721, %v1720
        %s1726 = scalar_lea.vmem %s350, 12 [#allocation9]
        %v1727 = vld [vmem:[%s1726] sm:$0xf]
        %v1729 = vsel %vm412, %v1722, 0
        %v1732 = vsel %vm412, %v1723, 0
        %v1735 = vsel %vm412, %v1724, 0
        %v1738 = vsel %vm412, %v1725, 0
        %v1741 = vsel %vm514, %v1727, 0
        %1743 = vmatprep.subr.bf16.mxu0 0
        %1744 = vmatpush1.bf16.msra.mxu0 %v1741
        %1745 = vmatprep.subr.bf16.mxu0 0
        %1746 = vmatpush1.bf16.msra.mxu0 0
        %1747 = vmatprep.subr.bf16.mxu0 0
        %1748 = vmatpush1.bf16.msra.mxu0 0
        %1749 = vmatprep.subr.bf16.mxu0 0
        %1750 = vmatpush1.bf16.msra.mxu0 0
        %1751 = vmatprep.subr.bf16.mxu0 0
        %1752 = vmatpush1.bf16.msra.mxu0 0
        %1753 = vmatprep.subr.bf16.mxu0 0
        %1754 = vmatpush1.bf16.msra.mxu0 0
        %1755 = vmatprep.subr.bf16.mxu0 0
        %1756 = vmatpush1.bf16.msra.mxu0 0
        %1757 = vmatprep.subr.bf16.mxu0 0
        %1758 = vmatpush1.bf16.msra.mxu0 0
        %1759 = vmatprep.subr.bf16.mxu0 0
        %1760 = vmatpush1.bf16.msra.mxu0 0
        %1761 = vmatprep.subr.bf16.mxu0 0
        %1762 = vmatpush1.bf16.msra.mxu0 0
        %1763 = vmatprep.subr.bf16.mxu0 0
        %1764 = vmatpush1.bf16.msra.mxu0 0
        %1765 = vmatprep.subr.bf16.mxu0 0
        %1766 = vmatpush1.bf16.msra.mxu0 0
        %1767 = vmatprep.subr.bf16.mxu0 0
        %1768 = vmatpush1.bf16.msra.mxu0 0
        %1769 = vmatprep.subr.bf16.mxu0 0
        %1770 = vmatpush1.bf16.msra.mxu0 0
        %1771 = vmatprep.subr.bf16.mxu0 0
        %1772 = vmatpush1.bf16.msra.mxu0 0
        %1773 = vmatprep.subr.bf16.mxu0 0
        %1774 = vmatpush1.bf16.msra.mxu0 0
        %1775 = vmatprep.mubr.bf16.mxu0 0
        %1776 = vmatmul.mubr.bf16.gmra.mrb[0].mxu0 %v1729
        %v1777 = vpop.f32.mrb[0].mxu0
        %v1778 = vadd.f32 0.0, %v1777
        %v1779 = vpop.f32.mrb[0].mxu0
        %v1780 = vpop.f32.mrb[0].mxu0
        %v1781 = vadd.f32 0.0, %v1780
        %v1782 = vpop.f32.mrb[0].mxu0
        %1783 = vmatprep.mubr.bf16.mxu0 0
        %1784 = vmatmul.mubr.bf16.gmra.mrb[0].mxu0 %v1732
        %v1785 = vpop.f32.mrb[0].mxu0
        %v1786 = vadd.f32 0.0, %v1785
        %v1787 = vpop.f32.mrb[0].mxu0
        %v1788 = vpop.f32.mrb[0].mxu0
        %v1789 = vadd.f32 0.0, %v1788
        %v1790 = vpop.f32.mrb[0].mxu0
        %1791 = vmatprep.mubr.bf16.mxu0 0
        %1792 = vmatmul.mubr.bf16.gmra.mrb[0].mxu0 %v1735
        %v1793 = vpop.f32.mrb[0].mxu0
        %v1794 = vadd.f32 0.0, %v1793
        %v1795 = vpop.f32.mrb[0].mxu0
        %v1796 = vpop.f32.mrb[0].mxu0
        %v1797 = vadd.f32 0.0, %v1796
        %v1798 = vpop.f32.mrb[0].mxu0
        %1799 = vmatprep.mubr.bf16.mxu0 0
        %1800 = vmatmul.mubr.bf16.gmra.mrb[0].mxu0 %v1738
        %v1801 = vpop.f32.mrb[0].mxu0
        %v1802 = vadd.f32 0.0, %v1801
        %v1803 = vpop.f32.mrb[0].mxu0
        %v1804 = vpop.f32.mrb[0].mxu0
        %v1805 = vadd.f32 0.0, %v1804
        %v1806 = vpop.f32.mrb[0].mxu0
        %1807 = vdwg.mxu0
        %v1808 = vadd.f32 %v1706, %v1778
        %v1809 = vadd.f32 %v1707, %v1781
        %v1810 = vadd.f32 %v1708, %v1786
        %v1811 = vadd.f32 %v1709, %v1789
        %v1812 = vadd.f32 %v1710, %v1794
        %v1813 = vadd.f32 %v1711, %v1797
        %v1814 = vadd.f32 %v1712, %v1802
        %v1815 = vadd.f32 %v1713, %v1805
        %v1816 = vld [vmem:[%s465 + $0x8] sm:$0xff]
        %v1817 = vld [vmem:[%s465 + $0x20] sm:$0xff]
        %v1818 = vld [vmem:[%s465 + $0x38] sm:$0xff]
        %v1819 = vld [vmem:[%s465 + $0x50] sm:$0xff]
        %v1820 = vld [vmem:[%s465 + $0x68] sm:$0xff]
        %v1821 = vld [vmem:[%s465 + $0x80] sm:$0xff]
        %v1822 = vld [vmem:[%s465 + $0x98] sm:$0xff]
        %v1823 = vld [vmem:[%s465 + $0xb0] sm:$0xff]
        %v1824 = vpack.c.bf16 %v1817, %v1816
        %v1825 = vpack.c.bf16 %v1819, %v1818
        %v1826 = vpack.c.bf16 %v1821, %v1820
        %v1827 = vpack.c.bf16 %v1823, %v1822
        %s1828 = scalar_lea.vmem %s350, 16 [#allocation9]
        %v1829 = vld [vmem:[%s1828] sm:$0xf]
        %v1831 = vsel %vm412, %v1824, 0
        %v1834 = vsel %vm412, %v1825, 0
        %v1837 = vsel %vm412, %v1826, 0
        %v1840 = vsel %vm412, %v1827, 0
        %v1843 = vsel %vm514, %v1829, 0
        %1845 = vmatprep.subr.bf16.mxu0 0
        %1846 = vmatpush1.bf16.msra.mxu0 %v1843
        %1847 = vmatprep.subr.bf16.mxu0 0
        %1848 = vmatpush1.bf16.msra.mxu0 0
        %1849 = vmatprep.subr.bf16.mxu0 0
        %1850 = vmatpush1.bf16.msra.mxu0 0
        %1851 = vmatprep.subr.bf16.mxu0 0
        %1852 = vmatpush1.bf16.msra.mxu0 0
        %1853 = vmatprep.subr.bf16.mxu0 0
        %1854 = vmatpush1.bf16.msra.mxu0 0
        %1855 = vmatprep.subr.bf16.mxu0 0
        %1856 = vmatpush1.bf16.msra.mxu0 0
        %1857 = vmatprep.subr.bf16.mxu0 0
        %1858 = vmatpush1.bf16.msra.mxu0 0
        %1859 = vmatprep.subr.bf16.mxu0 0
        %1860 = vmatpush1.bf16.msra.mxu0 0
        %1861 = vmatprep.subr.bf16.mxu0 0
        %1862 = vmatpush1.bf16.msra.mxu0 0
        %1863 = vmatprep.subr.bf16.mxu0 0
        %1864 = vmatpush1.bf16.msra.mxu0 0
        %1865 = vmatprep.subr.bf16.mxu0 0
        %1866 = vmatpush1.bf16.msra.mxu0 0
        %1867 = vmatprep.subr.bf16.mxu0 0
        %1868 = vmatpush1.bf16.msra.mxu0 0
        %1869 = vmatprep.subr.bf16.mxu0 0
        %1870 = vmatpush1.bf16.msra.mxu0 0
        %1871 = vmatprep.subr.bf16.mxu0 0
        %1872 = vmatpush1.bf16.msra.mxu0 0
        %1873 = vmatprep.subr.bf16.mxu0 0
        %1874 = vmatpush1.bf16.msra.mxu0 0
        %1875 = vmatprep.subr.bf16.mxu0 0
        %1876 = vmatpush1.bf16.msra.mxu0 0
        %1877 = vmatprep.mubr.bf16.mxu0 0
        %1878 = vmatmul.mubr.bf16.gmra.mrb[0].mxu0 %v1831
        %v1879 = vpop.f32.mrb[0].mxu0
        %v1880 = vadd.f32 0.0, %v1879
        %v1881 = vpop.f32.mrb[0].mxu0
        %v1882 = vpop.f32.mrb[0].mxu0
        %v1883 = vadd.f32 0.0, %v1882
        %v1884 = vpop.f32.mrb[0].mxu0
        %1885 = vmatprep.mubr.bf16.mxu0 0
        %1886 = vmatmul.mubr.bf16.gmra.mrb[0].mxu0 %v1834
        %v1887 = vpop.f32.mrb[0].mxu0
        %v1888 = vadd.f32 0.0, %v1887
        %v1889 = vpop.f32.mrb[0].mxu0
        %v1890 = vpop.f32.mrb[0].mxu0
        %v1891 = vadd.f32 0.0, %v1890
        %v1892 = vpop.f32.mrb[0].mxu0
        %1893 = vmatprep.mubr.bf16.mxu0 0
        %1894 = vmatmul.mubr.bf16.gmra.mrb[0].mxu0 %v1837
        %v1895 = vpop.f32.mrb[0].mxu0
        %v1896 = vadd.f32 0.0, %v1895
        %v1897 = vpop.f32.mrb[0].mxu0
        %v1898 = vpop.f32.mrb[0].mxu0
        %v1899 = vadd.f32 0.0, %v1898
        %v1900 = vpop.f32.mrb[0].mxu0
        %1901 = vmatprep.mubr.bf16.mxu0 0
        %1902 = vmatmul.mubr.bf16.gmra.mrb[0].mxu0 %v1840
        %v1903 = vpop.f32.mrb[0].mxu0
        %v1904 = vadd.f32 0.0, %v1903
        %v1905 = vpop.f32.mrb[0].mxu0
        %v1906 = vpop.f32.mrb[0].mxu0
        %v1907 = vadd.f32 0.0, %v1906
        %v1908 = vpop.f32.mrb[0].mxu0
        %1909 = vdwg.mxu0
        %v1910 = vadd.f32 %v1808, %v1880
        %v1911 = vadd.f32 %v1809, %v1883
        %v1912 = vadd.f32 %v1810, %v1888
        %v1913 = vadd.f32 %v1811, %v1891
        %v1914 = vadd.f32 %v1812, %v1896
        %v1915 = vadd.f32 %v1813, %v1899
        %v1916 = vadd.f32 %v1814, %v1904
        %v1917 = vadd.f32 %v1815, %v1907
        %v1918 = vld [vmem:[%s465 + $0x9] sm:$0xff]
        %v1919 = vld [vmem:[%s465 + $0x21] sm:$0xff]
        %v1920 = vld [vmem:[%s465 + $0x39] sm:$0xff]
        %v1921 = vld [vmem:[%s465 + $0x51] sm:$0xff]
        %v1922 = vld [vmem:[%s465 + $0x69] sm:$0xff]
        %v1923 = vld [vmem:[%s465 + $0x81] sm:$0xff]
        %v1924 = vld [vmem:[%s465 + $0x99] sm:$0xff]
        %v1925 = vld [vmem:[%s465 + $0xb1] sm:$0xff]
        %v1926 = vpack.c.bf16 %v1919, %v1918
        %v1927 = vpack.c.bf16 %v1921, %v1920
        %v1928 = vpack.c.bf16 %v1923, %v1922
        %v1929 = vpack.c.bf16 %v1925, %v1924
        %s1930 = scalar_lea.vmem %s350, 20 [#allocation9]
        %v1931 = vld [vmem:[%s1930] sm:$0xf]
        %v1933 = vsel %vm412, %v1926, 0
        %v1936 = vsel %vm412, %v1927, 0
        %v1939 = vsel %vm412, %v1928, 0
        %v1942 = vsel %vm412, %v1929, 0
        %v1945 = vsel %vm514, %v1931, 0
        %1947 = vmatprep.subr.bf16.mxu0 0
        %1948 = vmatpush1.bf16.msra.mxu0 %v1945
        %1949 = vmatprep.subr.bf16.mxu0 0
        %1950 = vmatpush1.bf16.msra.mxu0 0
        %1951 = vmatprep.subr.bf16.mxu0 0
        %1952 = vmatpush1.bf16.msra.mxu0 0
        %1953 = vmatprep.subr.bf16.mxu0 0
        %1954 = vmatpush1.bf16.msra.mxu0 0
        %1955 = vmatprep.subr.bf16.mxu0 0
        %1956 = vmatpush1.bf16.msra.mxu0 0
        %1957 = vmatprep.subr.bf16.mxu0 0
        %1958 = vmatpush1.bf16.msra.mxu0 0
        %1959 = vmatprep.subr.bf16.mxu0 0
        %1960 = vmatpush1.bf16.msra.mxu0 0
        %1961 = vmatprep.subr.bf16.mxu0 0
        %1962 = vmatpush1.bf16.msra.mxu0 0
        %1963 = vmatprep.subr.bf16.mxu0 0
        %1964 = vmatpush1.bf16.msra.mxu0 0
        %1965 = vmatprep.subr.bf16.mxu0 0
        %1966 = vmatpush1.bf16.msra.mxu0 0
        %1967 = vmatprep.subr.bf16.mxu0 0
        %1968 = vmatpush1.bf16.msra.mxu0 0
        %1969 = vmatprep.subr.bf16.mxu0 0
        %1970 = vmatpush1.bf16.msra.mxu0 0
        %1971 = vmatprep.subr.bf16.mxu0 0
        %1972 = vmatpush1.bf16.msra.mxu0 0
        %1973 = vmatprep.subr.bf16.mxu0 0
        %1974 = vmatpush1.bf16.msra.mxu0 0
        %1975 = vmatprep.subr.bf16.mxu0 0
        %1976 = vmatpush1.bf16.msra.mxu0 0
        %1977 = vmatprep.subr.bf16.mxu0 0
        %1978 = vmatpush1.bf16.msra.mxu0 0
        %1979 = vmatprep.mubr.bf16.mxu0 0
        %1980 = vmatmul.mubr.bf16.gmra.mrb[0].mxu0 %v1933
        %v1981 = vpop.f32.mrb[0].mxu0
        %v1982 = vadd.f32 0.0, %v1981
        %v1983 = vpop.f32.mrb[0].mxu0
        %v1984 = vpop.f32.mrb[0].mxu0
        %v1985 = vadd.f32 0.0, %v1984
        %v1986 = vpop.f32.mrb[0].mxu0
        %1987 = vmatprep.mubr.bf16.mxu0 0
        %1988 = vmatmul.mubr.bf16.gmra.mrb[0].mxu0 %v1936
        %v1989 = vpop.f32.mrb[0].mxu0
        %v1990 = vadd.f32 0.0, %v1989
        %v1991 = vpop.f32.mrb[0].mxu0
        %v1992 = vpop.f32.mrb[0].mxu0
        %v1993 = vadd.f32 0.0, %v1992
        %v1994 = vpop.f32.mrb[0].mxu0
        %1995 = vmatprep.mubr.bf16.mxu0 0
        %1996 = vmatmul.mubr.bf16.gmra.mrb[0].mxu0 %v1939
        %v1997 = vpop.f32.mrb[0].mxu0
        %v1998 = vadd.f32 0.0, %v1997
        %v1999 = vpop.f32.mrb[0].mxu0
        %v2000 = vpop.f32.mrb[0].mxu0
        %v2001 = vadd.f32 0.0, %v2000
        %v2002 = vpop.f32.mrb[0].mxu0
        %2003 = vmatprep.mubr.bf16.mxu0 0
        %2004 = vmatmul.mubr.bf16.gmra.mrb[0].mxu0 %v1942
        %v2005 = vpop.f32.mrb[0].mxu0
        %v2006 = vadd.f32 0.0, %v2005
        %v2007 = vpop.f32.mrb[0].mxu0
        %v2008 = vpop.f32.mrb[0].mxu0
        %v2009 = vadd.f32 0.0, %v2008
        %v2010 = vpop.f32.mrb[0].mxu0
        %2011 = vdwg.mxu0
        %v2012 = vadd.f32 %v1910, %v1982
        %v2013 = vadd.f32 %v1911, %v1985
        %v2014 = vadd.f32 %v1912, %v1990
        %v2015 = vadd.f32 %v1913, %v1993
        %v2016 = vadd.f32 %v1914, %v1998
        %v2017 = vadd.f32 %v1915, %v2001
        %v2018 = vadd.f32 %v1916, %v2006
        %v2019 = vadd.f32 %v1917, %v2009
        %v2020 = vld [vmem:[%s1071 + $0x7] sm:$0xff]
        %v2021 = vld [vmem:[%s1071 + $0x1f] sm:$0xff]
        %v2022 = vld [vmem:[%s1071 + $0x37] sm:$0xff]
        %v2023 = vld [vmem:[%s1071 + $0x4f] sm:$0xff]
        %v2024 = vld [vmem:[%s1071 + $0x67] sm:$0xff]
        %v2025 = vld [vmem:[%s1071 + $0x7f] sm:$0xff]
        %v2026 = vld [vmem:[%s1071 + $0x97] sm:$0xff]
        %v2027 = vld [vmem:[%s1071 + $0xaf] sm:$0xff]
        %v2028 = vpack.c.bf16 %v2021, %v2020
        %v2029 = vpack.c.bf16 %v2023, %v2022
        %v2030 = vpack.c.bf16 %v2025, %v2024
        %v2031 = vpack.c.bf16 %v2027, %v2026
        %s2032 = scalar_lea.vmem %s350, 24 [#allocation9]
        %v2033 = vld [vmem:[%s2032] sm:$0xf]
        %v2035 = vsel %vm412, %v2028, 0
        %v2038 = vsel %vm412, %v2029, 0
        %v2041 = vsel %vm412, %v2030, 0
        %v2044 = vsel %vm412, %v2031, 0
        %v2047 = vsel %vm514, %v2033, 0
        %2049 = vmatprep.subr.bf16.mxu0 0
        %2050 = vmatpush1.bf16.msra.mxu0 %v2047
        %2051 = vmatprep.subr.bf16.mxu0 0
        %2052 = vmatpush1.bf16.msra.mxu0 0
        %2053 = vmatprep.subr.bf16.mxu0 0
        %2054 = vmatpush1.bf16.msra.mxu0 0
        %2055 = vmatprep.subr.bf16.mxu0 0
        %2056 = vmatpush1.bf16.msra.mxu0 0
        %2057 = vmatprep.subr.bf16.mxu0 0
        %2058 = vmatpush1.bf16.msra.mxu0 0
        %2059 = vmatprep.subr.bf16.mxu0 0
        %2060 = vmatpush1.bf16.msra.mxu0 0
        %2061 = vmatprep.subr.bf16.mxu0 0
        %2062 = vmatpush1.bf16.msra.mxu0 0
        %2063 = vmatprep.subr.bf16.mxu0 0
        %2064 = vmatpush1.bf16.msra.mxu0 0
        %2065 = vmatprep.subr.bf16.mxu0 0
        %2066 = vmatpush1.bf16.msra.mxu0 0
        %2067 = vmatprep.subr.bf16.mxu0 0
        %2068 = vmatpush1.bf16.msra.mxu0 0
        %2069 = vmatprep.subr.bf16.mxu0 0
        %2070 = vmatpush1.bf16.msra.mxu0 0
        %2071 = vmatprep.subr.bf16.mxu0 0
        %2072 = vmatpush1.bf16.msra.mxu0 0
        %2073 = vmatprep.subr.bf16.mxu0 0
        %2074 = vmatpush1.bf16.msra.mxu0 0
        %2075 = vmatprep.subr.bf16.mxu0 0
        %2076 = vmatpush1.bf16.msra.mxu0 0
        %2077 = vmatprep.subr.bf16.mxu0 0
        %2078 = vmatpush1.bf16.msra.mxu0 0
        %2079 = vmatprep.subr.bf16.mxu0 0
        %2080 = vmatpush1.bf16.msra.mxu0 0
        %2081 = vmatprep.mubr.bf16.mxu0 0
        %2082 = vmatmul.mubr.bf16.gmra.mrb[0].mxu0 %v2035
        %v2083 = vpop.f32.mrb[0].mxu0
        %v2084 = vadd.f32 0.0, %v2083
        %v2085 = vpop.f32.mrb[0].mxu0
        %v2086 = vpop.f32.mrb[0].mxu0
        %v2087 = vadd.f32 0.0, %v2086
        %v2088 = vpop.f32.mrb[0].mxu0
        %2089 = vmatprep.mubr.bf16.mxu0 0
        %2090 = vmatmul.mubr.bf16.gmra.mrb[0].mxu0 %v2038
        %v2091 = vpop.f32.mrb[0].mxu0
        %v2092 = vadd.f32 0.0, %v2091
        %v2093 = vpop.f32.mrb[0].mxu0
        %v2094 = vpop.f32.mrb[0].mxu0
        %v2095 = vadd.f32 0.0, %v2094
        %v2096 = vpop.f32.mrb[0].mxu0
        %2097 = vmatprep.mubr.bf16.mxu0 0
        %2098 = vmatmul.mubr.bf16.gmra.mrb[0].mxu0 %v2041
        %v2099 = vpop.f32.mrb[0].mxu0
        %v2100 = vadd.f32 0.0, %v2099
        %v2101 = vpop.f32.mrb[0].mxu0
        %v2102 = vpop.f32.mrb[0].mxu0
        %v2103 = vadd.f32 0.0, %v2102
        %v2104 = vpop.f32.mrb[0].mxu0
        %2105 = vmatprep.mubr.bf16.mxu0 0
        %2106 = vmatmul.mubr.bf16.gmra.mrb[0].mxu0 %v2044
        %v2107 = vpop.f32.mrb[0].mxu0
        %v2108 = vadd.f32 0.0, %v2107
        %v2109 = vpop.f32.mrb[0].mxu0
        %v2110 = vpop.f32.mrb[0].mxu0
        %v2111 = vadd.f32 0.0, %v2110
        %v2112 = vpop.f32.mrb[0].mxu0
        %2113 = vdwg.mxu0
        %v2114 = vadd.f32 %v2012, %v2084
        %v2115 = vadd.f32 %v2013, %v2087
        %v2116 = vadd.f32 %v2014, %v2092
        %v2117 = vadd.f32 %v2015, %v2095
        %v2118 = vadd.f32 %v2016, %v2100
        %v2119 = vadd.f32 %v2017, %v2103
        %v2120 = vadd.f32 %v2018, %v2108
        %v2121 = vadd.f32 %v2019, %v2111
        %v2122 = vld [vmem:[%s1071 + $0x8] sm:$0xff]
        %v2123 = vld [vmem:[%s1071 + $0x20] sm:$0xff]
        %v2124 = vld [vmem:[%s1071 + $0x38] sm:$0xff]
        %v2125 = vld [vmem:[%s1071 + $0x50] sm:$0xff]
        %v2126 = vld [vmem:[%s1071 + $0x68] sm:$0xff]
        %v2127 = vld [vmem:[%s1071 + $0x80] sm:$0xff]
        %v2128 = vld [vmem:[%s1071 + $0x98] sm:$0xff]
        %v2129 = vld [vmem:[%s1071 + $0xb0] sm:$0xff]
        %v2130 = vpack.c.bf16 %v2123, %v2122
        %v2131 = vpack.c.bf16 %v2125, %v2124
        %v2132 = vpack.c.bf16 %v2127, %v2126
        %v2133 = vpack.c.bf16 %v2129, %v2128
        %s2134 = scalar_lea.vmem %s350, 28 [#allocation9]
        %v2135 = vld [vmem:[%s2134] sm:$0xf]
        %v2137 = vsel %vm412, %v2130, 0
        %v2140 = vsel %vm412, %v2131, 0
        %v2143 = vsel %vm412, %v2132, 0
        %v2146 = vsel %vm412, %v2133, 0
        %v2149 = vsel %vm514, %v2135, 0
        %2151 = vmatprep.subr.bf16.mxu0 0
        %2152 = vmatpush1.bf16.msra.mxu0 %v2149
        %2153 = vmatprep.subr.bf16.mxu0 0
        %2154 = vmatpush1.bf16.msra.mxu0 0
        %2155 = vmatprep.subr.bf16.mxu0 0
        %2156 = vmatpush1.bf16.msra.mxu0 0
        %2157 = vmatprep.subr.bf16.mxu0 0
        %2158 = vmatpush1.bf16.msra.mxu0 0
        %2159 = vmatprep.subr.bf16.mxu0 0
        %2160 = vmatpush1.bf16.msra.mxu0 0
        %2161 = vmatprep.subr.bf16.mxu0 0
        %2162 = vmatpush1.bf16.msra.mxu0 0
        %2163 = vmatprep.subr.bf16.mxu0 0
        %2164 = vmatpush1.bf16.msra.mxu0 0
        %2165 = vmatprep.subr.bf16.mxu0 0
        %2166 = vmatpush1.bf16.msra.mxu0 0
        %2167 = vmatprep.subr.bf16.mxu0 0
        %2168 = vmatpush1.bf16.msra.mxu0 0
        %2169 = vmatprep.subr.bf16.mxu0 0
        %2170 = vmatpush1.bf16.msra.mxu0 0
        %2171 = vmatprep.subr.bf16.mxu0 0
        %2172 = vmatpush1.bf16.msra.mxu0 0
        %2173 = vmatprep.subr.bf16.mxu0 0
        %2174 = vmatpush1.bf16.msra.mxu0 0
        %2175 = vmatprep.subr.bf16.mxu0 0
        %2176 = vmatpush1.bf16.msra.mxu0 0
        %2177 = vmatprep.subr.bf16.mxu0 0
        %2178 = vmatpush1.bf16.msra.mxu0 0
        %2179 = vmatprep.subr.bf16.mxu0 0
        %2180 = vmatpush1.bf16.msra.mxu0 0
        %2181 = vmatprep.subr.bf16.mxu0 0
        %2182 = vmatpush1.bf16.msra.mxu0 0
        %2183 = vmatprep.mubr.bf16.mxu0 0
        %2184 = vmatmul.mubr.bf16.gmra.mrb[0].mxu0 %v2137
        %v2185 = vpop.f32.mrb[0].mxu0
        %v2186 = vadd.f32 0.0, %v2185
        %v2187 = vpop.f32.mrb[0].mxu0
        %v2188 = vpop.f32.mrb[0].mxu0
        %v2189 = vadd.f32 0.0, %v2188
        %v2190 = vpop.f32.mrb[0].mxu0
        %2191 = vmatprep.mubr.bf16.mxu0 0
        %2192 = vmatmul.mubr.bf16.gmra.mrb[0].mxu0 %v2140
        %v2193 = vpop.f32.mrb[0].mxu0
        %v2194 = vadd.f32 0.0, %v2193
        %v2195 = vpop.f32.mrb[0].mxu0
        %v2196 = vpop.f32.mrb[0].mxu0
        %v2197 = vadd.f32 0.0, %v2196
        %v2198 = vpop.f32.mrb[0].mxu0
        %2199 = vmatprep.mubr.bf16.mxu0 0
        %2200 = vmatmul.mubr.bf16.gmra.mrb[0].mxu0 %v2143
        %v2201 = vpop.f32.mrb[0].mxu0
        %v2202 = vadd.f32 0.0, %v2201
        %v2203 = vpop.f32.mrb[0].mxu0
        %v2204 = vpop.f32.mrb[0].mxu0
        %v2205 = vadd.f32 0.0, %v2204
        %v2206 = vpop.f32.mrb[0].mxu0
        %2207 = vmatprep.mubr.bf16.mxu0 0
        %2208 = vmatmul.mubr.bf16.gmra.mrb[0].mxu0 %v2146
        %v2209 = vpop.f32.mrb[0].mxu0
        %v2210 = vadd.f32 0.0, %v2209
        %v2211 = vpop.f32.mrb[0].mxu0
        %v2212 = vpop.f32.mrb[0].mxu0
        %v2213 = vadd.f32 0.0, %v2212
        %v2214 = vpop.f32.mrb[0].mxu0
        %2215 = vdwg.mxu0
        %v2216 = vadd.f32 %v2114, %v2186
        %v2217 = vadd.f32 %v2115, %v2189
        %v2218 = vadd.f32 %v2116, %v2194
        %v2219 = vadd.f32 %v2117, %v2197
        %v2220 = vadd.f32 %v2118, %v2202
        %v2221 = vadd.f32 %v2119, %v2205
        %v2222 = vadd.f32 %v2120, %v2210
        %v2223 = vadd.f32 %v2121, %v2213
        %v2224 = vld [vmem:[%s1071 + $0x9] sm:$0xff]
        %v2225 = vld [vmem:[%s1071 + $0x21] sm:$0xff]
        %v2226 = vld [vmem:[%s1071 + $0x39] sm:$0xff]
        %v2227 = vld [vmem:[%s1071 + $0x51] sm:$0xff]
        %v2228 = vld [vmem:[%s1071 + $0x69] sm:$0xff]
        %v2229 = vld [vmem:[%s1071 + $0x81] sm:$0xff]
        %v2230 = vld [vmem:[%s1071 + $0x99] sm:$0xff]
        %v2231 = vld [vmem:[%s1071 + $0xb1] sm:$0xff]
        %v2232 = vpack.c.bf16 %v2225, %v2224
        %v2233 = vpack.c.bf16 %v2227, %v2226
        %v2234 = vpack.c.bf16 %v2229, %v2228
        %v2235 = vpack.c.bf16 %v2231, %v2230
        %s2236 = scalar_lea.vmem %s350, 32 [#allocation9]
        %v2237 = vld [vmem:[%s2236] sm:$0xf]
        %v2239 = vsel %vm412, %v2232, 0
        %v2242 = vsel %vm412, %v2233, 0
        %v2245 = vsel %vm412, %v2234, 0
        %v2248 = vsel %vm412, %v2235, 0
        %v2251 = vsel %vm514, %v2237, 0
        %2253 = vmatprep.subr.bf16.mxu0 0
        %2254 = vmatpush1.bf16.msra.mxu0 %v2251
        %2255 = vmatprep.subr.bf16.mxu0 0
        %2256 = vmatpush1.bf16.msra.mxu0 0
        %2257 = vmatprep.subr.bf16.mxu0 0
        %2258 = vmatpush1.bf16.msra.mxu0 0
        %2259 = vmatprep.subr.bf16.mxu0 0
        %2260 = vmatpush1.bf16.msra.mxu0 0
        %2261 = vmatprep.subr.bf16.mxu0 0
        %2262 = vmatpush1.bf16.msra.mxu0 0
        %2263 = vmatprep.subr.bf16.mxu0 0
        %2264 = vmatpush1.bf16.msra.mxu0 0
        %2265 = vmatprep.subr.bf16.mxu0 0
        %2266 = vmatpush1.bf16.msra.mxu0 0
        %2267 = vmatprep.subr.bf16.mxu0 0
        %2268 = vmatpush1.bf16.msra.mxu0 0
        %2269 = vmatprep.subr.bf16.mxu0 0
        %2270 = vmatpush1.bf16.msra.mxu0 0
        %2271 = vmatprep.subr.bf16.mxu0 0
        %2272 = vmatpush1.bf16.msra.mxu0 0
        %2273 = vmatprep.subr.bf16.mxu0 0
        %2274 = vmatpush1.bf16.msra.mxu0 0
        %2275 = vmatprep.subr.bf16.mxu0 0
        %2276 = vmatpush1.bf16.msra.mxu0 0
        %2277 = vmatprep.subr.bf16.mxu0 0
        %2278 = vmatpush1.bf16.msra.mxu0 0
        %2279 = vmatprep.subr.bf16.mxu0 0
        %2280 = vmatpush1.bf16.msra.mxu0 0
        %2281 = vmatprep.subr.bf16.mxu0 0
        %2282 = vmatpush1.bf16.msra.mxu0 0
        %2283 = vmatprep.subr.bf16.mxu0 0
        %2284 = vmatpush1.bf16.msra.mxu0 0
        %2285 = vmatprep.mubr.bf16.mxu0 0
        %2286 = vmatmul.mubr.bf16.gmra.mrb[0].mxu0 %v2239
        %v2287 = vpop.f32.mrb[0].mxu0
        %v2288 = vadd.f32 0.0, %v2287
        %v2289 = vpop.f32.mrb[0].mxu0
        %v2290 = vpop.f32.mrb[0].mxu0
        %v2291 = vadd.f32 0.0, %v2290
        %v2292 = vpop.f32.mrb[0].mxu0
        %2293 = vmatprep.mubr.bf16.mxu0 0
        %2294 = vmatmul.mubr.bf16.gmra.mrb[0].mxu0 %v2242
        %v2295 = vpop.f32.mrb[0].mxu0
        %v2296 = vadd.f32 0.0, %v2295
        %v2297 = vpop.f32.mrb[0].mxu0
        %v2298 = vpop.f32.mrb[0].mxu0
        %v2299 = vadd.f32 0.0, %v2298
        %v2300 = vpop.f32.mrb[0].mxu0
        %2301 = vmatprep.mubr.bf16.mxu0 0
        %2302 = vmatmul.mubr.bf16.gmra.mrb[0].mxu0 %v2245
        %v2303 = vpop.f32.mrb[0].mxu0
        %v2304 = vadd.f32 0.0, %v2303
        %v2305 = vpop.f32.mrb[0].mxu0
        %v2306 = vpop.f32.mrb[0].mxu0
        %v2307 = vadd.f32 0.0, %v2306
        %v2308 = vpop.f32.mrb[0].mxu0
        %2309 = vmatprep.mubr.bf16.mxu0 0
        %2310 = vmatmul.mubr.bf16.gmra.mrb[0].mxu0 %v2248
        %v2311 = vpop.f32.mrb[0].mxu0
        %v2312 = vadd.f32 0.0, %v2311
        %v2313 = vpop.f32.mrb[0].mxu0
        %v2314 = vpop.f32.mrb[0].mxu0
        %v2315 = vadd.f32 0.0, %v2314
        %v2316 = vpop.f32.mrb[0].mxu0
        %2317 = vdwg.mxu0
        %v2318 = vadd.f32 %v2216, %v2288
        %v2319 = vadd.f32 %v2217, %v2291
        %v2320 = vadd.f32 %v2218, %v2296
        %v2321 = vadd.f32 %v2219, %v2299
        %v2322 = vadd.f32 %v2220, %v2304
        %v2323 = vadd.f32 %v2221, %v2307
        %v2324 = vadd.f32 %v2222, %v2312
        %v2325 = vadd.f32 %v2223, %v2315
        %v2326 = vld [vmem:[%s358] sm:$0x1]
        %v2328 = vlaneseq
        %v2329 = vshrl.u32 %v2328, 7
        %v2330 = vsub.s32 0, %v2329
        %v2331 = vrot.slane %v2326, %v2330
        %v2333 = vadd.f32 %v2318, %v2331
        %v2334 = vadd.f32 %v2319, %v2331
        %v2335 = vadd.f32 %v2320, %v2331
        %v2336 = vadd.f32 %v2321, %v2331
        %v2337 = vadd.f32 %v2322, %v2331
        %v2338 = vadd.f32 %v2323, %v2331
        %v2339 = vadd.f32 %v2324, %v2331
        %v2340 = vadd.f32 %v2325, %v2331
        %vm2341 = vcmp.ge.f32.partialorder %v2333, 0.0
        %vm2342 = vcmp.ge.f32.partialorder %v2334, 0.0
        %vm2343 = vcmp.ge.f32.partialorder %v2335, 0.0
        %vm2344 = vcmp.ge.f32.partialorder %v2336, 0.0
        %vm2345 = vcmp.ge.f32.partialorder %v2337, 0.0
        %vm2346 = vcmp.ge.f32.partialorder %v2338, 0.0
        %vm2347 = vcmp.ge.f32.partialorder %v2339, 0.0
        %vm2348 = vcmp.ge.f32.partialorder %v2340, 0.0
        %v2349 = vmul.f32 %v2333, 0.1
        %v2350 = vmul.f32 %v2334, 0.1
        %v2351 = vmul.f32 %v2335, 0.1
        %v2352 = vmul.f32 %v2336, 0.1
        %v2353 = vmul.f32 %v2337, 0.1
        %v2354 = vmul.f32 %v2338, 0.1
        %v2355 = vmul.f32 %v2339, 0.1
        %v2356 = vmul.f32 %v2340, 0.1
        %v2357 = vsel %vm2341, %v2333, %v2349
        %v2358 = vsel %vm2342, %v2334, %v2350
        %v2359 = vsel %vm2343, %v2335, %v2351
        %v2360 = vsel %vm2344, %v2336, %v2352
        %v2361 = vsel %vm2345, %v2337, %v2353
        %v2362 = vsel %vm2346, %v2338, %v2354
        %v2363 = vsel %vm2347, %v2339, %v2355
        %v2364 = vsel %vm2348, %v2340, %v2356
        %v2365 = vadd.f32 %v404, %v2357
        %v2366 = vadd.f32 %v405, %v2358
        %v2367 = vadd.f32 %v406, %v2359
        %v2368 = vadd.f32 %v407, %v2360
        %v2369 = vadd.f32 %v408, %v2361
        %v2370 = vadd.f32 %v409, %v2362
        %v2371 = vadd.f32 %v410, %v2363
        %v2372 = vadd.f32 %v411, %v2364
        %2373 = vst.msk [vmem:[%s402] sm:$0xff] %vm412, %v2365
        %2374 = vst.msk [vmem:[%s402 + $0x8] sm:$0xff] %vm412, %v2366
        %2375 = vst.msk [vmem:[%s402 + $0x10] sm:$0xff] %vm412, %v2367
        %2376 = vst.msk [vmem:[%s402 + $0x18] sm:$0xff] %vm412, %v2368
        %2377 = vst.msk [vmem:[%s402 + $0x20] sm:$0xff] %vm412, %v2369
        %2378 = vst.msk [vmem:[%s402 + $0x28] sm:$0xff] %vm412, %v2370
        %2379 = vst.msk [vmem:[%s402 + $0x30] sm:$0xff] %vm412, %v2371
        %2380 = vst.msk [vmem:[%s402 + $0x38] sm:$0xff] %vm412, %v2372
        %s2381 = sand.u32 %s182, 1
        %s2382 = scalar_lea.sflag [#allocation5], %s2381
        %s2383 = sand.u32 %s182, 1
        %s2384 = smul.addr %s2383, 64
        %s2385 = scalar_lea.vmem [#allocation12], %s2384
        // Predicated region
        $region61: #{conv_pillar_caf_forward.5} parent=39 // pred_check
          %p2386 = pneg %p192
        $region62: #{conv_pillar_caf_forward.5} parent=39 // pred_check_branch
          %2388 = sbr.rel (%p2386) target = $region64
        $region63: #{conv_pillar_caf_forward.5} parent=39 // pred_region
          %s2390 = ssub.s32 1024, 1024
          %2391 = vsyncadd %s2382, %s2390
          %s2392 = smul.addr %s33, 8
          %s2393 = smul.addr %s32, 16
          %s2394 = sadd.s32 %s2392, %s2393
          %s2395 = smul.addr %s2394, 128
          %s2396 = scalar_lea.hbm %s5, %s2395
          %s2397 = sshll.u32 %s2385, 4
          %s2398 = int_to_ptr.vmem [resolvable:$true] %s2397
          %2403 = dma.vmem_to_hbm [thread:$0]  %s2398, 1024, %s2396, %s2382, 128, 128, 8
        $region64: #{conv_pillar_caf_forward.5} parent=39 // pred_fallthru
          _
      $region40: #{conv_pillar_caf_forward.5} parent=5 // pred_fallthru
        _
      %p2404 = scmp.le.s32.totalorder 2, %s23
      // Predicated region
      $region65: #{conv_pillar_caf_forward.5} parent=5 // pred_check
        %p2405 = pneg %p2404
      $region66: #{conv_pillar_caf_forward.5} parent=5 // pred_check_branch
        %2407 = sbr.rel (%p2405) target = $region68
      $region67: #{conv_pillar_caf_forward.5} parent=5 // pred_region
        %s2408 = ssub.s32 %s23, 2
        // Predicated region
        $region69: #{conv_pillar_caf_forward.5} parent=67 // pred_check
          %p2409 = pneg %p198
        $region70: #{conv_pillar_caf_forward.5} parent=67 // pred_check_branch
          %2411 = sbr.rel (%p2409) target = $region72
        $region71: #{conv_pillar_caf_forward.5} parent=67 // pred_region
          %s2412 = sand.u32 %s183, 1
          %s2413 = scalar_lea.sflag [#allocation5], %s2412
          %s2414 = sand.u32 %s183, 1
          %s2415 = smul.addr %s2414, 64
          %s2416 = scalar_lea.vmem [#allocation12], %s2415
          %2417 = dma.done %s2413, 1024
        $region72: #{conv_pillar_caf_forward.5} parent=67 // pred_fallthru
          _
      $region68: #{conv_pillar_caf_forward.5} parent=5 // pred_fallthru
        _
    $region6: #{conv_pillar_caf_forward.5} parent=1 // loop_footer
      %s27 = sadd.s32 1, %s23
    $region7: #{conv_pillar_caf_forward.5} parent=1 // loop_footer_branch
      %22 = sbr.rel target = $region3
    $region8: #{conv_pillar_caf_forward.5} parent=1 // loop_exit
      _
    %2418 = vsyncpa [#allocation4], 1
    %s2419 = scalar_lea.sflag [#allocation4], 1
    %2420 = vsyncpa %s2419, 1
    %2421 = vsyncpa [#allocation7], 1
    %s2422 = scalar_lea.sflag [#allocation7], 1
    %2423 = vsyncpa %s2422, 1
    %2424 = vsyncpa [#allocation10], 1
    %s2425 = scalar_lea.sflag [#allocation10], 1
    %2426 = vsyncpa %s2425, 1
    %2427 = vsyncpa [#allocation5], 1
    %s2428 = scalar_lea.sflag [#allocation5], 1
    %2429 = vsyncpa %s2428, 1

// kernel: conv_pillar_caf_forward.7
$region0: #{conv_pillar_caf_forward.7}
  #allocation0 [shape = 'u32[]', space=smem, size = 0x4, offset = 0x4, fixed_abs, tag = 'smem constant byte address 0x4 - core index']
  #allocation1 [shape = 'u32[144,128]{1,0:T(1,128)}', space=vmem, size = 0x12000, scoped, tag = 'internal scratch']
  %s0 = inlined_call_operand.hbm [shape: bf16[128,16], index: 0, kind: input, shape index: {}]
  %s1 = inlined_call_operand.hbm [shape: f32[128,8], index: 1, kind: input, shape index: {}]
  %s2 = inlined_call_operand.hbm [shape: f32[128,8], index: 2, kind: input, shape index: {}]
  %s3 = inlined_call_operand.hbm [shape: f32[128,8], index: 3, kind: input, shape index: {}]
  %s4 = inlined_call_operand.hbm [shape: f32[128,8], index: 4, kind: input, shape index: {}]
  %s5 = inlined_call_operand.hbm [shape: bf16[16,8], index: 5, kind: input, shape index: {}]
  %s6 = inlined_call_operand.hbm [shape: f32[1,8], index: 6, kind: input, shape index: {}]
  %s7 = inlined_call_operand.hbm [shape: bf16[8,4], index: 7, kind: input, shape index: {}]
  %s8 = inlined_call_operand.hbm [shape: f32[1,4], index: 8, kind: input, shape index: {}]
  %s9 = inlined_call_operand.hbm [shape: bf16[8,16], index: 9, kind: input, shape index: {}]
  %s10 = inlined_call_operand.hbm [shape: f32[1,16], index: 10, kind: input, shape index: {}]
  %s11 = inlined_call_operand.hbm [shape: f32[128,16], index: 11, kind: output, shape index: {}]
  %s12 = sld [smem:[#allocation0]]
  $region98: #{conv_pillar_caf_forward.7} parent=0
    _
  %s14 = ssub.s32 1, %s12
  %s15 = scalar_select 0, %s14, %s12
  $region1: #{conv_pillar_caf_forward.7} parent=0
    #allocation2 [shape = 'u8[32768]{0}', space=vmem, size = 0x8000, scoped, tag = 'input window, operand 0, single buffered']
    #allocation3 [shape = 's32[1]{0}', space=sflag, size = 0x4, scoped, tag = 'scoped memory for conv_pillar_caf_forward.7']
    #allocation4 [shape = 's32[1]{0}', space=sflag, size = 0x4, scoped, tag = 'scoped memory for conv_pillar_caf_forward.7']
    #allocation5 [shape = 'u8[65536]{0}', space=vmem, size = 0x10000, scoped, tag = 'input window, operand 1, single buffered']
    #allocation6 [shape = 's32[1]{0}', space=sflag, size = 0x4, scoped, tag = 'scoped memory for conv_pillar_caf_forward.7']
    #allocation7 [shape = 'u8[65536]{0}', space=vmem, size = 0x10000, scoped, tag = 'input window, operand 2, single buffered']
    #allocation8 [shape = 'u8[65536]{0}', space=vmem, size = 0x10000, scoped, tag = 'input window, operand 3, single buffered']
    #allocation9 [shape = 's32[1]{0}', space=sflag, size = 0x4, scoped, tag = 'scoped memory for conv_pillar_caf_forward.7']
    #allocation10 [shape = 'u8[65536]{0}', space=vmem, size = 0x10000, scoped, tag = 'input window, operand 4, single buffered']
    #allocation11 [shape = 'u8[4096]{0}', space=vmem, size = 0x1000, scoped, tag = 'input window, operand 5, single buffered']
    #allocation12 [shape = 's32[1]{0}', space=sflag, size = 0x4, scoped, tag = 'scoped memory for conv_pillar_caf_forward.7']
    #allocation13 [shape = 'u8[512]{0}', space=vmem, size = 0x400, scoped, tag = 'input window, operand 6, single buffered']
    #allocation14 [shape = 'u8[2048]{0}', space=vmem, size = 0x800, scoped, tag = 'input window, operand 7, single buffered']
    #allocation15 [shape = 's32[1]{0}', space=sflag, size = 0x4, scoped, tag = 'scoped memory for conv_pillar_caf_forward.7']
    #allocation16 [shape = 'u8[512]{0}', space=vmem, size = 0x400, scoped, tag = 'input window, operand 8, single buffered']
    #allocation17 [shape = 'u8[2048]{0}', space=vmem, size = 0x800, scoped, tag = 'input window, operand 9, single buffered']
    #allocation18 [shape = 's32[1]{0}', space=sflag, size = 0x4, scoped, tag = 'scoped memory for conv_pillar_caf_forward.7']
    #allocation19 [shape = 'u8[512]{0}', space=vmem, size = 0x400, scoped, tag = 'input window, operand 10, single buffered']
    #allocation20 [shape = 'u8[65536]{0}', space=vmem, size = 0x10000, scoped, tag = 'output window, operand 0, single buffered']
    %16 = vsyncpa [#allocation3], 0
    %17 = vsyncpa [#allocation6], 0
    %18 = vsyncpa [#allocation9], 0
    %19 = vsyncpa [#allocation12], 0
    %20 = vsyncpa [#allocation15], 0
    %21 = vsyncpa [#allocation18], 0
    %22 = vsyncpa [#allocation4], 0
    // Predicated region
    $region2: #{conv_pillar_caf_forward.7} parent=1 // pred_check
      _
    $region3: #{conv_pillar_caf_forward.7} parent=1 // pred_check_branch
      %24 = sbr.rel (0) target = $region5
    $region4: #{conv_pillar_caf_forward.7} parent=1 // pred_region
      %s26 = ssub.s32 1024, 1024
      %27 = vsyncadd [#allocation3], %s26
      %s28 = sshll.u32 [#allocation2], 4
      %s29 = int_to_ptr.vmem [resolvable:$true] %s28
      %34 = dma.hbm_to_vmem [thread:$0]  %s0, 1024, %s29, [#allocation3], 64, 64, 4
    $region5: #{conv_pillar_caf_forward.7} parent=1 // pred_fallthru
      _
    // Predicated region
    $region6: #{conv_pillar_caf_forward.7} parent=1 // pred_check
      _
    $region7: #{conv_pillar_caf_forward.7} parent=1 // pred_check_branch
      %36 = sbr.rel (0) target = $region9
    $region8: #{conv_pillar_caf_forward.7} parent=1 // pred_region
      %s38 = ssub.s32 2048, 2048
      %39 = vsyncadd [#allocation6], %s38
      %s40 = sshll.u32 [#allocation5], 4
      %s41 = int_to_ptr.vmem [resolvable:$true] %s40
      %46 = dma.hbm_to_vmem [thread:$0]  %s1, 2048, %s41, [#allocation6], 128, 128, 8
    $region9: #{conv_pillar_caf_forward.7} parent=1 // pred_fallthru
      _
    // Predicated region
    $region10: #{conv_pillar_caf_forward.7} parent=1 // pred_check
      _
    $region11: #{conv_pillar_caf_forward.7} parent=1 // pred_check_branch
      %48 = sbr.rel (0) target = $region13
    $region12: #{conv_pillar_caf_forward.7} parent=1 // pred_region
      %s50 = ssub.s32 2048, 2048
      %51 = vsyncadd [#allocation6], %s50
      %s52 = sshll.u32 [#allocation7], 4
      %s53 = int_to_ptr.vmem [resolvable:$true] %s52
      %58 = dma.hbm_to_vmem [thread:$0]  %s2, 2048, %s53, [#allocation6], 128, 128, 8
    $region13: #{conv_pillar_caf_forward.7} parent=1 // pred_fallthru
      _
    // Predicated region
    $region14: #{conv_pillar_caf_forward.7} parent=1 // pred_check
      _
    $region15: #{conv_pillar_caf_forward.7} parent=1 // pred_check_branch
      %60 = sbr.rel (0) target = $region17
    $region16: #{conv_pillar_caf_forward.7} parent=1 // pred_region
      %s62 = ssub.s32 2048, 2048
      %63 = vsyncadd [#allocation9], %s62
      %s64 = sshll.u32 [#allocation8], 4
      %s65 = int_to_ptr.vmem [resolvable:$true] %s64
      %70 = dma.hbm_to_vmem [thread:$0]  %s3, 2048, %s65, [#allocation9], 128, 128, 8
    $region17: #{conv_pillar_caf_forward.7} parent=1 // pred_fallthru
      _
    // Predicated region
    $region18: #{conv_pillar_caf_forward.7} parent=1 // pred_check
      _
    $region19: #{conv_pillar_caf_forward.7} parent=1 // pred_check_branch
      %72 = sbr.rel (0) target = $region21
    $region20: #{conv_pillar_caf_forward.7} parent=1 // pred_region
      %s74 = ssub.s32 2048, 2048
      %75 = vsyncadd [#allocation9], %s74
      %s76 = sshll.u32 [#allocation10], 4
      %s77 = int_to_ptr.vmem [resolvable:$true] %s76
      %82 = dma.hbm_to_vmem [thread:$0]  %s4, 2048, %s77, [#allocation9], 128, 128, 8
    $region21: #{conv_pillar_caf_forward.7} parent=1 // pred_fallthru
      _
    // Predicated region
    $region22: #{conv_pillar_caf_forward.7} parent=1 // pred_check
      _
    $region23: #{conv_pillar_caf_forward.7} parent=1 // pred_check_branch
      %84 = sbr.rel (0) target = $region25
    $region24: #{conv_pillar_caf_forward.7} parent=1 // pred_region
      %s86 = ssub.s32 128, 128
      %87 = vsyncadd [#allocation12], %s86
      %s88 = sshll.u32 [#allocation11], 4
      %s89 = int_to_ptr.vmem [resolvable:$true] %s88
      %94 = dma.hbm_to_vmem [thread:$0]  %s5, 128, %s89, [#allocation12], 64, 64, 4
    $region25: #{conv_pillar_caf_forward.7} parent=1 // pred_fallthru
      _
    // Predicated region
    $region26: #{conv_pillar_caf_forward.7} parent=1 // pred_check
      _
    $region27: #{conv_pillar_caf_forward.7} parent=1 // pred_check_branch
      %96 = sbr.rel (0) target = $region29
    $region28: #{conv_pillar_caf_forward.7} parent=1 // pred_region
      %s98 = ssub.s32 16, 16
      %99 = vsyncadd [#allocation12], %s98
      %s101 = sshll.u32 [#allocation13], 4
      %s102 = int_to_ptr.vmem [resolvable:$true] %s101
      %104 = dma.hbm_to_vmem [thread:$0]  %s6, 16, %s102, [#allocation12]
    $region29: #{conv_pillar_caf_forward.7} parent=1 // pred_fallthru
      _
    // Predicated region
    $region30: #{conv_pillar_caf_forward.7} parent=1 // pred_check
      _
    $region31: #{conv_pillar_caf_forward.7} parent=1 // pred_check_branch
      %106 = sbr.rel (0) target = $region33
    $region32: #{conv_pillar_caf_forward.7} parent=1 // pred_region
      %s108 = ssub.s32 64, 64
      %109 = vsyncadd [#allocation15], %s108
      %s111 = sshll.u32 [#allocation14], 4
      %s112 = int_to_ptr.vmem [resolvable:$true] %s111
      %114 = dma.hbm_to_vmem [thread:$0]  %s7, 64, %s112, [#allocation15]
    $region33: #{conv_pillar_caf_forward.7} parent=1 // pred_fallthru
      _
    // Predicated region
    $region34: #{conv_pillar_caf_forward.7} parent=1 // pred_check
      _
    $region35: #{conv_pillar_caf_forward.7} parent=1 // pred_check_branch
      %116 = sbr.rel (0) target = $region37
    $region36: #{conv_pillar_caf_forward.7} parent=1 // pred_region
      %s118 = ssub.s32 16, 16
      %119 = vsyncadd [#allocation15], %s118
      %s121 = sshll.u32 [#allocation16], 4
      %s122 = int_to_ptr.vmem [resolvable:$true] %s121
      %124 = dma.hbm_to_vmem [thread:$0]  %s8, 16, %s122, [#allocation15]
    $region37: #{conv_pillar_caf_forward.7} parent=1 // pred_fallthru
      _
    // Predicated region
    $region38: #{conv_pillar_caf_forward.7} parent=1 // pred_check
      _
    $region39: #{conv_pillar_caf_forward.7} parent=1 // pred_check_branch
      %126 = sbr.rel (0) target = $region41
    $region40: #{conv_pillar_caf_forward.7} parent=1 // pred_region
      %s128 = ssub.s32 64, 64
      %129 = vsyncadd [#allocation18], %s128
      %s131 = sshll.u32 [#allocation17], 4
      %s132 = int_to_ptr.vmem [resolvable:$true] %s131
      %134 = dma.hbm_to_vmem [thread:$0]  %s9, 64, %s132, [#allocation18]
    $region41: #{conv_pillar_caf_forward.7} parent=1 // pred_fallthru
      _
    // Predicated region
    $region42: #{conv_pillar_caf_forward.7} parent=1 // pred_check
      _
    $region43: #{conv_pillar_caf_forward.7} parent=1 // pred_check_branch
      %136 = sbr.rel (0) target = $region45
    $region44: #{conv_pillar_caf_forward.7} parent=1 // pred_region
      %s138 = ssub.s32 16, 16
      %139 = vsyncadd [#allocation18], %s138
      %s141 = sshll.u32 [#allocation19], 4
      %s142 = int_to_ptr.vmem [resolvable:$true] %s141
      %144 = dma.hbm_to_vmem [thread:$0]  %s10, 16, %s142, [#allocation18]
    $region45: #{conv_pillar_caf_forward.7} parent=1 // pred_fallthru
      _
    // Predicated region
    $region46: #{conv_pillar_caf_forward.7} parent=1 // pred_check
      _
    $region47: #{conv_pillar_caf_forward.7} parent=1 // pred_check_branch
      %146 = sbr.rel (0) target = $region49
    $region48: #{conv_pillar_caf_forward.7} parent=1 // pred_region
      %147 = dma.done [#allocation3], 1024
    $region49: #{conv_pillar_caf_forward.7} parent=1 // pred_fallthru
      _
    // Predicated region
    $region50: #{conv_pillar_caf_forward.7} parent=1 // pred_check
      _
    $region51: #{conv_pillar_caf_forward.7} parent=1 // pred_check_branch
      %149 = sbr.rel (0) target = $region53
    $region52: #{conv_pillar_caf_forward.7} parent=1 // pred_region
      %150 = dma.done [#allocation6], 2048
    $region53: #{conv_pillar_caf_forward.7} parent=1 // pred_fallthru
      _
    // Predicated region
    $region54: #{conv_pillar_caf_forward.7} parent=1 // pred_check
      _
    $region55: #{conv_pillar_caf_forward.7} parent=1 // pred_check_branch
      %152 = sbr.rel (0) target = $region57
    $region56: #{conv_pillar_caf_forward.7} parent=1 // pred_region
      %153 = dma.done [#allocation6], 2048
    $region57: #{conv_pillar_caf_forward.7} parent=1 // pred_fallthru
      _
    // Predicated region
    $region58: #{conv_pillar_caf_forward.7} parent=1 // pred_check
      _
    $region59: #{conv_pillar_caf_forward.7} parent=1 // pred_check_branch
      %155 = sbr.rel (0) target = $region61
    $region60: #{conv_pillar_caf_forward.7} parent=1 // pred_region
      %156 = dma.done [#allocation9], 2048
    $region61: #{conv_pillar_caf_forward.7} parent=1 // pred_fallthru
      _
    // Predicated region
    $region62: #{conv_pillar_caf_forward.7} parent=1 // pred_check
      _
    $region63: #{conv_pillar_caf_forward.7} parent=1 // pred_check_branch
      %158 = sbr.rel (0) target = $region65
    $region64: #{conv_pillar_caf_forward.7} parent=1 // pred_region
      %159 = dma.done [#allocation9], 2048
    $region65: #{conv_pillar_caf_forward.7} parent=1 // pred_fallthru
      _
    // Predicated region
    $region66: #{conv_pillar_caf_forward.7} parent=1 // pred_check
      _
    $region67: #{conv_pillar_caf_forward.7} parent=1 // pred_check_branch
      %161 = sbr.rel (0) target = $region69
    $region68: #{conv_pillar_caf_forward.7} parent=1 // pred_region
      %162 = dma.done [#allocation12], 128
    $region69: #{conv_pillar_caf_forward.7} parent=1 // pred_fallthru
      _
    // Predicated region
    $region70: #{conv_pillar_caf_forward.7} parent=1 // pred_check
      _
    $region71: #{conv_pillar_caf_forward.7} parent=1 // pred_check_branch
      %164 = sbr.rel (0) target = $region73
    $region72: #{conv_pillar_caf_forward.7} parent=1 // pred_region
      %165 = dma.done [#allocation12], 16
    $region73: #{conv_pillar_caf_forward.7} parent=1 // pred_fallthru
      _
    // Predicated region
    $region74: #{conv_pillar_caf_forward.7} parent=1 // pred_check
      _
    $region75: #{conv_pillar_caf_forward.7} parent=1 // pred_check_branch
      %167 = sbr.rel (0) target = $region77
    $region76: #{conv_pillar_caf_forward.7} parent=1 // pred_region
      %168 = dma.done [#allocation15], 64
    $region77: #{conv_pillar_caf_forward.7} parent=1 // pred_fallthru
      _
    // Predicated region
    $region78: #{conv_pillar_caf_forward.7} parent=1 // pred_check
      _
    $region79: #{conv_pillar_caf_forward.7} parent=1 // pred_check_branch
      %170 = sbr.rel (0) target = $region81
    $region80: #{conv_pillar_caf_forward.7} parent=1 // pred_region
      %171 = dma.done [#allocation15], 16
    $region81: #{conv_pillar_caf_forward.7} parent=1 // pred_fallthru
      _
    // Predicated region
    $region82: #{conv_pillar_caf_forward.7} parent=1 // pred_check
      _
    $region83: #{conv_pillar_caf_forward.7} parent=1 // pred_check_branch
      %173 = sbr.rel (0) target = $region85
    $region84: #{conv_pillar_caf_forward.7} parent=1 // pred_region
      %174 = dma.done [#allocation18], 64
    $region85: #{conv_pillar_caf_forward.7} parent=1 // pred_fallthru
      _
    // Predicated region
    $region86: #{conv_pillar_caf_forward.7} parent=1 // pred_check
      _
    $region87: #{conv_pillar_caf_forward.7} parent=1 // pred_check_branch
      %176 = sbr.rel (0) target = $region89
    $region88: #{conv_pillar_caf_forward.7} parent=1 // pred_region
      %177 = dma.done [#allocation18], 16
    $region89: #{conv_pillar_caf_forward.7} parent=1 // pred_fallthru
      _
    %v179 = vld [vmem:[#allocation2] sm:$0xf]
    %v180 = vld [vmem:[#allocation2 + $0x4] sm:$0xf]
    %v181 = vld [vmem:[#allocation2 + $0x8] sm:$0xf]
    %v182 = vld [vmem:[#allocation2 + $0xc] sm:$0xf]
    %v183 = vld [vmem:[#allocation2 + $0x10] sm:$0xf]
    %v184 = vld [vmem:[#allocation2 + $0x14] sm:$0xf]
    %v185 = vld [vmem:[#allocation2 + $0x18] sm:$0xf]
    %v186 = vld [vmem:[#allocation2 + $0x1c] sm:$0xf]
    %v187 = vld [vmem:[#allocation2 + $0x20] sm:$0xf]
    %v188 = vld [vmem:[#allocation2 + $0x24] sm:$0xf]
    %v189 = vld [vmem:[#allocation2 + $0x28] sm:$0xf]
    %v190 = vld [vmem:[#allocation2 + $0x2c] sm:$0xf]
    %v191 = vld [vmem:[#allocation2 + $0x30] sm:$0xf]
    %v192 = vld [vmem:[#allocation2 + $0x34] sm:$0xf]
    %v193 = vld [vmem:[#allocation2 + $0x38] sm:$0xf]
    %v194 = vld [vmem:[#allocation2 + $0x3c] sm:$0xf]
    %v195 = vld [vmem:[#allocation11] sm:$0xf]
    %v196 = vld [vmem:[#allocation11 + $0x4] sm:$0xf]
    %v197 = vld [vmem:[#allocation13] sm:$0x1]
    %v199 = vlaneseq
    %v200 = vshrl.u32 %v199, 7
    %v201 = vsub.s32 0, %v200
    %v202 = vrot.slane %v197, %v201
    %v220 = vunpack.c.l.b16 %v179
    %v221 = vunpack.c.l.b16 %v180
    %v222 = vunpack.c.l.b16 %v181
    %v223 = vunpack.c.l.b16 %v182
    %v224 = vunpack.c.l.b16 %v183
    %v225 = vunpack.c.l.b16 %v184
    %v226 = vunpack.c.l.b16 %v185
    %v227 = vunpack.c.l.b16 %v186
    %v228 = vunpack.c.l.b16 %v187
    %v229 = vunpack.c.l.b16 %v188
    %v230 = vunpack.c.l.b16 %v189
    %v231 = vunpack.c.l.b16 %v190
    %v232 = vunpack.c.l.b16 %v191
    %v233 = vunpack.c.l.b16 %v192
    %v234 = vunpack.c.l.b16 %v193
    %v235 = vunpack.c.l.b16 %v194
    %v236 = vpack.c.b16 %v221, %v220
    %v237 = vpack.c.b16 %v223, %v222
    %v238 = vpack.c.b16 %v225, %v224
    %v239 = vpack.c.b16 %v227, %v226
    %v240 = vpack.c.b16 %v229, %v228
    %v241 = vpack.c.b16 %v231, %v230
    %v242 = vpack.c.b16 %v233, %v232
    %v243 = vpack.c.b16 %v235, %v234
    %v246 = vunpack.c.l.b16 %v195
    %v247 = vunpack.c.l.b16 %v196
    %v248 = vpack.c.b16 %v247, %v246
    %vm250 = vcmask 130048
    %v252 = vsel %vm250, %v236, 0
    %v255 = vsel %vm250, %v237, 0
    %v258 = vsel %vm250, %v238, 0
    %v261 = vsel %vm250, %v239, 0
    %v264 = vsel %vm250, %v240, 0
    %v267 = vsel %vm250, %v241, 0
    %v270 = vsel %vm250, %v242, 0
    %v273 = vsel %vm250, %v243, 0
    %275 = vmatprep.subr.bf16.mxu0 0
    %276 = vmatpush1.bf16.msra.mxu0 %v248
    %277 = vmatprep.subr.bf16.mxu0 0
    %278 = vmatpush1.bf16.msra.mxu0 0
    %279 = vmatprep.subr.bf16.mxu0 0
    %280 = vmatpush1.bf16.msra.mxu0 0
    %281 = vmatprep.subr.bf16.mxu0 0
    %282 = vmatpush1.bf16.msra.mxu0 0
    %283 = vmatprep.subr.bf16.mxu0 0
    %284 = vmatpush1.bf16.msra.mxu0 0
    %285 = vmatprep.subr.bf16.mxu0 0
    %286 = vmatpush1.bf16.msra.mxu0 0
    %287 = vmatprep.subr.bf16.mxu0 0
    %288 = vmatpush1.bf16.msra.mxu0 0
    %289 = vmatprep.subr.bf16.mxu0 0
    %290 = vmatpush1.bf16.msra.mxu0 0
    %291 = vmatprep.subr.bf16.mxu0 0
    %292 = vmatpush1.bf16.msra.mxu0 0
    %293 = vmatprep.subr.bf16.mxu0 0
    %294 = vmatpush1.bf16.msra.mxu0 0
    %295 = vmatprep.subr.bf16.mxu0 0
    %296 = vmatpush1.bf16.msra.mxu0 0
    %297 = vmatprep.subr.bf16.mxu0 0
    %298 = vmatpush1.bf16.msra.mxu0 0
    %299 = vmatprep.subr.bf16.mxu0 0
    %300 = vmatpush1.bf16.msra.mxu0 0
    %301 = vmatprep.subr.bf16.mxu0 0
    %302 = vmatpush1.bf16.msra.mxu0 0
    %303 = vmatprep.subr.bf16.mxu0 0
    %304 = vmatpush1.bf16.msra.mxu0 0
    %305 = vmatprep.subr.bf16.mxu0 0
    %306 = vmatpush1.bf16.msra.mxu0 0
    %307 = vmatprep.mubr.bf16.mxu0 0
    %308 = vmatmul.mubr.bf16.gmra.mrb[0].mxu0 %v252
    %v309 = vpop.f32.mrb[0].mxu0
    %v310 = vadd.f32 %v202, %v309
    %v311 = vpop.f32.mrb[0].mxu0
    %v312 = vpop.f32.mrb[0].mxu0
    %v313 = vadd.f32 %v202, %v312
    %v314 = vpop.f32.mrb[0].mxu0
    %315 = vmatprep.mubr.bf16.mxu0 0
    %316 = vmatmul.mubr.bf16.gmra.mrb[0].mxu0 %v255
    %v317 = vpop.f32.mrb[0].mxu0
    %v318 = vadd.f32 %v202, %v317
    %v319 = vpop.f32.mrb[0].mxu0
    %v320 = vpop.f32.mrb[0].mxu0
    %v321 = vadd.f32 %v202, %v320
    %v322 = vpop.f32.mrb[0].mxu0
    %323 = vmatprep.mubr.bf16.mxu0 0
    %324 = vmatmul.mubr.bf16.gmra.mrb[0].mxu0 %v258
    %v325 = vpop.f32.mrb[0].mxu0
    %v326 = vadd.f32 %v202, %v325
    %v327 = vpop.f32.mrb[0].mxu0
    %v328 = vpop.f32.mrb[0].mxu0
    %v329 = vadd.f32 %v202, %v328
    %v330 = vpop.f32.mrb[0].mxu0
    %331 = vmatprep.mubr.bf16.mxu0 0
    %332 = vmatmul.mubr.bf16.gmra.mrb[0].mxu0 %v261
    %v333 = vpop.f32.mrb[0].mxu0
    %v334 = vadd.f32 %v202, %v333
    %v335 = vpop.f32.mrb[0].mxu0
    %v336 = vpop.f32.mrb[0].mxu0
    %v337 = vadd.f32 %v202, %v336
    %v338 = vpop.f32.mrb[0].mxu0
    %339 = vmatprep.mubr.bf16.mxu0 0
    %340 = vmatmul.mubr.bf16.gmra.mrb[0].mxu0 %v264
    %v341 = vpop.f32.mrb[0].mxu0
    %v342 = vadd.f32 %v202, %v341
    %v343 = vpop.f32.mrb[0].mxu0
    %v344 = vpop.f32.mrb[0].mxu0
    %v345 = vadd.f32 %v202, %v344
    %v346 = vpop.f32.mrb[0].mxu0
    %347 = vmatprep.mubr.bf16.mxu0 0
    %348 = vmatmul.mubr.bf16.gmra.mrb[0].mxu0 %v267
    %v349 = vpop.f32.mrb[0].mxu0
    %v350 = vadd.f32 %v202, %v349
    %v351 = vpop.f32.mrb[0].mxu0
    %v352 = vpop.f32.mrb[0].mxu0
    %v353 = vadd.f32 %v202, %v352
    %v354 = vpop.f32.mrb[0].mxu0
    %355 = vmatprep.mubr.bf16.mxu0 0
    %356 = vmatmul.mubr.bf16.gmra.mrb[0].mxu0 %v270
    %v357 = vpop.f32.mrb[0].mxu0
    %v358 = vadd.f32 %v202, %v357
    %v359 = vpop.f32.mrb[0].mxu0
    %v360 = vpop.f32.mrb[0].mxu0
    %v361 = vadd.f32 %v202, %v360
    %v362 = vpop.f32.mrb[0].mxu0
    %363 = vmatprep.mubr.bf16.mxu0 0
    %364 = vmatmul.mubr.bf16.gmra.mrb[0].mxu0 %v273
    %v365 = vpop.f32.mrb[0].mxu0
    %v366 = vadd.f32 %v202, %v365
    %v367 = vpop.f32.mrb[0].mxu0
    %v368 = vpop.f32.mrb[0].mxu0
    %v369 = vadd.f32 %v202, %v368
    %v370 = vpop.f32.mrb[0].mxu0
    %371 = vdwg.mxu0
    %v372 = vmax.f32 %v310, 0.0
    %v373 = vmax.f32 %v313, 0.0
    %v374 = vmax.f32 %v318, 0.0
    %v375 = vmax.f32 %v321, 0.0
    %v376 = vmax.f32 %v326, 0.0
    %v377 = vmax.f32 %v329, 0.0
    %v378 = vmax.f32 %v334, 0.0
    %v379 = vmax.f32 %v337, 0.0
    %v380 = vmax.f32 %v342, 0.0
    %v381 = vmax.f32 %v345, 0.0
    %v382 = vmax.f32 %v350, 0.0
    %v383 = vmax.f32 %v353, 0.0
    %v384 = vmax.f32 %v358, 0.0
    %v385 = vmax.f32 %v361, 0.0
    %v386 = vmax.f32 %v366, 0.0
    %v387 = vmax.f32 %v369, 0.0
    %v388 = vpack.c.bf16 %v373, %v372
    %v389 = vpack.c.bf16 %v375, %v374
    %v390 = vpack.c.bf16 %v377, %v376
    %v391 = vpack.c.bf16 %v379, %v378
    %v392 = vpack.c.bf16 %v381, %v380
    %v393 = vpack.c.bf16 %v383, %v382
    %v394 = vpack.c.bf16 %v385, %v384
    %v395 = vpack.c.bf16 %v387, %v386
    %v396 = vld [vmem:[#allocation14] sm:$0xf]
    %v397 = vld [vmem:[#allocation16] sm:$0x1]
    %v399 = vlaneseq
    %v400 = vshrl.u32 %v399, 7
    %v401 = vsub.s32 0, %v400
    %v402 = vrot.slane %v397, %v401
    %vm404 = vcmask 64512
    %v406 = vsel %vm404, %v388, 0
    %v409 = vsel %vm404, %v389, 0
    %v412 = vsel %vm404, %v390, 0
    %v415 = vsel %vm404, %v391, 0
    %v418 = vsel %vm404, %v392, 0
    %v421 = vsel %vm404, %v393, 0
    %v424 = vsel %vm404, %v394, 0
    %v427 = vsel %vm404, %v395, 0
    %vm429 = vcmask 1043456
    %v431 = vsel %vm429, %v396, 0
    %433 = vmatprep.subr.bf16.mxu0 0
    %434 = vmatpush1.bf16.msra.mxu0 %v431
    %435 = vmatprep.subr.bf16.mxu0 0
    %436 = vmatpush1.bf16.msra.mxu0 0
    %437 = vmatprep.subr.bf16.mxu0 0
    %438 = vmatpush1.bf16.msra.mxu0 0
    %439 = vmatprep.subr.bf16.mxu0 0
    %440 = vmatpush1.bf16.msra.mxu0 0
    %441 = vmatprep.subr.bf16.mxu0 0
    %442 = vmatpush1.bf16.msra.mxu0 0
    %443 = vmatprep.subr.bf16.mxu0 0
    %444 = vmatpush1.bf16.msra.mxu0 0
    %445 = vmatprep.subr.bf16.mxu0 0
    %446 = vmatpush1.bf16.msra.mxu0 0
    %447 = vmatprep.subr.bf16.mxu0 0
    %448 = vmatpush1.bf16.msra.mxu0 0
    %449 = vmatprep.subr.bf16.mxu0 0
    %450 = vmatpush1.bf16.msra.mxu0 0
    %451 = vmatprep.subr.bf16.mxu0 0
    %452 = vmatpush1.bf16.msra.mxu0 0
    %453 = vmatprep.subr.bf16.mxu0 0
    %454 = vmatpush1.bf16.msra.mxu0 0
    %455 = vmatprep.subr.bf16.mxu0 0
    %456 = vmatpush1.bf16.msra.mxu0 0
    %457 = vmatprep.subr.bf16.mxu0 0
    %458 = vmatpush1.bf16.msra.mxu0 0
    %459 = vmatprep.subr.bf16.mxu0 0
    %460 = vmatpush1.bf16.msra.mxu0 0
    %461 = vmatprep.subr.bf16.mxu0 0
    %462 = vmatpush1.bf16.msra.mxu0 0
    %463 = vmatprep.subr.bf16.mxu0 0
    %464 = vmatpush1.bf16.msra.mxu0 0
    %465 = vmatprep.mubr.bf16.mxu0 0
    %466 = vmatmul.mubr.bf16.gmra.mrb[0].mxu0 %v406
    %v467 = vpop.f32.mrb[0].mxu0
    %v468 = vadd.f32 %v402, %v467
    %v469 = vpop.f32.mrb[0].mxu0
    %v470 = vpop.f32.mrb[0].mxu0
    %v471 = vadd.f32 %v402, %v470
    %v472 = vpop.f32.mrb[0].mxu0
    %473 = vmatprep.mubr.bf16.mxu0 0
    %474 = vmatmul.mubr.bf16.gmra.mrb[0].mxu0 %v409
    %v475 = vpop.f32.mrb[0].mxu0
    %v476 = vadd.f32 %v402, %v475
    %v477 = vpop.f32.mrb[0].mxu0
    %v478 = vpop.f32.mrb[0].mxu0
    %v479 = vadd.f32 %v402, %v478
    %v480 = vpop.f32.mrb[0].mxu0
    %481 = vmatprep.mubr.bf16.mxu0 0
    %482 = vmatmul.mubr.bf16.gmra.mrb[0].mxu0 %v412
    %v483 = vpop.f32.mrb[0].mxu0
    %v484 = vadd.f32 %v402, %v483
    %v485 = vpop.f32.mrb[0].mxu0
    %v486 = vpop.f32.mrb[0].mxu0
    %v487 = vadd.f32 %v402, %v486
    %v488 = vpop.f32.mrb[0].mxu0
    %489 = vmatprep.mubr.bf16.mxu0 0
    %490 = vmatmul.mubr.bf16.gmra.mrb[0].mxu0 %v415
    %v491 = vpop.f32.mrb[0].mxu0
    %v492 = vadd.f32 %v402, %v491
    %v493 = vpop.f32.mrb[0].mxu0
    %v494 = vpop.f32.mrb[0].mxu0
    %v495 = vadd.f32 %v402, %v494
    %v496 = vpop.f32.mrb[0].mxu0
    %497 = vmatprep.mubr.bf16.mxu0 0
    %498 = vmatmul.mubr.bf16.gmra.mrb[0].mxu0 %v418
    %v499 = vpop.f32.mrb[0].mxu0
    %v500 = vadd.f32 %v402, %v499
    %v501 = vpop.f32.mrb[0].mxu0
    %v502 = vpop.f32.mrb[0].mxu0
    %v503 = vadd.f32 %v402, %v502
    %v504 = vpop.f32.mrb[0].mxu0
    %505 = vmatprep.mubr.bf16.mxu0 0
    %506 = vmatmul.mubr.bf16.gmra.mrb[0].mxu0 %v421
    %v507 = vpop.f32.mrb[0].mxu0
    %v508 = vadd.f32 %v402, %v507
    %v509 = vpop.f32.mrb[0].mxu0
    %v510 = vpop.f32.mrb[0].mxu0
    %v511 = vadd.f32 %v402, %v510
    %v512 = vpop.f32.mrb[0].mxu0
    %513 = vmatprep.mubr.bf16.mxu0 0
    %514 = vmatmul.mubr.bf16.gmra.mrb[0].mxu0 %v424
    %v515 = vpop.f32.mrb[0].mxu0
    %v516 = vadd.f32 %v402, %v515
    %v517 = vpop.f32.mrb[0].mxu0
    %v518 = vpop.f32.mrb[0].mxu0
    %v519 = vadd.f32 %v402, %v518
    %v520 = vpop.f32.mrb[0].mxu0
    %521 = vmatprep.mubr.bf16.mxu0 0
    %522 = vmatmul.mubr.bf16.gmra.mrb[0].mxu0 %v427
    %v523 = vpop.f32.mrb[0].mxu0
    %v524 = vadd.f32 %v402, %v523
    %v525 = vpop.f32.mrb[0].mxu0
    %v526 = vpop.f32.mrb[0].mxu0
    %v527 = vadd.f32 %v402, %v526
    %v528 = vpop.f32.mrb[0].mxu0
    %529 = vdwg.mxu0
    %vm530 = vcmask 31744
    %v531 = vsel %vm530, %v468, -inf
    %532 = vmax.xlane.f32.xlu0 %v531
    %v533 = vpop.xlane.xlu0 %532
    %v534 = vsel %vm530, %v471, -inf
    %535 = vmax.xlane.f32.xlu0 %v534
    %v536 = vpop.xlane.xlu0 %535
    %v537 = vsel %vm530, %v476, -inf
    %538 = vmax.xlane.f32.xlu0 %v537
    %v539 = vpop.xlane.xlu0 %538
    %v540 = vsel %vm530, %v479, -inf
    %541 = vmax.xlane.f32.xlu0 %v540
    %v542 = vpop.xlane.xlu0 %541
    %v543 = vsel %vm530, %v484, -inf
    %544 = vmax.xlane.f32.xlu0 %v543
    %v545 = vpop.xlane.xlu0 %544
    %v546 = vsel %vm530, %v487, -inf
    %547 = vmax.xlane.f32.xlu0 %v546
    %v548 = vpop.xlane.xlu0 %547
    %v549 = vsel %vm530, %v492, -inf
    %550 = vmax.xlane.f32.xlu0 %v549
    %v551 = vpop.xlane.xlu0 %550
    %v552 = vsel %vm530, %v495, -inf
    %553 = vmax.xlane.f32.xlu0 %v552
    %v554 = vpop.xlane.xlu0 %553
    %v555 = vsel %vm530, %v500, -inf
    %556 = vmax.xlane.f32.xlu0 %v555
    %v557 = vpop.xlane.xlu0 %556
    %v558 = vsel %vm530, %v503, -inf
    %559 = vmax.xlane.f32.xlu0 %v558
    %v560 = vpop.xlane.xlu0 %559
    %v561 = vsel %vm530, %v508, -inf
    %562 = vmax.xlane.f32.xlu0 %v561
    %v563 = vpop.xlane.xlu0 %562
    %v564 = vsel %vm530, %v511, -inf
    %565 = vmax.xlane.f32.xlu0 %v564
    %v566 = vpop.xlane.xlu0 %565
    %v567 = vsel %vm530, %v516, -inf
    %568 = vmax.xlane.f32.xlu0 %v567
    %v569 = vpop.xlane.xlu0 %568
    %v570 = vsel %vm530, %v519, -inf
    %571 = vmax.xlane.f32.xlu0 %v570
    %v572 = vpop.xlane.xlu0 %571
    %v573 = vsel %vm530, %v524, -inf
    %574 = vmax.xlane.f32.xlu0 %v573
    %v575 = vpop.xlane.xlu0 %574
    %v576 = vsel %vm530, %v527, -inf
    %577 = vmax.xlane.f32.xlu0 %v576
    %v578 = vpop.xlane.xlu0 %577
    %v579 = vsub.f32 %v468, %v533
    %v580 = vsub.f32 %v471, %v536
    %v581 = vsub.f32 %v476, %v539
    %v582 = vsub.f32 %v479, %v542
    %v583 = vsub.f32 %v484, %v545
    %v584 = vsub.f32 %v487, %v548
    %v585 = vsub.f32 %v492, %v551
    %v586 = vsub.f32 %v495, %v554
    %v587 = vsub.f32 %v500, %v557
    %v588 = vsub.f32 %v503, %v560
    %v589 = vsub.f32 %v508, %v563
    %v590 = vsub.f32 %v511, %v566
    %v591 = vsub.f32 %v516, %v569
    %v592 = vsub.f32 %v519, %v572
    %v593 = vsub.f32 %v524, %v575
    %v594 = vsub.f32 %v527, %v578
    %v595 = vmul.f32 %v579, 1.442695
    %v596 = vpow.pop %v595
    %v597 = vmul.f32 %v580, 1.442695
    %v598 = vpow.pop %v597
    %v599 = vmul.f32 %v581, 1.442695
    %v600 = vpow.pop %v599
    %v601 = vmul.f32 %v582, 1.442695
    %v602 = vpow.pop %v601
    %v603 = vmul.f32 %v583, 1.442695
    %v604 = vpow.pop %v603
    %v605 = vmul.f32 %v584, 1.442695
    %v606 = vpow.pop %v605
    %v607 = vmul.f32 %v585, 1.442695
    %v608 = vpow.pop %v607
    %v609 = vmul.f32 %v586, 1.442695
    %v610 = vpow.pop %v609
    %v611 = vmul.f32 %v587, 1.442695
    %v612 = vpow.pop %v611
    %v613 = vmul.f32 %v588, 1.442695
    %v614 = vpow.pop %v613
    %v615 = vmul.f32 %v589, 1.442695
    %v616 = vpow.pop %v615
    %v617 = vmul.f32 %v590, 1.442695
    %v618 = vpow.pop %v617
    %v619 = vmul.f32 %v591, 1.442695
    %v620 = vpow.pop %v619
    %v621 = vmul.f32 %v592, 1.442695
    %v622 = vpow.pop %v621
    %v623 = vmul.f32 %v593, 1.442695
    %v624 = vpow.pop %v623
    %v625 = vmul.f32 %v594, 1.442695
    %v626 = vpow.pop %v625
    %v627 = vsel %vm530, %v596, 0.0
    %628 = vadd.xlane.f32.xlu0 %v627
    %v629 = vpop.xlane.xlu0 %628
    %v630 = vsel %vm530, %v598, 0.0
    %631 = vadd.xlane.f32.xlu0 %v630
    %v632 = vpop.xlane.xlu0 %631
    %v633 = vsel %vm530, %v600, 0.0
    %634 = vadd.xlane.f32.xlu0 %v633
    %v635 = vpop.xlane.xlu0 %634
    %v636 = vsel %vm530, %v602, 0.0
    %637 = vadd.xlane.f32.xlu0 %v636
    %v638 = vpop.xlane.xlu0 %637
    %v639 = vsel %vm530, %v604, 0.0
    %640 = vadd.xlane.f32.xlu0 %v639
    %v641 = vpop.xlane.xlu0 %640
    %v642 = vsel %vm530, %v606, 0.0
    %643 = vadd.xlane.f32.xlu0 %v642
    %v644 = vpop.xlane.xlu0 %643
    %v645 = vsel %vm530, %v608, 0.0
    %646 = vadd.xlane.f32.xlu0 %v645
    %v647 = vpop.xlane.xlu0 %646
    %v648 = vsel %vm530, %v610, 0.0
    %649 = vadd.xlane.f32.xlu0 %v648
    %v650 = vpop.xlane.xlu0 %649
    %v651 = vsel %vm530, %v612, 0.0
    %652 = vadd.xlane.f32.xlu0 %v651
    %v653 = vpop.xlane.xlu0 %652
    %v654 = vsel %vm530, %v614, 0.0
    %655 = vadd.xlane.f32.xlu0 %v654
    %v656 = vpop.xlane.xlu0 %655
    %v657 = vsel %vm530, %v616, 0.0
    %658 = vadd.xlane.f32.xlu0 %v657
    %v659 = vpop.xlane.xlu0 %658
    %v660 = vsel %vm530, %v618, 0.0
    %661 = vadd.xlane.f32.xlu0 %v660
    %v662 = vpop.xlane.xlu0 %661
    %v663 = vsel %vm530, %v620, 0.0
    %664 = vadd.xlane.f32.xlu0 %v663
    %v665 = vpop.xlane.xlu0 %664
    %v666 = vsel %vm530, %v622, 0.0
    %667 = vadd.xlane.f32.xlu0 %v666
    %v668 = vpop.xlane.xlu0 %667
    %v669 = vsel %vm530, %v624, 0.0
    %670 = vadd.xlane.f32.xlu0 %v669
    %v671 = vpop.xlane.xlu0 %670
    %v672 = vsel %vm530, %v626, 0.0
    %673 = vadd.xlane.f32.xlu0 %v672
    %v674 = vpop.xlane.xlu0 %673
    %v675 = vrcp.pop %v629
    %v676 = vrcp.pop %v632
    %v677 = vrcp.pop %v635
    %v678 = vrcp.pop %v638
    %v679 = vrcp.pop %v641
    %v680 = vrcp.pop %v644
    %v681 = vrcp.pop %v647
    %v682 = vrcp.pop %v650
    %v683 = vrcp.pop %v653
    %v684 = vrcp.pop %v656
    %v685 = vrcp.pop %v659
    %v686 = vrcp.pop %v662
    %v687 = vrcp.pop %v665
    %v688 = vrcp.pop %v668
    %v689 = vrcp.pop %v671
    %v690 = vrcp.pop %v674
    %v691 = vmul.f32 %v596, %v675
    %v692 = vmul.f32 %v598, %v676
    %v693 = vmul.f32 %v600, %v677
    %v694 = vmul.f32 %v602, %v678
    %v695 = vmul.f32 %v604, %v679
    %v696 = vmul.f32 %v606, %v680
    %v697 = vmul.f32 %v608, %v681
    %v698 = vmul.f32 %v610, %v682
    %v699 = vmul.f32 %v612, %v683
    %v700 = vmul.f32 %v614, %v684
    %v701 = vmul.f32 %v616, %v685
    %v702 = vmul.f32 %v618, %v686
    %v703 = vmul.f32 %v620, %v687
    %v704 = vmul.f32 %v622, %v688
    %v705 = vmul.f32 %v624, %v689
    %v706 = vmul.f32 %v626, %v690
    %v707 = vld [vmem:[#allocation5] sm:$0xff]
    %v708 = vld [vmem:[#allocation5 + $0x8] sm:$0xff]
    %v709 = vld [vmem:[#allocation5 + $0x10] sm:$0xff]
    %v710 = vld [vmem:[#allocation5 + $0x18] sm:$0xff]
    %v711 = vld [vmem:[#allocation5 + $0x20] sm:$0xff]
    %v712 = vld [vmem:[#allocation5 + $0x28] sm:$0xff]
    %v713 = vld [vmem:[#allocation5 + $0x30] sm:$0xff]
    %v714 = vld [vmem:[#allocation5 + $0x38] sm:$0xff]
    %v715 = vld [vmem:[#allocation5 + $0x40] sm:$0xff]
    %v716 = vld [vmem:[#allocation5 + $0x48] sm:$0xff]
    %v717 = vld [vmem:[#allocation5 + $0x50] sm:$0xff]
    %v718 = vld [vmem:[#allocation5 + $0x58] sm:$0xff]
    %v719 = vld [vmem:[#allocation5 + $0x60] sm:$0xff]
    %v720 = vld [vmem:[#allocation5 + $0x68] sm:$0xff]
    %v721 = vld [vmem:[#allocation5 + $0x70] sm:$0xff]
    %v722 = vld [vmem:[#allocation5 + $0x78] sm:$0xff]
    %724 = vset.pattern.permute.xlu0 0
    %725 = vperm.xlu0 %724, %v691
    %v726 = vpop.permute.xlu0 %725
    %729 = vset.pattern.permute.xlu0 0
    %730 = vperm.xlu0 %729, %v692
    %v731 = vpop.permute.xlu0 %730
    %734 = vset.pattern.permute.xlu0 0
    %735 = vperm.xlu0 %734, %v693
    %v736 = vpop.permute.xlu0 %735
    %739 = vset.pattern.permute.xlu0 0
    %740 = vperm.xlu0 %739, %v694
    %v741 = vpop.permute.xlu0 %740
    %744 = vset.pattern.permute.xlu0 0
    %745 = vperm.xlu0 %744, %v695
    %v746 = vpop.permute.xlu0 %745
    %749 = vset.pattern.permute.xlu0 0
    %750 = vperm.xlu0 %749, %v696
    %v751 = vpop.permute.xlu0 %750
    %754 = vset.pattern.permute.xlu0 0
    %755 = vperm.xlu0 %754, %v697
    %v756 = vpop.permute.xlu0 %755
    %759 = vset.pattern.permute.xlu0 0
    %760 = vperm.xlu0 %759, %v698
    %v761 = vpop.permute.xlu0 %760
    %764 = vset.pattern.permute.xlu0 0
    %765 = vperm.xlu0 %764, %v699
    %v766 = vpop.permute.xlu0 %765
    %769 = vset.pattern.permute.xlu0 0
    %770 = vperm.xlu0 %769, %v700
    %v771 = vpop.permute.xlu0 %770
    %774 = vset.pattern.permute.xlu0 0
    %775 = vperm.xlu0 %774, %v701
    %v776 = vpop.permute.xlu0 %775
    %779 = vset.pattern.permute.xlu0 0
    %780 = vperm.xlu0 %779, %v702
    %v781 = vpop.permute.xlu0 %780
    %784 = vset.pattern.permute.xlu0 0
    %785 = vperm.xlu0 %784, %v703
    %v786 = vpop.permute.xlu0 %785
    %789 = vset.pattern.permute.xlu0 0
    %790 = vperm.xlu0 %789, %v704
    %v791 = vpop.permute.xlu0 %790
    %794 = vset.pattern.permute.xlu0 0
    %795 = vperm.xlu0 %794, %v705
    %v796 = vpop.permute.xlu0 %795
    %799 = vset.pattern.permute.xlu0 0
    %800 = vperm.xlu0 %799, %v706
    %v801 = vpop.permute.xlu0 %800
    %v803 = vmul.f32 %v726, %v707
    %v804 = vmul.f32 %v731, %v708
    %v805 = vmul.f32 %v736, %v709
    %v806 = vmul.f32 %v741, %v710
    %v807 = vmul.f32 %v746, %v711
    %v808 = vmul.f32 %v751, %v712
    %v809 = vmul.f32 %v756, %v713
    %v810 = vmul.f32 %v761, %v714
    %v811 = vmul.f32 %v766, %v715
    %v812 = vmul.f32 %v771, %v716
    %v813 = vmul.f32 %v776, %v717
    %v814 = vmul.f32 %v781, %v718
    %v815 = vmul.f32 %v786, %v719
    %v816 = vmul.f32 %v791, %v720
    %v817 = vmul.f32 %v796, %v721
    %v818 = vmul.f32 %v801, %v722
    %v819 = vld [vmem:[#allocation7] sm:$0xff]
    %v820 = vld [vmem:[#allocation7 + $0x8] sm:$0xff]
    %v821 = vld [vmem:[#allocation7 + $0x10] sm:$0xff]
    %v822 = vld [vmem:[#allocation7 + $0x18] sm:$0xff]
    %v823 = vld [vmem:[#allocation7 + $0x20] sm:$0xff]
    %v824 = vld [vmem:[#allocation7 + $0x28] sm:$0xff]
    %v825 = vld [vmem:[#allocation7 + $0x30] sm:$0xff]
    %v826 = vld [vmem:[#allocation7 + $0x38] sm:$0xff]
    %v827 = vld [vmem:[#allocation7 + $0x40] sm:$0xff]
    %v828 = vld [vmem:[#allocation7 + $0x48] sm:$0xff]
    %v829 = vld [vmem:[#allocation7 + $0x50] sm:$0xff]
    %v830 = vld [vmem:[#allocation7 + $0x58] sm:$0xff]
    %v831 = vld [vmem:[#allocation7 + $0x60] sm:$0xff]
    %v832 = vld [vmem:[#allocation7 + $0x68] sm:$0xff]
    %v833 = vld [vmem:[#allocation7 + $0x70] sm:$0xff]
    %v834 = vld [vmem:[#allocation7 + $0x78] sm:$0xff]
    %835 = vset.pattern.permute.xlu0 1
    %836 = vperm.xlu0 %835, %v691
    %v837 = vpop.permute.xlu0 %836
    %839 = vset.pattern.permute.xlu0 1
    %840 = vperm.xlu0 %839, %v692
    %v841 = vpop.permute.xlu0 %840
    %843 = vset.pattern.permute.xlu0 1
    %844 = vperm.xlu0 %843, %v693
    %v845 = vpop.permute.xlu0 %844
    %847 = vset.pattern.permute.xlu0 1
    %848 = vperm.xlu0 %847, %v694
    %v849 = vpop.permute.xlu0 %848
    %851 = vset.pattern.permute.xlu0 1
    %852 = vperm.xlu0 %851, %v695
    %v853 = vpop.permute.xlu0 %852
    %855 = vset.pattern.permute.xlu0 1
    %856 = vperm.xlu0 %855, %v696
    %v857 = vpop.permute.xlu0 %856
    %859 = vset.pattern.permute.xlu0 1
    %860 = vperm.xlu0 %859, %v697
    %v861 = vpop.permute.xlu0 %860
    %863 = vset.pattern.permute.xlu0 1
    %864 = vperm.xlu0 %863, %v698
    %v865 = vpop.permute.xlu0 %864
    %867 = vset.pattern.permute.xlu0 1
    %868 = vperm.xlu0 %867, %v699
    %v869 = vpop.permute.xlu0 %868
    %871 = vset.pattern.permute.xlu0 1
    %872 = vperm.xlu0 %871, %v700
    %v873 = vpop.permute.xlu0 %872
    %875 = vset.pattern.permute.xlu0 1
    %876 = vperm.xlu0 %875, %v701
    %v877 = vpop.permute.xlu0 %876
    %879 = vset.pattern.permute.xlu0 1
    %880 = vperm.xlu0 %879, %v702
    %v881 = vpop.permute.xlu0 %880
    %883 = vset.pattern.permute.xlu0 1
    %884 = vperm.xlu0 %883, %v703
    %v885 = vpop.permute.xlu0 %884
    %887 = vset.pattern.permute.xlu0 1
    %888 = vperm.xlu0 %887, %v704
    %v889 = vpop.permute.xlu0 %888
    %891 = vset.pattern.permute.xlu0 1
    %892 = vperm.xlu0 %891, %v705
    %v893 = vpop.permute.xlu0 %892
    %895 = vset.pattern.permute.xlu0 1
    %896 = vperm.xlu0 %895, %v706
    %v897 = vpop.permute.xlu0 %896
    %v899 = vmul.f32 %v837, %v819
    %v900 = vmul.f32 %v841, %v820
    %v901 = vmul.f32 %v845, %v821
    %v902 = vmul.f32 %v849, %v822
    %v903 = vmul.f32 %v853, %v823
    %v904 = vmul.f32 %v857, %v824
    %v905 = vmul.f32 %v861, %v825
    %v906 = vmul.f32 %v865, %v826
    %v907 = vmul.f32 %v869, %v827
    %v908 = vmul.f32 %v873, %v828
    %v909 = vmul.f32 %v877, %v829
    %v910 = vmul.f32 %v881, %v830
    %v911 = vmul.f32 %v885, %v831
    %v912 = vmul.f32 %v889, %v832
    %v913 = vmul.f32 %v893, %v833
    %v914 = vmul.f32 %v897, %v834
    %v915 = vadd.f32 %v803, %v899
    %v916 = vadd.f32 %v804, %v900
    %v917 = vadd.f32 %v805, %v901
    %v918 = vadd.f32 %v806, %v902
    %v919 = vadd.f32 %v807, %v903
    %v920 = vadd.f32 %v808, %v904
    %v921 = vadd.f32 %v809, %v905
    %v922 = vadd.f32 %v810, %v906
    %v923 = vadd.f32 %v811, %v907
    %v924 = vadd.f32 %v812, %v908
    %v925 = vadd.f32 %v813, %v909
    %v926 = vadd.f32 %v814, %v910
    %v927 = vadd.f32 %v815, %v911
    %v928 = vadd.f32 %v816, %v912
    %v929 = vadd.f32 %v817, %v913
    %v930 = vadd.f32 %v818, %v914
    %v931 = vld [vmem:[#allocation8] sm:$0xff]
    %v932 = vld [vmem:[#allocation8 + $0x8] sm:$0xff]
    %v933 = vld [vmem:[#allocation8 + $0x10] sm:$0xff]
    %v934 = vld [vmem:[#allocation8 + $0x18] sm:$0xff]
    %v935 = vld [vmem:[#allocation8 + $0x20] sm:$0xff]
    %v936 = vld [vmem:[#allocation8 + $0x28] sm:$0xff]
    %v937 = vld [vmem:[#allocation8 + $0x30] sm:$0xff]
    %v938 = vld [vmem:[#allocation8 + $0x38] sm:$0xff]
    %v939 = vld [vmem:[#allocation8 + $0x40] sm:$0xff]
    %v940 = vld [vmem:[#allocation8 + $0x48] sm:$0xff]
    %v941 = vld [vmem:[#allocation8 + $0x50] sm:$0xff]
    %v942 = vld [vmem:[#allocation8 + $0x58] sm:$0xff]
    %v943 = vld [vmem:[#allocation8 + $0x60] sm:$0xff]
    %v944 = vld [vmem:[#allocation8 + $0x68] sm:$0xff]
    %v945 = vld [vmem:[#allocation8 + $0x70] sm:$0xff]
    %v946 = vld [vmem:[#allocation8 + $0x78] sm:$0xff]
    %947 = vset.pattern.permute.xlu0 2
    %948 = vperm.xlu0 %947, %v691
    %v949 = vpop.permute.xlu0 %948
    %951 = vset.pattern.permute.xlu0 2
    %952 = vperm.xlu0 %951, %v692
    %v953 = vpop.permute.xlu0 %952
    %955 = vset.pattern.permute.xlu0 2
    %956 = vperm.xlu0 %955, %v693
    %v957 = vpop.permute.xlu0 %956
    %959 = vset.pattern.permute.xlu0 2
    %960 = vperm.xlu0 %959, %v694
    %v961 = vpop.permute.xlu0 %960
    %963 = vset.pattern.permute.xlu0 2
    %964 = vperm.xlu0 %963, %v695
    %v965 = vpop.permute.xlu0 %964
    %967 = vset.pattern.permute.xlu0 2
    %968 = vperm.xlu0 %967, %v696
    %v969 = vpop.permute.xlu0 %968
    %971 = vset.pattern.permute.xlu0 2
    %972 = vperm.xlu0 %971, %v697
    %v973 = vpop.permute.xlu0 %972
    %975 = vset.pattern.permute.xlu0 2
    %976 = vperm.xlu0 %975, %v698
    %v977 = vpop.permute.xlu0 %976
    %979 = vset.pattern.permute.xlu0 2
    %980 = vperm.xlu0 %979, %v699
    %v981 = vpop.permute.xlu0 %980
    %983 = vset.pattern.permute.xlu0 2
    %984 = vperm.xlu0 %983, %v700
    %v985 = vpop.permute.xlu0 %984
    %987 = vset.pattern.permute.xlu0 2
    %988 = vperm.xlu0 %987, %v701
    %v989 = vpop.permute.xlu0 %988
    %991 = vset.pattern.permute.xlu0 2
    %992 = vperm.xlu0 %991, %v702
    %v993 = vpop.permute.xlu0 %992
    %995 = vset.pattern.permute.xlu0 2
    %996 = vperm.xlu0 %995, %v703
    %v997 = vpop.permute.xlu0 %996
    %999 = vset.pattern.permute.xlu0 2
    %1000 = vperm.xlu0 %999, %v704
    %v1001 = vpop.permute.xlu0 %1000
    %1003 = vset.pattern.permute.xlu0 2
    %1004 = vperm.xlu0 %1003, %v705
    %v1005 = vpop.permute.xlu0 %1004
    %1007 = vset.pattern.permute.xlu0 2
    %1008 = vperm.xlu0 %1007, %v706
    %v1009 = vpop.permute.xlu0 %1008
    %v1011 = vmul.f32 %v949, %v931
    %v1012 = vmul.f32 %v953, %v932
    %v1013 = vmul.f32 %v957, %v933
    %v1014 = vmul.f32 %v961, %v934
    %v1015 = vmul.f32 %v965, %v935
    %v1016 = vmul.f32 %v969, %v936
    %v1017 = vmul.f32 %v973, %v937
    %v1018 = vmul.f32 %v977, %v938
    %v1019 = vmul.f32 %v981, %v939
    %v1020 = vmul.f32 %v985, %v940
    %v1021 = vmul.f32 %v989, %v941
    %v1022 = vmul.f32 %v993, %v942
    %v1023 = vmul.f32 %v997, %v943
    %v1024 = vmul.f32 %v1001, %v944
    %v1025 = vmul.f32 %v1005, %v945
    %v1026 = vmul.f32 %v1009, %v946
    %v1027 = vadd.f32 %v915, %v1011
    %v1028 = vadd.f32 %v916, %v1012
    %v1029 = vadd.f32 %v917, %v1013
    %v1030 = vadd.f32 %v918, %v1014
    %v1031 = vadd.f32 %v919, %v1015
    %v1032 = vadd.f32 %v920, %v1016
    %v1033 = vadd.f32 %v921, %v1017
    %v1034 = vadd.f32 %v922, %v1018
    %v1035 = vadd.f32 %v923, %v1019
    %v1036 = vadd.f32 %v924, %v1020
    %v1037 = vadd.f32 %v925, %v1021
    %v1038 = vadd.f32 %v926, %v1022
    %v1039 = vadd.f32 %v927, %v1023
    %v1040 = vadd.f32 %v928, %v1024
    %v1041 = vadd.f32 %v929, %v1025
    %v1042 = vadd.f32 %v930, %v1026
    %v1043 = vld [vmem:[#allocation10] sm:$0xff]
    %v1044 = vld [vmem:[#allocation10 + $0x8] sm:$0xff]
    %v1045 = vld [vmem:[#allocation10 + $0x10] sm:$0xff]
    %v1046 = vld [vmem:[#allocation10 + $0x18] sm:$0xff]
    %v1047 = vld [vmem:[#allocation10 + $0x20] sm:$0xff]
    %v1048 = vld [vmem:[#allocation10 + $0x28] sm:$0xff]
    %v1049 = vld [vmem:[#allocation10 + $0x30] sm:$0xff]
    %v1050 = vld [vmem:[#allocation10 + $0x38] sm:$0xff]
    %v1051 = vld [vmem:[#allocation10 + $0x40] sm:$0xff]
    %v1052 = vld [vmem:[#allocation10 + $0x48] sm:$0xff]
    %v1053 = vld [vmem:[#allocation10 + $0x50] sm:$0xff]
    %v1054 = vld [vmem:[#allocation10 + $0x58] sm:$0xff]
    %v1055 = vld [vmem:[#allocation10 + $0x60] sm:$0xff]
    %v1056 = vld [vmem:[#allocation10 + $0x68] sm:$0xff]
    %v1057 = vld [vmem:[#allocation10 + $0x70] sm:$0xff]
    %v1058 = vld [vmem:[#allocation10 + $0x78] sm:$0xff]
    %1059 = vset.pattern.permute.xlu0 3
    %1060 = vperm.xlu0 %1059, %v691
    %v1061 = vpop.permute.xlu0 %1060
    %1063 = vset.pattern.permute.xlu0 3
    %1064 = vperm.xlu0 %1063, %v692
    %v1065 = vpop.permute.xlu0 %1064
    %1067 = vset.pattern.permute.xlu0 3
    %1068 = vperm.xlu0 %1067, %v693
    %v1069 = vpop.permute.xlu0 %1068
    %1071 = vset.pattern.permute.xlu0 3
    %1072 = vperm.xlu0 %1071, %v694
    %v1073 = vpop.permute.xlu0 %1072
    %1075 = vset.pattern.permute.xlu0 3
    %1076 = vperm.xlu0 %1075, %v695
    %v1077 = vpop.permute.xlu0 %1076
    %1079 = vset.pattern.permute.xlu0 3
    %1080 = vperm.xlu0 %1079, %v696
    %v1081 = vpop.permute.xlu0 %1080
    %1083 = vset.pattern.permute.xlu0 3
    %1084 = vperm.xlu0 %1083, %v697
    %v1085 = vpop.permute.xlu0 %1084
    %1087 = vset.pattern.permute.xlu0 3
    %1088 = vperm.xlu0 %1087, %v698
    %v1089 = vpop.permute.xlu0 %1088
    %1091 = vset.pattern.permute.xlu0 3
    %1092 = vperm.xlu0 %1091, %v699
    %v1093 = vpop.permute.xlu0 %1092
    %1095 = vset.pattern.permute.xlu0 3
    %1096 = vperm.xlu0 %1095, %v700
    %v1097 = vpop.permute.xlu0 %1096
    %1099 = vset.pattern.permute.xlu0 3
    %1100 = vperm.xlu0 %1099, %v701
    %v1101 = vpop.permute.xlu0 %1100
    %1103 = vset.pattern.permute.xlu0 3
    %1104 = vperm.xlu0 %1103, %v702
    %v1105 = vpop.permute.xlu0 %1104
    %1107 = vset.pattern.permute.xlu0 3
    %1108 = vperm.xlu0 %1107, %v703
    %v1109 = vpop.permute.xlu0 %1108
    %1111 = vset.pattern.permute.xlu0 3
    %1112 = vperm.xlu0 %1111, %v704
    %v1113 = vpop.permute.xlu0 %1112
    %1115 = vset.pattern.permute.xlu0 3
    %1116 = vperm.xlu0 %1115, %v705
    %v1117 = vpop.permute.xlu0 %1116
    %1119 = vset.pattern.permute.xlu0 3
    %1120 = vperm.xlu0 %1119, %v706
    %v1121 = vpop.permute.xlu0 %1120
    %v1123 = vmul.f32 %v1061, %v1043
    %v1124 = vmul.f32 %v1065, %v1044
    %v1125 = vmul.f32 %v1069, %v1045
    %v1126 = vmul.f32 %v1073, %v1046
    %v1127 = vmul.f32 %v1077, %v1047
    %v1128 = vmul.f32 %v1081, %v1048
    %v1129 = vmul.f32 %v1085, %v1049
    %v1130 = vmul.f32 %v1089, %v1050
    %v1131 = vmul.f32 %v1093, %v1051
    %v1132 = vmul.f32 %v1097, %v1052
    %v1133 = vmul.f32 %v1101, %v1053
    %v1134 = vmul.f32 %v1105, %v1054
    %v1135 = vmul.f32 %v1109, %v1055
    %v1136 = vmul.f32 %v1113, %v1056
    %v1137 = vmul.f32 %v1117, %v1057
    %v1138 = vmul.f32 %v1121, %v1058
    %v1139 = vadd.f32 %v1027, %v1123
    %v1140 = vadd.f32 %v1028, %v1124
    %v1141 = vadd.f32 %v1029, %v1125
    %v1142 = vadd.f32 %v1030, %v1126
    %v1143 = vadd.f32 %v1031, %v1127
    %v1144 = vadd.f32 %v1032, %v1128
    %v1145 = vadd.f32 %v1033, %v1129
    %v1146 = vadd.f32 %v1034, %v1130
    %v1147 = vadd.f32 %v1035, %v1131
    %v1148 = vadd.f32 %v1036, %v1132
    %v1149 = vadd.f32 %v1037, %v1133
    %v1150 = vadd.f32 %v1038, %v1134
    %v1151 = vadd.f32 %v1039, %v1135
    %v1152 = vadd.f32 %v1040, %v1136
    %v1153 = vadd.f32 %v1041, %v1137
    %v1154 = vadd.f32 %v1042, %v1138
    %v1155 = vpack.c.bf16 %v1140, %v1139
    %v1156 = vpack.c.bf16 %v1142, %v1141
    %v1157 = vpack.c.bf16 %v1144, %v1143
    %v1158 = vpack.c.bf16 %v1146, %v1145
    %v1159 = vpack.c.bf16 %v1148, %v1147
    %v1160 = vpack.c.bf16 %v1150, %v1149
    %v1161 = vpack.c.bf16 %v1152, %v1151
    %v1162 = vpack.c.bf16 %v1154, %v1153
    %v1163 = vld [vmem:[#allocation17] sm:$0xf]
    %v1164 = vld [vmem:[#allocation19] sm:$0x1]
    %v1166 = vlaneseq
    %v1167 = vshrl.u32 %v1166, 7
    %v1168 = vsub.s32 0, %v1167
    %v1169 = vrot.slane %v1164, %v1168
    %v1172 = vsel %vm404, %v1155, 0
    %v1175 = vsel %vm404, %v1156, 0
    %v1178 = vsel %vm404, %v1157, 0
    %v1181 = vsel %vm404, %v1158, 0
    %v1184 = vsel %vm404, %v1159, 0
    %v1187 = vsel %vm404, %v1160, 0
    %v1190 = vsel %vm404, %v1161, 0
    %v1193 = vsel %vm404, %v1162, 0
    %v1196 = vsel %vm429, %v1163, 0
    %1198 = vmatprep.subr.bf16.mxu0 0
    %1199 = vmatpush1.bf16.msra.mxu0 %v1196
    %1200 = vmatprep.subr.bf16.mxu0 0
    %1201 = vmatpush1.bf16.msra.mxu0 0
    %1202 = vmatprep.subr.bf16.mxu0 0
    %1203 = vmatpush1.bf16.msra.mxu0 0
    %1204 = vmatprep.subr.bf16.mxu0 0
    %1205 = vmatpush1.bf16.msra.mxu0 0
    %1206 = vmatprep.subr.bf16.mxu0 0
    %1207 = vmatpush1.bf16.msra.mxu0 0
    %1208 = vmatprep.subr.bf16.mxu0 0
    %1209 = vmatpush1.bf16.msra.mxu0 0
    %1210 = vmatprep.subr.bf16.mxu0 0
    %1211 = vmatpush1.bf16.msra.mxu0 0
    %1212 = vmatprep.subr.bf16.mxu0 0
    %1213 = vmatpush1.bf16.msra.mxu0 0
    %1214 = vmatprep.subr.bf16.mxu0 0
    %1215 = vmatpush1.bf16.msra.mxu0 0
    %1216 = vmatprep.subr.bf16.mxu0 0
    %1217 = vmatpush1.bf16.msra.mxu0 0
    %1218 = vmatprep.subr.bf16.mxu0 0
    %1219 = vmatpush1.bf16.msra.mxu0 0
    %1220 = vmatprep.subr.bf16.mxu0 0
    %1221 = vmatpush1.bf16.msra.mxu0 0
    %1222 = vmatprep.subr.bf16.mxu0 0
    %1223 = vmatpush1.bf16.msra.mxu0 0
    %1224 = vmatprep.subr.bf16.mxu0 0
    %1225 = vmatpush1.bf16.msra.mxu0 0
    %1226 = vmatprep.subr.bf16.mxu0 0
    %1227 = vmatpush1.bf16.msra.mxu0 0
    %1228 = vmatprep.subr.bf16.mxu0 0
    %1229 = vmatpush1.bf16.msra.mxu0 0
    %1230 = vmatprep.mubr.bf16.mxu0 0
    %1231 = vmatmul.mubr.bf16.gmra.mrb[0].mxu0 %v1172
    %v1232 = vpop.f32.mrb[0].mxu0
    %v1233 = vadd.f32 %v1169, %v1232
    %v1234 = vpop.f32.mrb[0].mxu0
    %v1235 = vpop.f32.mrb[0].mxu0
    %v1236 = vadd.f32 %v1169, %v1235
    %v1237 = vpop.f32.mrb[0].mxu0
    %1238 = vmatprep.mubr.bf16.mxu0 0
    %1239 = vmatmul.mubr.bf16.gmra.mrb[0].mxu0 %v1175
    %v1240 = vpop.f32.mrb[0].mxu0
    %v1241 = vadd.f32 %v1169, %v1240
    %v1242 = vpop.f32.mrb[0].mxu0
    %v1243 = vpop.f32.mrb[0].mxu0
    %v1244 = vadd.f32 %v1169, %v1243
    %v1245 = vpop.f32.mrb[0].mxu0
    %1246 = vmatprep.mubr.bf16.mxu0 0
    %1247 = vmatmul.mubr.bf16.gmra.mrb[0].mxu0 %v1178
    %v1248 = vpop.f32.mrb[0].mxu0
    %v1249 = vadd.f32 %v1169, %v1248
    %v1250 = vpop.f32.mrb[0].mxu0
    %v1251 = vpop.f32.mrb[0].mxu0
    %v1252 = vadd.f32 %v1169, %v1251
    %v1253 = vpop.f32.mrb[0].mxu0
    %1254 = vmatprep.mubr.bf16.mxu0 0
    %1255 = vmatmul.mubr.bf16.gmra.mrb[0].mxu0 %v1181
    %v1256 = vpop.f32.mrb[0].mxu0
    %v1257 = vadd.f32 %v1169, %v1256
    %v1258 = vpop.f32.mrb[0].mxu0
    %v1259 = vpop.f32.mrb[0].mxu0
    %v1260 = vadd.f32 %v1169, %v1259
    %v1261 = vpop.f32.mrb[0].mxu0
    %1262 = vmatprep.mubr.bf16.mxu0 0
    %1263 = vmatmul.mubr.bf16.gmra.mrb[0].mxu0 %v1184
    %v1264 = vpop.f32.mrb[0].mxu0
    %v1265 = vadd.f32 %v1169, %v1264
    %v1266 = vpop.f32.mrb[0].mxu0
    %v1267 = vpop.f32.mrb[0].mxu0
    %v1268 = vadd.f32 %v1169, %v1267
    %v1269 = vpop.f32.mrb[0].mxu0
    %1270 = vmatprep.mubr.bf16.mxu0 0
    %1271 = vmatmul.mubr.bf16.gmra.mrb[0].mxu0 %v1187
    %v1272 = vpop.f32.mrb[0].mxu0
    %v1273 = vadd.f32 %v1169, %v1272
    %v1274 = vpop.f32.mrb[0].mxu0
    %v1275 = vpop.f32.mrb[0].mxu0
    %v1276 = vadd.f32 %v1169, %v1275
    %v1277 = vpop.f32.mrb[0].mxu0
    %1278 = vmatprep.mubr.bf16.mxu0 0
    %1279 = vmatmul.mubr.bf16.gmra.mrb[0].mxu0 %v1190
    %v1280 = vpop.f32.mrb[0].mxu0
    %v1281 = vadd.f32 %v1169, %v1280
    %v1282 = vpop.f32.mrb[0].mxu0
    %v1283 = vpop.f32.mrb[0].mxu0
    %v1284 = vadd.f32 %v1169, %v1283
    %v1285 = vpop.f32.mrb[0].mxu0
    %1286 = vmatprep.mubr.bf16.mxu0 0
    %1287 = vmatmul.mubr.bf16.gmra.mrb[0].mxu0 %v1193
    %v1288 = vpop.f32.mrb[0].mxu0
    %v1289 = vadd.f32 %v1169, %v1288
    %v1290 = vpop.f32.mrb[0].mxu0
    %v1291 = vpop.f32.mrb[0].mxu0
    %v1292 = vadd.f32 %v1169, %v1291
    %v1293 = vpop.f32.mrb[0].mxu0
    %1294 = vdwg.mxu0
    %v1295 = vmax.f32 %v1233, 0.0
    %v1296 = vmax.f32 %v1236, 0.0
    %v1297 = vmax.f32 %v1241, 0.0
    %v1298 = vmax.f32 %v1244, 0.0
    %v1299 = vmax.f32 %v1249, 0.0
    %v1300 = vmax.f32 %v1252, 0.0
    %v1301 = vmax.f32 %v1257, 0.0
    %v1302 = vmax.f32 %v1260, 0.0
    %v1303 = vmax.f32 %v1265, 0.0
    %v1304 = vmax.f32 %v1268, 0.0
    %v1305 = vmax.f32 %v1273, 0.0
    %v1306 = vmax.f32 %v1276, 0.0
    %v1307 = vmax.f32 %v1281, 0.0
    %v1308 = vmax.f32 %v1284, 0.0
    %v1309 = vmax.f32 %v1289, 0.0
    %v1310 = vmax.f32 %v1292, 0.0
    %1311 = vst.msk [vmem:[#allocation20] sm:$0xff] %vm250, %v1295
    %1312 = vst.msk [vmem:[#allocation20 + $0x8] sm:$0xff] %vm250, %v1296
    %1313 = vst.msk [vmem:[#allocation20 + $0x10] sm:$0xff] %vm250, %v1297
    %1314 = vst.msk [vmem:[#allocation20 + $0x18] sm:$0xff] %vm250, %v1298
    %1315 = vst.msk [vmem:[#allocation20 + $0x20] sm:$0xff] %vm250, %v1299
    %1316 = vst.msk [vmem:[#allocation20 + $0x28] sm:$0xff] %vm250, %v1300
    %1317 = vst.msk [vmem:[#allocation20 + $0x30] sm:$0xff] %vm250, %v1301
    %1318 = vst.msk [vmem:[#allocation20 + $0x38] sm:$0xff] %vm250, %v1302
    %1319 = vst.msk [vmem:[#allocation20 + $0x40] sm:$0xff] %vm250, %v1303
    %1320 = vst.msk [vmem:[#allocation20 + $0x48] sm:$0xff] %vm250, %v1304
    %1321 = vst.msk [vmem:[#allocation20 + $0x50] sm:$0xff] %vm250, %v1305
    %1322 = vst.msk [vmem:[#allocation20 + $0x58] sm:$0xff] %vm250, %v1306
    %1323 = vst.msk [vmem:[#allocation20 + $0x60] sm:$0xff] %vm250, %v1307
    %1324 = vst.msk [vmem:[#allocation20 + $0x68] sm:$0xff] %vm250, %v1308
    %1325 = vst.msk [vmem:[#allocation20 + $0x70] sm:$0xff] %vm250, %v1309
    %1326 = vst.msk [vmem:[#allocation20 + $0x78] sm:$0xff] %vm250, %v1310
    // Predicated region
    $region90: #{conv_pillar_caf_forward.7} parent=1 // pred_check
      _
    $region91: #{conv_pillar_caf_forward.7} parent=1 // pred_check_branch
      %1328 = sbr.rel (0) target = $region93
    $region92: #{conv_pillar_caf_forward.7} parent=1 // pred_region
      %s1330 = ssub.s32 2048, 2048
      %1331 = vsyncadd [#allocation4], %s1330
      %s1332 = sshll.u32 [#allocation20], 4
      %s1333 = int_to_ptr.vmem [resolvable:$true] %s1332
      %1338 = dma.vmem_to_hbm [thread:$0]  %s1333, 2048, %s11, [#allocation4], 128, 128, 8
    $region93: #{conv_pillar_caf_forward.7} parent=1 // pred_fallthru
      _
    // Predicated region
    $region94: #{conv_pillar_caf_forward.7} parent=1 // pred_check
      _
    $region95: #{conv_pillar_caf_forward.7} parent=1 // pred_check_branch
      %1340 = sbr.rel (0) target = $region97
    $region96: #{conv_pillar_caf_forward.7} parent=1 // pred_region
      %1341 = dma.done [#allocation4], 2048
    $region97: #{conv_pillar_caf_forward.7} parent=1 // pred_fallthru
      _
    %1342 = vsyncpa [#allocation3], 1
    %1343 = vsyncpa [#allocation6], 1
    %1344 = vsyncpa [#allocation9], 1
    %1345 = vsyncpa [#allocation12], 1
    %1346 = vsyncpa [#allocation15], 1
    %1347 = vsyncpa [#allocation18], 1
    %1348 = vsyncpa [#allocation4], 1

</llo_original>
